<compile_context>
chip_gen: v7x
topology: tpu7x:2x2x1
jax: 0.10.0
libtpu: 0.0.40
codegen_flags: <defaults>
</compile_context>

<pallas_src>
import functools

import jax
import jax.numpy as jnp
from jax import lax
from jax.experimental import pallas as pl
from jax.experimental.pallas import tpu as pltpu

EPS = 1e-5
F32 = jnp.float32
BF16 = jnp.bfloat16


def _round_up(x, m):
    return (x + m - 1) // m * m


def _choose_tile_m(M, target):
    """Largest multiple-of-8 divisor of M that is <= target.

    A divisor means no wrapper-side jnp.pad / [:M] slicing between stages
    (each is a full HBM read+write of an activation tensor).  Falls back to a
    padded layout with in-kernel tail masking when M has no suitable divisor.
    """
    target = max(8, min(target, M))
    for t in range(target, 7, -1):
        if t % 8 == 0 and M % t == 0:
            return t, M
    t = _round_up(min(target, M), 8)
    return t, _round_up(M, t)


def _cparams(block_bytes, n_parallel=1):
    """Parallel grid axes + explicit scoped-VMEM budget.

    Capped at 48 MiB so the same sizing is safe on v7x (64 MiB physical VMEM);
    v5e/v6e (128 MiB) can raise both the cap and tile_m for very large layers.
    """
    vmem = int(min(max(block_bytes + (8 << 20), 16 << 20), 48 << 20))
    return pltpu.CompilerParams(
        dimension_semantics=("parallel",) * n_parallel,
        vmem_limit_bytes=vmem)


# ---------------------------------------------------------------------------
# Kernels
# ---------------------------------------------------------------------------

def conv1_kernel(x_ref, w1_ref, y1_ref, s_ref, q_ref):
    """conv1 (1x1, no bias) on one M-tile + per-tile BN1 partial statistics."""
    # Input arrives f32 (shared with the stage-4 residual); cast in-kernel.
    acc = jnp.dot(x_ref[...].astype(BF16), w1_ref[...],
                  preferred_element_type=F32)
    y = acc.astype(BF16)
    y1_ref[...] = y
    yf = y.astype(F32)          # stats from the values the next stage normalises
    s_ref[0] = jnp.sum(yf, axis=0, keepdims=True)
    q_ref[0] = jnp.sum(yf * yf, axis=0, keepdims=True)


def conv2_kernel(y1_ref, scale1_ref, bias1_ref, w2_ref,
                 y2_ref, s_ref, q_ref, a1p_ref, *, H, W, P):
    """bn1 + ReLU, 3x3 conv (per image) + BN2 partial statistics."""
    # Zero only the 1-pixel halo strips (interior is fully overwritten below;
    # unconditional so it is correct under megacore grid sharding).
    zrow = jnp.zeros((1, W + 2, P), F32)
    a1p_ref[0:1, :, :] = zrow
    a1p_ref[H + 1:H + 2, :, :] = zrow
    zcol = jnp.zeros((H, 1, P), F32)
    a1p_ref[1:H + 1, 0:1, :] = zcol
    a1p_ref[1:H + 1, W + 1:W + 2, :] = zcol

    # bn1 (folded scale/bias) + ReLU in f32, written into the padded scratch.
    a1 = jnp.maximum(
        y1_ref[0].astype(F32) * scale1_ref[...] + bias1_ref[...], 0.0)
    a1p_ref[1:H + 1, 1:W + 1, :] = a1

    # Only 3 sublane-shifted (kw) loads; kh slicing is along the cheap leading
    # axis.  Single bf16 cast per kw-shift (was 9 per-slice casts).
    a_kws = [a1p_ref[:, kw:kw + W, :].astype(BF16) for kw in range(3)]

    if P >= 128:
        # Unrolled accumulation: 9 K=P matmuls into one f32 accumulator, no
        # (H*W, 9P) im2col buffer.  w2_ref is (9, P, P).
        acc = jnp.zeros((H * W, P), F32)
        for kh in range(3):
            for kw in range(3):
                tap = a_kws[kw][kh:kh + H].reshape(H * W, P)
                acc = acc + jnp.dot(tap, w2_ref[kh * 3 + kw],
                                    preferred_element_type=F32)
    else:
        # Small planes: keep the single K=9P matmul (better MXU contraction
        # fill).  w2_ref is (9P, P).
        taps = jnp.concatenate(
            [a_kws[kw][kh:kh + H].reshape(H * W, P)
             for kh in range(3) for kw in range(3)], axis=1)
        acc = jnp.dot(taps, w2_ref[...], preferred_element_type=F32)

    y = acc.astype(BF16)
    y2_ref[0] = y.reshape(H, W, P)
    yf = y.astype(F32)
    s_ref[0] = jnp.sum(yf, axis=0, keepdims=True)
    q_ref[0] = jnp.sum(yf * yf, axis=0, keepdims=True)


def conv3_kernel(y2_ref, scale2_ref, bias2_ref, w3_ref,
                 y3_ref, s_ref, q_ref, *, tile_m, valid_rows, mask_tail):
    """bn2 + ReLU, conv3 (1x1) on one M-tile + BN3 partial statistics."""
    a2 = jnp.maximum(
        y2_ref[...].astype(F32) * scale2_ref[...] + bias2_ref[...], 0.0)
    if mask_tail:
        # Padded tail rows would contribute relu(bias2) to BN3 stats -> mask.
        row = (pl.program_id(0) * tile_m
               + lax.broadcasted_iota(jnp.int32, (tile_m, 1), 0))
        a2 = jnp.where(row < valid_rows, a2, 0.0)
    acc = jnp.dot(a2.astype(BF16), w3_ref[...], preferred_element_type=F32)
    y = acc.astype(BF16)
    y3_ref[...] = y
    yf = y.astype(F32)
    s_ref[0] = jnp.sum(yf, axis=0, keepdims=True)
    q_ref[0] = jnp.sum(yf * yf, axis=0, keepdims=True)


def bn3_residual_kernel(y3_ref, scale3_ref, bias3_ref, res_ref, o_ref):
    """bn3 + identity residual + final ReLU on one M-tile (output aliases res)."""
    y = y3_ref[...].astype(F32) * scale3_ref[...] + bias3_ref[...]
    o_ref[...] = jnp.maximum(y + res_ref[...], 0.0)


# ---------------------------------------------------------------------------
# Wrapper
# ---------------------------------------------------------------------------

def _finalize_bn(s_part, q_part, count, gamma, beta):
    """Global batch stats from per-tile partials -> per-channel scale/bias."""
    total = jnp.sum(s_part, axis=(0, 1))                 # (C,)
    total_sq = jnp.sum(q_part, axis=(0, 1))              # (C,)
    mean = total / count
    # biased (training) variance; clamp guards E[x^2]-E[x]^2 cancellation.
    var = jnp.maximum(total_sq / count - mean * mean, 0.0)
    scale = gamma.reshape(-1) * lax.rsqrt(var + EPS)
    bias = beta.reshape(-1) - mean * scale
    return scale.reshape(1, -1), bias.reshape(1, -1)


def bottleneck_forward(x_nchw, params, *, tile_m=1024):
    """Pallas implementation of Bottleneck.forward (stride=1, downsample=None)."""
    N, Cin, H, W = x_nchw.shape
    P = params["w1"].shape[1]
    C4 = params["w3"].shape[1]
    assert Cin == C4, "identity residual requires inplanes == planes * expansion"

    M = N * H * W
    tile_m, m_pad = _choose_tile_m(M, tile_m)
    num_t = m_pad // tile_m
    needs_pad = m_pad != M

    x_nhwc = jnp.transpose(x_nchw, (0, 2, 3, 1)).astype(F32)
    x2d = x_nhwc.reshape(M, Cin)                         # f32 residual stream
    if needs_pad:
        x2d = jnp.pad(x2d, ((0, m_pad - M), (0, 0)))

    w1 = params["w1"].astype(BF16)                       # (Cin, P)
    w3 = params["w3"].astype(BF16)                       # (P, 4P)
    if P >= 128:
        w2 = params["w2"].astype(BF16)                   # (9, P, P)
        w2_spec = pl.BlockSpec((9, P, P), lambda n: (0, 0, 0))
    else:
        w2 = params["w2"].reshape(9 * P, P).astype(BF16)  # (9P, P)
        w2_spec = pl.BlockSpec((9 * P, P), lambda n: (0, 0))

    # --- Stage 1: conv1 over M-tiles (+ BN1 partial stats) ------------------
    blk1 = (2 * (4 * tile_m * Cin + 2 * Cin * P + 2 * tile_m * P + 8 * P)
            + 2 * tile_m * Cin + 4 * tile_m * P)
    y1, s1, q1 = pl.pallas_call(
        conv1_kernel,
        grid=(num_t,),
        in_specs=[pl.BlockSpec((tile_m, Cin), lambda i: (i, 0)),
                  pl.BlockSpec((Cin, P), lambda i: (0, 0))],
        out_specs=(pl.BlockSpec((tile_m, P), lambda i: (i, 0)),
                   pl.BlockSpec((1, 1, P), lambda i: (i, 0, 0)),
                   pl.BlockSpec((1, 1, P), lambda i: (i, 0, 0))),
        out_shape=(jax.ShapeDtypeStruct((m_pad, P), BF16),
                   jax.ShapeDtypeStruct((num_t, 1, P), F32),
                   jax.ShapeDtypeStruct((num_t, 1, P), F32)),
        compiler_params=_cparams(blk1),
    )(x2d, w1)

    scale1, bias1 = _finalize_bn(s1, q1, M, params["g1"], params["b1"])

    # --- Stage 2: bn1+relu + 3x3 conv per image (+ BN2 partial stats) -------
    y1_4d = (y1[:M] if needs_pad else y1).reshape(N, H, W, P)
    blk2 = (2 * (2 * H * W * P + 2 * H * W * P + 2 * 9 * P * P + 6 * 4 * P)
            + 4 * (H + 2) * (W + 2) * P        # f32 padded scratch
            + 8 * H * W * P                    # f32 a1 + acc temporaries
            + 6 * (H + 2) * W * P              # 3 kw-shifted bf16 copies
            + (2 * 9 * H * W * P if P < 128 else 0))   # im2col taps (small P)
    y2, s2, q2 = pl.pallas_call(
        functools.partial(conv2_kernel, H=H, W=W, P=P),
        grid=(N,),
        in_specs=[pl.BlockSpec((1, H, W, P), lambda n: (n, 0, 0, 0)),
                  pl.BlockSpec((1, P), lambda n: (0, 0)),
                  pl.BlockSpec((1, P), lambda n: (0, 0)),
                  w2_spec],
        out_specs=(pl.BlockSpec((1, H, W, P), lambda n: (n, 0, 0, 0)),
                   pl.BlockSpec((1, 1, P), lambda n: (n, 0, 0)),
                   pl.BlockSpec((1, 1, P), lambda n: (n, 0, 0))),
        out_shape=(jax.ShapeDtypeStruct((N, H, W, P), BF16),
                   jax.ShapeDtypeStruct((N, 1, P), F32),
                   jax.ShapeDtypeStruct((N, 1, P), F32)),
        scratch_shapes=[pltpu.VMEM((H + 2, W + 2, P), F32)],
        compiler_params=_cparams(blk2),
    )(y1_4d, scale1, bias1, w2)

    scale2, bias2 = _finalize_bn(s2, q2, M, params["g2"], params["b2"])

    # --- Stage 3: bn2+relu + conv3 over M-tiles (+ BN3 partial stats) -------
    y2_2d = y2.reshape(M, P)
    if needs_pad:
        y2_2d = jnp.pad(y2_2d, ((0, m_pad - M), (0, 0)))
    blk3 = (2 * (2 * tile_m * P + 2 * P * C4 + 2 * tile_m * C4 + 8 * P + 8 * C4)
            + 4 * tile_m * P + 4 * tile_m * C4)
    y3, s3, q3 = pl.pallas_call(
        functools.partial(conv3_kernel, tile_m=tile_m, valid_rows=M,
                          mask_tail=needs_pad),
        grid=(num_t,),
        in_specs=[pl.BlockSpec((tile_m, P), lambda i: (i, 0)),
                  pl.BlockSpec((1, P), lambda i: (0, 0)),
                  pl.BlockSpec((1, P), lambda i: (0, 0)),
                  pl.BlockSpec((P, C4), lambda i: (0, 0))],
        out_specs=(pl.BlockSpec((tile_m, C4), lambda i: (i, 0)),
                   pl.BlockSpec((1, 1, C4), lambda i: (i, 0, 0)),
                   pl.BlockSpec((1, 1, C4), lambda i: (i, 0, 0))),
        out_shape=(jax.ShapeDtypeStruct((m_pad, C4), BF16),
                   jax.ShapeDtypeStruct((num_t, 1, C4), F32),
                   jax.ShapeDtypeStruct((num_t, 1, C4), F32)),
        compiler_params=_cparams(blk3),
    )(y2_2d, scale2, bias2, w3)

    scale3, bias3 = _finalize_bn(s3, q3, M, params["g3"], params["b3"])

    # --- Stage 4: bn3 + identity residual + ReLU over M-tiles ---------------
    # The f32 residual buffer is aliased to the f32 output (no extra HBM alloc).
    blk4 = 2 * (2 * tile_m * C4 + 4 * tile_m * C4 + 4 * tile_m * C4 + 8 * C4)
    out2d = pl.pallas_call(
        bn3_residual_kernel,
        grid=(num_t,),
        in_specs=[pl.BlockSpec((tile_m, C4), lambda i: (i, 0)),
                  pl.BlockSpec((1, C4), lambda i: (0, 0)),
                  pl.BlockSpec((1, C4), lambda i: (0, 0)),
                  pl.BlockSpec((tile_m, C4), lambda i: (i, 0))],
        out_specs=pl.BlockSpec((tile_m, C4), lambda i: (i, 0)),
        out_shape=jax.ShapeDtypeStruct((m_pad, C4), F32),
        input_output_aliases={3: 0},
        compiler_params=_cparams(blk4),
    )(y3, scale3, bias3, x2d)

    if needs_pad:
        out2d = out2d[:M]
    out = out2d.reshape(N, H, W, C4)
    return jnp.transpose(out, (0, 3, 1, 2))               # back to NCHW


# ---------------------------------------------------------------------------
# Pure-JAX reference (XLA convs, f32 HIGHEST) with identical semantics
# ---------------------------------------------------------------------------

def reference_forward(x_nchw, params):
    x = jnp.transpose(x_nchw, (0, 2, 3, 1)).astype(jnp.float32)
    dn = ("NHWC", "HWIO", "NHWC")
    hi = lax.Precision.HIGHEST

    def bn(y, g, b):
        mean = jnp.mean(y, axis=(0, 1, 2), keepdims=True)
        var = jnp.mean(jnp.square(y - mean), axis=(0, 1, 2), keepdims=True)
        return (y - mean) / jnp.sqrt(var + EPS) * g.reshape(1, 1, 1, -1) \
            + b.reshape(1, 1, 1, -1)

    Cin, P = params["w1"].shape
    Cout = params["w3"].shape[1]
    w1 = params["w1"].reshape(1, 1, Cin, P)
    w2 = params["w2"].reshape(3, 3, P, P)
    w3 = params["w3"].reshape(1, 1, P, Cout)

    y = lax.conv_general_dilated(x, w1, (1, 1), "VALID",
                                 dimension_numbers=dn, precision=hi)
    y = jnp.maximum(bn(y, params["g1"], params["b1"]), 0.0)
    y = lax.conv_general_dilated(y, w2, (1, 1), ((1, 1), (1, 1)),
                                 dimension_numbers=dn, precision=hi)
    y = jnp.maximum(bn(y, params["g2"], params["b2"]), 0.0)
    y = lax.conv_general_dilated(y, w3, (1, 1), "VALID",
                                 dimension_numbers=dn, precision=hi)
    y = bn(y, params["g3"], params["b3"])
    out = jnp.maximum(y + x, 0.0)
    return jnp.transpose(out, (0, 3, 1, 2))


def make_params(key, inplanes, planes):
    expansion = 4
    ks = jax.random.split(key, 9)
    f32 = jnp.float32
    return {
        # conv weights stored as (Cin, Cout) / (9, Cin, Cout) for matmul form.
        "w1": 0.2 * jax.random.normal(ks[0], (inplanes, planes), f32),
        "g1": 1.0 + 0.1 * jax.random.normal(ks[1], (1, planes), f32),
        "b1": 0.1 * jax.random.normal(ks[2], (1, planes), f32),
        "w2": 0.2 * jax.random.normal(ks[3], (9, planes, planes), f32),
        "g2": 1.0 + 0.1 * jax.random.normal(ks[4], (1, planes), f32),
        "b2": 0.1 * jax.random.normal(ks[5], (1, planes), f32),
        "w3": 0.2 * jax.random.normal(ks[6], (planes, planes * expansion), f32),
        "g3": 1.0 + 0.1 * jax.random.normal(ks[7], (1, planes * expansion), f32),
        "b3": 0.1 * jax.random.normal(ks[8], (1, planes * expansion), f32),
    }


if __name__ == "__main__":
    key = jax.random.PRNGKey(0)
    kp, kx = jax.random.split(key)

    N, H, W = 2, 16, 16
    planes = 4
    inplanes = planes * 4          # identity residual (downsample=None)

    params = make_params(kp, inplanes, planes)
    x = jax.random.normal(kx, (N, inplanes, H, W), jnp.float32)   # NCHW

    # tile_m=128 -> 4-step grid at this toy size (128 divides M=512), so the
    # M-tile pipeline is exercised with no padding / inter-stage copies.
    fwd = jax.jit(functools.partial(bottleneck_forward, tile_m=128))
    out = jax.block_until_ready(fwd(x, params))
    assert out.shape == (N, planes * 4, H, W), out.shape

    ref = reference_forward(x, params)
    abs_err = jnp.abs(out - ref)
    # bf16 MXU operands vs f32 HIGHEST reference -> mixed abs/rel tolerance.
    tol = 5e-2 * (1.0 + jnp.abs(ref))
    if not bool(jnp.all(abs_err <= tol)):
        raise AssertionError(
            f"kernel/reference mismatch: max abs err {float(jnp.max(abs_err))}")

    print("KERNEL_OK")
</pallas_src>

<mosaic_0001>
module attributes {stable_mosaic.version = 11 : i64} {
  func.func @conv1_kernel(%arg0: i32, %arg1: memref<128x16xf32, #tpu.memory_space<vmem>>, %arg2: memref<16x4xbf16, #tpu.memory_space<vmem>>, %arg3: memref<128x4xbf16, #tpu.memory_space<vmem>>, %arg4: memref<1x1x4xf32, #tpu.memory_space<vmem>>, %arg5: memref<1x1x4xf32, #tpu.memory_space<vmem>>) attributes {dimension_semantics = [#tpu.dimension_semantics<parallel>], iteration_bounds = array<i64: 4>, scalar_prefetch = 0 : i64, scratch_operands = 0 : i64, tpu.core_type = #tpu.core_type<tc>, window_params = [{transform_indices = @transform_0, window_bounds = array<i64: 128, 16>}, {pipeline_mode = #tpu.pipeline_mode<synchronous>, transform_indices = @transform_1, window_bounds = array<i64: 16, 4>}, {transform_indices = @transform_2, window_bounds = array<i64: 128, 4>}, {transform_indices = @transform_3, window_bounds = array<i64: 1, 1, 4>}, {transform_indices = @transform_4, window_bounds = array<i64: 1, 1, 4>}]} {
    %c0 = arith.constant 0 : index
    %c0_0 = arith.constant 0 : index
    %0 = vector.load %arg1[%c0, %c0_0] : memref<128x16xf32, #tpu.memory_space<vmem>>, vector<128x16xf32>
    %1 = arith.truncf %0 : vector<128x16xf32> to vector<128x16xbf16>
    %c0_1 = arith.constant 0 : index
    %c0_2 = arith.constant 0 : index
    %2 = vector.load %arg2[%c0_1, %c0_2] : memref<16x4xbf16, #tpu.memory_space<vmem>>, vector<16x4xbf16>
    %cst = arith.constant dense<0.000000e+00> : vector<128x4xf32>
    %3 = tpu.matmul %1, %2, %cst {dimension_numbers = #tpu.dot_dimension_numbers<[1], [0], [0], [1], [0, 0, 1, 1], [], []>} : vector<128x16xbf16>, vector<16x4xbf16>, vector<128x4xf32> -> vector<128x4xf32>
    %4 = arith.truncf %3 : vector<128x4xf32> to vector<128x4xbf16>
    %c0_3 = arith.constant 0 : index
    %c0_4 = arith.constant 0 : index
    %5 = vector.load %arg3[%c0_3, %c0_4] : memref<128x4xbf16, #tpu.memory_space<vmem>>, vector<128x4xbf16>
    tpu.vector_store %arg3[%c0_3, %c0_4], %4 {strides = array<i32>} : memref<128x4xbf16, #tpu.memory_space<vmem>>, vector<128x4xbf16>,
    %6 = arith.extf %4 : vector<128x4xbf16> to vector<128x4xf32>
    %cst_5 = arith.constant dense<0.000000e+00> : vector<4xf32>
    %7 = vector.multi_reduction <add>, %6, %cst_5 [0] : vector<128x4xf32> to vector<4xf32>
    %8 = vector.shape_cast %7 : vector<4xf32> to vector<1x4xf32>
    %c0_6 = arith.constant 0 : index
    %c0_7 = arith.constant 0 : index
    %c0_8 = arith.constant 0 : index
    %9 = vector.load %arg4[%c0_6, %c0_7, %c0_8] : memref<1x1x4xf32, #tpu.memory_space<vmem>>, vector<1x1x4xf32>
    %10 = vector.shape_cast %9 : vector<1x1x4xf32> to vector<1x4xf32>
    %11 = vector.shape_cast %8 : vector<1x4xf32> to vector<1x1x4xf32>
    tpu.vector_store %arg4[%c0_6, %c0_7, %c0_8], %11 {strides = array<i32>} : memref<1x1x4xf32, #tpu.memory_space<vmem>>, vector<1x1x4xf32>,
    %12 = arith.mulf %6, %6 : vector<128x4xf32>
    %cst_9 = arith.constant dense<0.000000e+00> : vector<4xf32>
    %13 = vector.multi_reduction <add>, %12, %cst_9 [0] : vector<128x4xf32> to vector<4xf32>
    %14 = vector.shape_cast %13 : vector<4xf32> to vector<1x4xf32>
    %c0_10 = arith.constant 0 : index
    %c0_11 = arith.constant 0 : index
    %c0_12 = arith.constant 0 : index
    %15 = vector.load %arg5[%c0_10, %c0_11, %c0_12] : memref<1x1x4xf32, #tpu.memory_space<vmem>>, vector<1x1x4xf32>
    %16 = vector.shape_cast %15 : vector<1x1x4xf32> to vector<1x4xf32>
    %17 = vector.shape_cast %14 : vector<1x4xf32> to vector<1x1x4xf32>
    tpu.vector_store %arg5[%c0_10, %c0_11, %c0_12], %17 {strides = array<i32>} : memref<1x1x4xf32, #tpu.memory_space<vmem>>, vector<1x1x4xf32>,
    return
  }
  func.func @transform_0(%arg0: i32) -> (i32, i32) {
    %c0_i32 = arith.constant 0 : i32
    %c0_i32_0 = arith.constant 0 : i32
    return %arg0, %c0_i32 : i32, i32
  }
  func.func @transform_1(%arg0: i32) -> (i32, i32) {
    %c0_i32 = arith.constant 0 : i32
    %c0_i32_0 = arith.constant 0 : i32
    %c0_i32_1 = arith.constant 0 : i32
    return %c0_i32, %c0_i32_0 : i32, i32
  }
  func.func @transform_2(%arg0: i32) -> (i32, i32) {
    %c0_i32 = arith.constant 0 : i32
    %c0_i32_0 = arith.constant 0 : i32
    return %arg0, %c0_i32 : i32, i32
  }
  func.func @transform_3(%arg0: i32) -> (i32, i32, i32) {
    %c0_i32 = arith.constant 0 : i32
    %c0_i32_0 = arith.constant 0 : i32
    %c0_i32_1 = arith.constant 0 : i32
    return %arg0, %c0_i32, %c0_i32_0 : i32, i32, i32
  }
  func.func @transform_4(%arg0: i32) -> (i32, i32, i32) {
    %c0_i32 = arith.constant 0 : i32
    %c0_i32_0 = arith.constant 0 : i32
    %c0_i32_1 = arith.constant 0 : i32
    return %arg0, %c0_i32, %c0_i32_0 : i32, i32, i32
  }
}

module attributes {stable_mosaic.version = 11 : i64} {
  func.func @conv2_kernel(%arg0: i32, %arg1: memref<1x16x16x4xbf16, #tpu.memory_space<vmem>>, %arg2: memref<1x4xf32, #tpu.memory_space<vmem>>, %arg3: memref<1x4xf32, #tpu.memory_space<vmem>>, %arg4: memref<36x4xbf16, #tpu.memory_space<vmem>>, %arg5: memref<1x16x16x4xbf16, #tpu.memory_space<vmem>>, %arg6: memref<1x1x4xf32, #tpu.memory_space<vmem>>, %arg7: memref<1x1x4xf32, #tpu.memory_space<vmem>>, %arg8: memref<18x18x4xf32, #tpu.memory_space<vmem>>) attributes {dimension_semantics = [#tpu.dimension_semantics<parallel>], iteration_bounds = array<i64: 2>, scalar_prefetch = 0 : i64, scratch_operands = 1 : i64, tpu.core_type = #tpu.core_type<tc>, window_params = [{transform_indices = @transform_0, window_bounds = array<i64: 1, 16, 16, 4>}, {pipeline_mode = #tpu.pipeline_mode<synchronous>, transform_indices = @transform_1, window_bounds = array<i64: 1, 4>}, {pipeline_mode = #tpu.pipeline_mode<synchronous>, transform_indices = @transform_2, window_bounds = array<i64: 1, 4>}, {pipeline_mode = #tpu.pipeline_mode<synchronous>, transform_indices = @transform_3, window_bounds = array<i64: 36, 4>}, {transform_indices = @transform_4, window_bounds = array<i64: 1, 16, 16, 4>}, {transform_indices = @transform_5, window_bounds = array<i64: 1, 1, 4>}, {transform_indices = @transform_6, window_bounds = array<i64: 1, 1, 4>}]} {
    %cst = arith.constant 0.000000e+00 : f32
    %0 = vector.broadcast %cst : f32 to vector<1x18x4xf32>
    %c0 = arith.constant 0 : index
    %c0_0 = arith.constant 0 : index
    %c0_1 = arith.constant 0 : index
    %1 = vector.load %arg8[%c0, %c0_0, %c0_1] : memref<18x18x4xf32, #tpu.memory_space<vmem>>, vector<1x18x4xf32>
    tpu.vector_store %arg8[%c0, %c0_0, %c0_1], %0 {strides = array<i32>} : memref<18x18x4xf32, #tpu.memory_space<vmem>>, vector<1x18x4xf32>,
    %c17 = arith.constant 17 : index
    %c0_2 = arith.constant 0 : index
    %c0_3 = arith.constant 0 : index
    %2 = vector.load %arg8[%c17, %c0_2, %c0_3] : memref<18x18x4xf32, #tpu.memory_space<vmem>>, vector<1x18x4xf32>
    tpu.vector_store %arg8[%c17, %c0_2, %c0_3], %0 {strides = array<i32>} : memref<18x18x4xf32, #tpu.memory_space<vmem>>, vector<1x18x4xf32>,
    %cst_4 = arith.constant 0.000000e+00 : f32
    %3 = vector.broadcast %cst_4 : f32 to vector<16x1x4xf32>
    %c1 = arith.constant 1 : index
    %c0_5 = arith.constant 0 : index
    %c0_6 = arith.constant 0 : index
    %4 = vector.load %arg8[%c1, %c0_5, %c0_6] : memref<18x18x4xf32, #tpu.memory_space<vmem>>, vector<16x1x4xf32>
    tpu.vector_store %arg8[%c1, %c0_5, %c0_6], %3 {strides = array<i32>} : memref<18x18x4xf32, #tpu.memory_space<vmem>>, vector<16x1x4xf32>,
    %c1_7 = arith.constant 1 : index
    %c17_8 = arith.constant 17 : index
    %c0_9 = arith.constant 0 : index
    %5 = vector.load %arg8[%c1_7, %c17_8, %c0_9] : memref<18x18x4xf32, #tpu.memory_space<vmem>>, vector<16x1x4xf32>
    tpu.vector_store %arg8[%c1_7, %c17_8, %c0_9], %3 {strides = array<i32>} : memref<18x18x4xf32, #tpu.memory_space<vmem>>, vector<16x1x4xf32>,
    %c0_10 = arith.constant 0 : index
    %c0_11 = arith.constant 0 : index
    %c0_12 = arith.constant 0 : index
    %c0_13 = arith.constant 0 : index
    %6 = vector.load %arg1[%c0_10, %c0_11, %c0_12, %c0_13] : memref<1x16x16x4xbf16, #tpu.memory_space<vmem>>, vector<1x16x16x4xbf16>
    %7 = vector.shape_cast %6 : vector<1x16x16x4xbf16> to vector<16x16x4xbf16>
    %8 = arith.extf %7 : vector<16x16x4xbf16> to vector<16x16x4xf32>
    %c0_14 = arith.constant 0 : index
    %c0_15 = arith.constant 0 : index
    %9 = vector.load %arg2[%c0_14, %c0_15] : memref<1x4xf32, #tpu.memory_space<vmem>>, vector<1x4xf32>
    %10 = vector.shape_cast %9 : vector<1x4xf32> to vector<1x1x4xf32>
    %11 = vector.broadcast %10 : vector<1x1x4xf32> to vector<16x16x4xf32>
    %12 = arith.mulf %8, %11 : vector<16x16x4xf32>
    %c0_16 = arith.constant 0 : index
    %c0_17 = arith.constant 0 : index
    %13 = vector.load %arg3[%c0_16, %c0_17] : memref<1x4xf32, #tpu.memory_space<vmem>>, vector<1x4xf32>
    %14 = vector.shape_cast %13 : vector<1x4xf32> to vector<1x1x4xf32>
    %15 = vector.broadcast %14 : vector<1x1x4xf32> to vector<16x16x4xf32>
    %16 = arith.addf %12, %15 : vector<16x16x4xf32>
    %cst_18 = arith.constant 0.000000e+00 : f32
    %17 = vector.broadcast %cst_18 : f32 to vector<16x16x4xf32>
    %18 = arith.maximumf %16, %17 : vector<16x16x4xf32>
    %c1_19 = arith.constant 1 : index
    %c1_20 = arith.constant 1 : index
    %c0_21 = arith.constant 0 : index
    %19 = vector.load %arg8[%c1_19, %c1_20, %c0_21] : memref<18x18x4xf32, #tpu.memory_space<vmem>>, vector<16x16x4xf32>
    tpu.vector_store %arg8[%c1_19, %c1_20, %c0_21], %18 {strides = array<i32>} : memref<18x18x4xf32, #tpu.memory_space<vmem>>, vector<16x16x4xf32>,
    %c0_22 = arith.constant 0 : index
    %c0_23 = arith.constant 0 : index
    %c0_24 = arith.constant 0 : index
    %20 = vector.load %arg8[%c0_22, %c0_23, %c0_24] : memref<18x18x4xf32, #tpu.memory_space<vmem>>, vector<18x16x4xf32>
    %21 = arith.truncf %20 : vector<18x16x4xf32> to vector<18x16x4xbf16>
    %c0_25 = arith.constant 0 : index
    %c1_26 = arith.constant 1 : index
    %c0_27 = arith.constant 0 : index
    %22 = vector.load %arg8[%c0_25, %c1_26, %c0_27] : memref<18x18x4xf32, #tpu.memory_space<vmem>>, vector<18x16x4xf32>
    %23 = arith.truncf %22 : vector<18x16x4xf32> to vector<18x16x4xbf16>
    %c0_28 = arith.constant 0 : index
    %c2 = arith.constant 2 : index
    %c0_29 = arith.constant 0 : index
    %24 = vector.load %arg8[%c0_28, %c2, %c0_29] : memref<18x18x4xf32, #tpu.memory_space<vmem>>, vector<18x16x4xf32>
    %25 = arith.truncf %24 : vector<18x16x4xf32> to vector<18x16x4xbf16>
    %26 = vector.extract_strided_slice %21 {offsets = [0, 0, 0], sizes = [16, 16, 4], strides = [1, 1, 1]} : vector<18x16x4xbf16> to vector<16x16x4xbf16>
    %27 = vector.shape_cast %26 : vector<16x16x4xbf16> to vector<256x4xbf16>
    %28 = vector.extract_strided_slice %23 {offsets = [0, 0, 0], sizes = [16, 16, 4], strides = [1, 1, 1]} : vector<18x16x4xbf16> to vector<16x16x4xbf16>
    %29 = vector.shape_cast %28 : vector<16x16x4xbf16> to vector<256x4xbf16>
    %30 = vector.extract_strided_slice %25 {offsets = [0, 0, 0], sizes = [16, 16, 4], strides = [1, 1, 1]} : vector<18x16x4xbf16> to vector<16x16x4xbf16>
    %31 = vector.shape_cast %30 : vector<16x16x4xbf16> to vector<256x4xbf16>
    %32 = vector.extract_strided_slice %21 {offsets = [1, 0, 0], sizes = [16, 16, 4], strides = [1, 1, 1]} : vector<18x16x4xbf16> to vector<16x16x4xbf16>
    %33 = vector.shape_cast %32 : vector<16x16x4xbf16> to vector<256x4xbf16>
    %34 = vector.extract_strided_slice %23 {offsets = [1, 0, 0], sizes = [16, 16, 4], strides = [1, 1, 1]} : vector<18x16x4xbf16> to vector<16x16x4xbf16>
    %35 = vector.shape_cast %34 : vector<16x16x4xbf16> to vector<256x4xbf16>
    %36 = vector.extract_strided_slice %25 {offsets = [1, 0, 0], sizes = [16, 16, 4], strides = [1, 1, 1]} : vector<18x16x4xbf16> to vector<16x16x4xbf16>
    %37 = vector.shape_cast %36 : vector<16x16x4xbf16> to vector<256x4xbf16>
    %38 = vector.extract_strided_slice %21 {offsets = [2, 0, 0], sizes = [16, 16, 4], strides = [1, 1, 1]} : vector<18x16x4xbf16> to vector<16x16x4xbf16>
    %39 = vector.shape_cast %38 : vector<16x16x4xbf16> to vector<256x4xbf16>
    %40 = vector.extract_strided_slice %23 {offsets = [2, 0, 0], sizes = [16, 16, 4], strides = [1, 1, 1]} : vector<18x16x4xbf16> to vector<16x16x4xbf16>
    %41 = vector.shape_cast %40 : vector<16x16x4xbf16> to vector<256x4xbf16>
    %42 = vector.extract_strided_slice %25 {offsets = [2, 0, 0], sizes = [16, 16, 4], strides = [1, 1, 1]} : vector<18x16x4xbf16> to vector<16x16x4xbf16>
    %43 = vector.shape_cast %42 : vector<16x16x4xbf16> to vector<256x4xbf16>
    %44 = tpu.concatenate %27, %29, %31, %33, %35, %37, %39, %41, %43 in 1 : vector<256x4xbf16>, vector<256x4xbf16>, vector<256x4xbf16>, vector<256x4xbf16>, vector<256x4xbf16>, vector<256x4xbf16>, vector<256x4xbf16>, vector<256x4xbf16>, vector<256x4xbf16> -> vector<256x36xbf16>
    %c0_30 = arith.constant 0 : index
    %c0_31 = arith.constant 0 : index
    %45 = vector.load %arg4[%c0_30, %c0_31] : memref<36x4xbf16, #tpu.memory_space<vmem>>, vector<36x4xbf16>
    %cst_32 = arith.constant dense<0.000000e+00> : vector<256x4xf32>
    %46 = tpu.matmul %44, %45, %cst_32 {dimension_numbers = #tpu.dot_dimension_numbers<[1], [0], [0], [1], [0, 0, 1, 1], [], []>} : vector<256x36xbf16>, vector<36x4xbf16>, vector<256x4xf32> -> vector<256x4xf32>
    %47 = arith.truncf %46 : vector<256x4xf32> to vector<256x4xbf16>
    %48 = vector.shape_cast %47 : vector<256x4xbf16> to vector<16x16x4xbf16>
    %c0_33 = arith.constant 0 : index
    %c0_34 = arith.constant 0 : index
    %c0_35 = arith.constant 0 : index
    %c0_36 = arith.constant 0 : index
    %49 = vector.load %arg5[%c0_33, %c0_34, %c0_35, %c0_36] : memref<1x16x16x4xbf16, #tpu.memory_space<vmem>>, vector<1x16x16x4xbf16>
    %50 = vector.shape_cast %49 : vector<1x16x16x4xbf16> to vector<16x16x4xbf16>
    %51 = vector.shape_cast %48 : vector<16x16x4xbf16> to vector<1x16x16x4xbf16>
    tpu.vector_store %arg5[%c0_33, %c0_34, %c0_35, %c0_36], %51 {strides = array<i32>} : memref<1x16x16x4xbf16, #tpu.memory_space<vmem>>, vector<1x16x16x4xbf16>,
    %52 = arith.extf %47 : vector<256x4xbf16> to vector<256x4xf32>
    %cst_37 = arith.constant dense<0.000000e+00> : vector<4xf32>
    %53 = vector.multi_reduction <add>, %52, %cst_37 [0] : vector<256x4xf32> to vector<4xf32>
    %54 = vector.shape_cast %53 : vector<4xf32> to vector<1x4xf32>
    %c0_38 = arith.constant 0 : index
    %c0_39 = arith.constant 0 : index
    %c0_40 = arith.constant 0 : index
    %55 = vector.load %arg6[%c0_38, %c0_39, %c0_40] : memref<1x1x4xf32, #tpu.memory_space<vmem>>, vector<1x1x4xf32>
    %56 = vector.shape_cast %55 : vector<1x1x4xf32> to vector<1x4xf32>
    %57 = vector.shape_cast %54 : vector<1x4xf32> to vector<1x1x4xf32>
    tpu.vector_store %arg6[%c0_38, %c0_39, %c0_40], %57 {strides = array<i32>} : memref<1x1x4xf32, #tpu.memory_space<vmem>>, vector<1x1x4xf32>,
    %58 = arith.mulf %52, %52 : vector<256x4xf32>
    %cst_41 = arith.constant dense<0.000000e+00> : vector<4xf32>
    %59 = vector.multi_reduction <add>, %58, %cst_41 [0] : vector<256x4xf32> to vector<4xf32>
    %60 = vector.shape_cast %59 : vector<4xf32> to vector<1x4xf32>
    %c0_42 = arith.constant 0 : index
    %c0_43 = arith.constant 0 : index
    %c0_44 = arith.constant 0 : index
    %61 = vector.load %arg7[%c0_42, %c0_43, %c0_44] : memref<1x1x4xf32, #tpu.memory_space<vmem>>, vector<1x1x4xf32>
    %62 = vector.shape_cast %61 : vector<1x1x4xf32> to vector<1x4xf32>
    %63 = vector.shape_cast %60 : vector<1x4xf32> to vector<1x1x4xf32>
    tpu.vector_store %arg7[%c0_42, %c0_43, %c0_44], %63 {strides = array<i32>} : memref<1x1x4xf32, #tpu.memory_space<vmem>>, vector<1x1x4xf32>,
    return
  }
  func.func @transform_0(%arg0: i32) -> (i32, i32, i32, i32) {
    %c0_i32 = arith.constant 0 : i32
    %c0_i32_0 = arith.constant 0 : i32
    %c0_i32_1 = arith.constant 0 : i32
    %c0_i32_2 = arith.constant 0 : i32
    return %arg0, %c0_i32, %c0_i32_0, %c0_i32_1 : i32, i32, i32, i32
  }
  func.func @transform_1(%arg0: i32) -> (i32, i32) {
    %c0_i32 = arith.constant 0 : i32
    %c0_i32_0 = arith.constant 0 : i32
    %c0_i32_1 = arith.constant 0 : i32
    return %c0_i32, %c0_i32_0 : i32, i32
  }
  func.func @transform_2(%arg0: i32) -> (i32, i32) {
    %c0_i32 = arith.constant 0 : i32
    %c0_i32_0 = arith.constant 0 : i32
    %c0_i32_1 = arith.constant 0 : i32
    return %c0_i32, %c0_i32_0 : i32, i32
  }
  func.func @transform_3(%arg0: i32) -> (i32, i32) {
    %c0_i32 = arith.constant 0 : i32
    %c0_i32_0 = arith.constant 0 : i32
    %c0_i32_1 = arith.constant 0 : i32
    return %c0_i32, %c0_i32_0 : i32, i32
  }
  func.func @transform_4(%arg0: i32) -> (i32, i32, i32, i32) {
    %c0_i32 = arith.constant 0 : i32
    %c0_i32_0 = arith.constant 0 : i32
    %c0_i32_1 = arith.constant 0 : i32
    %c0_i32_2 = arith.constant 0 : i32
    return %arg0, %c0_i32, %c0_i32_0, %c0_i32_1 : i32, i32, i32, i32
  }
  func.func @transform_5(%arg0: i32) -> (i32, i32, i32) {
    %c0_i32 = arith.constant 0 : i32
    %c0_i32_0 = arith.constant 0 : i32
    %c0_i32_1 = arith.constant 0 : i32
    return %arg0, %c0_i32, %c0_i32_0 : i32, i32, i32
  }
  func.func @transform_6(%arg0: i32) -> (i32, i32, i32) {
    %c0_i32 = arith.constant 0 : i32
    %c0_i32_0 = arith.constant 0 : i32
    %c0_i32_1 = arith.constant 0 : i32
    return %arg0, %c0_i32, %c0_i32_0 : i32, i32, i32
  }
}

module attributes {stable_mosaic.version = 11 : i64} {
  func.func @conv3_kernel(%arg0: i32, %arg1: memref<128x4xbf16, #tpu.memory_space<vmem>>, %arg2: memref<1x4xf32, #tpu.memory_space<vmem>>, %arg3: memref<1x4xf32, #tpu.memory_space<vmem>>, %arg4: memref<4x16xbf16, #tpu.memory_space<vmem>>, %arg5: memref<128x16xbf16, #tpu.memory_space<vmem>>, %arg6: memref<1x1x16xf32, #tpu.memory_space<vmem>>, %arg7: memref<1x1x16xf32, #tpu.memory_space<vmem>>) attributes {dimension_semantics = [#tpu.dimension_semantics<parallel>], iteration_bounds = array<i64: 4>, scalar_prefetch = 0 : i64, scratch_operands = 0 : i64, tpu.core_type = #tpu.core_type<tc>, window_params = [{transform_indices = @transform_0, window_bounds = array<i64: 128, 4>}, {pipeline_mode = #tpu.pipeline_mode<synchronous>, transform_indices = @transform_1, window_bounds = array<i64: 1, 4>}, {pipeline_mode = #tpu.pipeline_mode<synchronous>, transform_indices = @transform_2, window_bounds = array<i64: 1, 4>}, {pipeline_mode = #tpu.pipeline_mode<synchronous>, transform_indices = @transform_3, window_bounds = array<i64: 4, 16>}, {transform_indices = @transform_4, window_bounds = array<i64: 128, 16>}, {transform_indices = @transform_5, window_bounds = array<i64: 1, 1, 16>}, {transform_indices = @transform_6, window_bounds = array<i64: 1, 1, 16>}]} {
    %c0 = arith.constant 0 : index
    %c0_0 = arith.constant 0 : index
    %0 = vector.load %arg1[%c0, %c0_0] : memref<128x4xbf16, #tpu.memory_space<vmem>>, vector<128x4xbf16>
    %1 = arith.extf %0 : vector<128x4xbf16> to vector<128x4xf32>
    %c0_1 = arith.constant 0 : index
    %c0_2 = arith.constant 0 : index
    %2 = vector.load %arg2[%c0_1, %c0_2] : memref<1x4xf32, #tpu.memory_space<vmem>>, vector<1x4xf32>
    %3 = vector.broadcast %2 : vector<1x4xf32> to vector<128x4xf32>
    %4 = arith.mulf %1, %3 : vector<128x4xf32>
    %c0_3 = arith.constant 0 : index
    %c0_4 = arith.constant 0 : index
    %5 = vector.load %arg3[%c0_3, %c0_4] : memref<1x4xf32, #tpu.memory_space<vmem>>, vector<1x4xf32>
    %6 = vector.broadcast %5 : vector<1x4xf32> to vector<128x4xf32>
    %7 = arith.addf %4, %6 : vector<128x4xf32>
    %cst = arith.constant 0.000000e+00 : f32
    %8 = vector.broadcast %cst : f32 to vector<128x4xf32>
    %9 = arith.maximumf %7, %8 : vector<128x4xf32>
    %10 = arith.truncf %9 : vector<128x4xf32> to vector<128x4xbf16>
    %c0_5 = arith.constant 0 : index
    %c0_6 = arith.constant 0 : index
    %11 = vector.load %arg4[%c0_5, %c0_6] : memref<4x16xbf16, #tpu.memory_space<vmem>>, vector<4x16xbf16>
    %cst_7 = arith.constant dense<0.000000e+00> : vector<128x16xf32>
    %12 = tpu.matmul %10, %11, %cst_7 {dimension_numbers = #tpu.dot_dimension_numbers<[1], [0], [0], [1], [0, 0, 1, 1], [], []>} : vector<128x4xbf16>, vector<4x16xbf16>, vector<128x16xf32> -> vector<128x16xf32>
    %13 = arith.truncf %12 : vector<128x16xf32> to vector<128x16xbf16>
    %c0_8 = arith.constant 0 : index
    %c0_9 = arith.constant 0 : index
    %14 = vector.load %arg5[%c0_8, %c0_9] : memref<128x16xbf16, #tpu.memory_space<vmem>>, vector<128x16xbf16>
    tpu.vector_store %arg5[%c0_8, %c0_9], %13 {strides = array<i32>} : memref<128x16xbf16, #tpu.memory_space<vmem>>, vector<128x16xbf16>,
    %15 = arith.extf %13 : vector<128x16xbf16> to vector<128x16xf32>
    %cst_10 = arith.constant dense<0.000000e+00> : vector<16xf32>
    %16 = vector.multi_reduction <add>, %15, %cst_10 [0] : vector<128x16xf32> to vector<16xf32>
    %17 = vector.shape_cast %16 : vector<16xf32> to vector<1x16xf32>
    %c0_11 = arith.constant 0 : index
    %c0_12 = arith.constant 0 : index
    %c0_13 = arith.constant 0 : index
    %18 = vector.load %arg6[%c0_11, %c0_12, %c0_13] : memref<1x1x16xf32, #tpu.memory_space<vmem>>, vector<1x1x16xf32>
    %19 = vector.shape_cast %18 : vector<1x1x16xf32> to vector<1x16xf32>
    %20 = vector.shape_cast %17 : vector<1x16xf32> to vector<1x1x16xf32>
    tpu.vector_store %arg6[%c0_11, %c0_12, %c0_13], %20 {strides = array<i32>} : memref<1x1x16xf32, #tpu.memory_space<vmem>>, vector<1x1x16xf32>,
    %21 = arith.mulf %15, %15 : vector<128x16xf32>
    %cst_14 = arith.constant dense<0.000000e+00> : vector<16xf32>
    %22 = vector.multi_reduction <add>, %21, %cst_14 [0] : vector<128x16xf32> to vector<16xf32>
    %23 = vector.shape_cast %22 : vector<16xf32> to vector<1x16xf32>
    %c0_15 = arith.constant 0 : index
    %c0_16 = arith.constant 0 : index
    %c0_17 = arith.constant 0 : index
    %24 = vector.load %arg7[%c0_15, %c0_16, %c0_17] : memref<1x1x16xf32, #tpu.memory_space<vmem>>, vector<1x1x16xf32>
    %25 = vector.shape_cast %24 : vector<1x1x16xf32> to vector<1x16xf32>
    %26 = vector.shape_cast %23 : vector<1x16xf32> to vector<1x1x16xf32>
    tpu.vector_store %arg7[%c0_15, %c0_16, %c0_17], %26 {strides = array<i32>} : memref<1x1x16xf32, #tpu.memory_space<vmem>>, vector<1x1x16xf32>,
    return
  }
  func.func @transform_0(%arg0: i32) -> (i32, i32) {
    %c0_i32 = arith.constant 0 : i32
    %c0_i32_0 = arith.constant 0 : i32
    return %arg0, %c0_i32 : i32, i32
  }
  func.func @transform_1(%arg0: i32) -> (i32, i32) {
    %c0_i32 = arith.constant 0 : i32
    %c0_i32_0 = arith.constant 0 : i32
    %c0_i32_1 = arith.constant 0 : i32
    return %c0_i32, %c0_i32_0 : i32, i32
  }
  func.func @transform_2(%arg0: i32) -> (i32, i32) {
    %c0_i32 = arith.constant 0 : i32
    %c0_i32_0 = arith.constant 0 : i32
    %c0_i32_1 = arith.constant 0 : i32
    return %c0_i32, %c0_i32_0 : i32, i32
  }
  func.func @transform_3(%arg0: i32) -> (i32, i32) {
    %c0_i32 = arith.constant 0 : i32
    %c0_i32_0 = arith.constant 0 : i32
    %c0_i32_1 = arith.constant 0 : i32
    return %c0_i32, %c0_i32_0 : i32, i32
  }
  func.func @transform_4(%arg0: i32) -> (i32, i32) {
    %c0_i32 = arith.constant 0 : i32
    %c0_i32_0 = arith.constant 0 : i32
    return %arg0, %c0_i32 : i32, i32
  }
  func.func @transform_5(%arg0: i32) -> (i32, i32, i32) {
    %c0_i32 = arith.constant 0 : i32
    %c0_i32_0 = arith.constant 0 : i32
    %c0_i32_1 = arith.constant 0 : i32
    return %arg0, %c0_i32, %c0_i32_0 : i32, i32, i32
  }
  func.func @transform_6(%arg0: i32) -> (i32, i32, i32) {
    %c0_i32 = arith.constant 0 : i32
    %c0_i32_0 = arith.constant 0 : i32
    %c0_i32_1 = arith.constant 0 : i32
    return %arg0, %c0_i32, %c0_i32_0 : i32, i32, i32
  }
}

module attributes {stable_mosaic.version = 11 : i64} {
  func.func @bn3_residual_kernel(%arg0: i32, %arg1: memref<128x16xbf16, #tpu.memory_space<vmem>>, %arg2: memref<1x16xf32, #tpu.memory_space<vmem>>, %arg3: memref<1x16xf32, #tpu.memory_space<vmem>>, %arg4: memref<128x16xf32, #tpu.memory_space<vmem>>, %arg5: memref<128x16xf32, #tpu.memory_space<vmem>>) attributes {dimension_semantics = [#tpu.dimension_semantics<parallel>], iteration_bounds = array<i64: 4>, scalar_prefetch = 0 : i64, scratch_operands = 0 : i64, tpu.core_type = #tpu.core_type<tc>, window_params = [{transform_indices = @transform_0, window_bounds = array<i64: 128, 16>}, {pipeline_mode = #tpu.pipeline_mode<synchronous>, transform_indices = @transform_1, window_bounds = array<i64: 1, 16>}, {pipeline_mode = #tpu.pipeline_mode<synchronous>, transform_indices = @transform_2, window_bounds = array<i64: 1, 16>}, {transform_indices = @transform_3, window_bounds = array<i64: 128, 16>}, {transform_indices = @transform_4, window_bounds = array<i64: 128, 16>}]} {
    %c0 = arith.constant 0 : index
    %c0_0 = arith.constant 0 : index
    %0 = vector.load %arg1[%c0, %c0_0] : memref<128x16xbf16, #tpu.memory_space<vmem>>, vector<128x16xbf16>
    %1 = arith.extf %0 : vector<128x16xbf16> to vector<128x16xf32>
    %c0_1 = arith.constant 0 : index
    %c0_2 = arith.constant 0 : index
    %2 = vector.load %arg2[%c0_1, %c0_2] : memref<1x16xf32, #tpu.memory_space<vmem>>, vector<1x16xf32>
    %3 = vector.broadcast %2 : vector<1x16xf32> to vector<128x16xf32>
    %4 = arith.mulf %1, %3 : vector<128x16xf32>
    %c0_3 = arith.constant 0 : index
    %c0_4 = arith.constant 0 : index
    %5 = vector.load %arg3[%c0_3, %c0_4] : memref<1x16xf32, #tpu.memory_space<vmem>>, vector<1x16xf32>
    %6 = vector.broadcast %5 : vector<1x16xf32> to vector<128x16xf32>
    %7 = arith.addf %4, %6 : vector<128x16xf32>
    %c0_5 = arith.constant 0 : index
    %c0_6 = arith.constant 0 : index
    %8 = vector.load %arg4[%c0_5, %c0_6] : memref<128x16xf32, #tpu.memory_space<vmem>>, vector<128x16xf32>
    %9 = arith.addf %7, %8 : vector<128x16xf32>
    %cst = arith.constant 0.000000e+00 : f32
    %10 = vector.broadcast %cst : f32 to vector<128x16xf32>
    %11 = arith.maximumf %9, %10 : vector<128x16xf32>
    %c0_7 = arith.constant 0 : index
    %c0_8 = arith.constant 0 : index
    %12 = vector.load %arg5[%c0_7, %c0_8] : memref<128x16xf32, #tpu.memory_space<vmem>>, vector<128x16xf32>
    tpu.vector_store %arg5[%c0_7, %c0_8], %11 {strides = array<i32>} : memref<128x16xf32, #tpu.memory_space<vmem>>, vector<128x16xf32>,
    return
  }
  func.func @transform_0(%arg0: i32) -> (i32, i32) {
    %c0_i32 = arith.constant 0 : i32
    %c0_i32_0 = arith.constant 0 : i32
    return %arg0, %c0_i32 : i32, i32
  }
  func.func @transform_1(%arg0: i32) -> (i32, i32) {
    %c0_i32 = arith.constant 0 : i32
    %c0_i32_0 = arith.constant 0 : i32
    %c0_i32_1 = arith.constant 0 : i32
    return %c0_i32, %c0_i32_0 : i32, i32
  }
  func.func @transform_2(%arg0: i32) -> (i32, i32) {
    %c0_i32 = arith.constant 0 : i32
    %c0_i32_0 = arith.constant 0 : i32
    %c0_i32_1 = arith.constant 0 : i32
    return %c0_i32, %c0_i32_0 : i32, i32
  }
  func.func @transform_3(%arg0: i32) -> (i32, i32) {
    %c0_i32 = arith.constant 0 : i32
    %c0_i32_0 = arith.constant 0 : i32
    return %arg0, %c0_i32 : i32, i32
  }
  func.func @transform_4(%arg0: i32) -> (i32, i32) {
    %c0_i32 = arith.constant 0 : i32
    %c0_i32_0 = arith.constant 0 : i32
    return %arg0, %c0_i32 : i32, i32
  }
}

</mosaic_0001>

<llo_original>
// kernel: bottleneck_forward.4
$region0: #{bottleneck_forward.4}
  #allocation0 [shape = 'u32[]', space=smem, size = 0x4, offset = 0x4, fixed_abs, tag = 'smem constant byte address 0x4 - core index']
  #allocation1 [shape = 'u32[144,128]{1,0:T(1,128)}', space=vmem, size = 0x12000, scoped, tag = 'internal scratch']
  %s0 = inlined_call_operand.vmem [shape: f32[512,16], index: 0, kind: input, shape index: {}]
  %s1 = inlined_call_operand.vmem [shape: bf16[16,4], index: 1, kind: input, shape index: {}]
  %s2 = inlined_call_operand.vmem [shape: bf16[512,4], index: 2, kind: output, shape index: {0}]
  %s3 = inlined_call_operand.vmem [shape: f32[4,1,4], index: 3, kind: output, shape index: {1}]
  %s4 = inlined_call_operand.vmem [shape: f32[4,1,4], index: 4, kind: output, shape index: {2}]
  %5 = xla_tuple %s2, %s3, %s4
  %s6 = sld [smem:[#allocation0]]
  $region57: #{bottleneck_forward.4} parent=0
    _
  %s8 = ssub.s32 1, %s6
  %s9 = scalar_select 0, %s8, %s6
  loop: start=0, step=1, limit=6
  $region2: #{bottleneck_forward.4} parent=0 // loop_pre_header
    _
  $region3: #{bottleneck_forward.4} parent=0 // loop_header
    %s11 = sphi 0, %s15
    %p12 = scmp.ge.s32.totalorder %s11, 6
    %s21 = sphi 0, %s23
    %s24 = sphi 0, %s21
    %s25 = sphi 0, %s24
    %s41 = sphi 0, %s25
    %s45 = sphi 0, %s45
    %s47 = sphi 0, %s45
    %s48 = sphi 0, %s47
    %s62 = sphi 0, %s48
    %s68 = sphi 0, %s70
    %s71 = sphi 0, %s68
    %s72 = sphi 0, %s71
    %s88 = sphi 0, %s72
    %s94 = sphi 0, %s96
    %s97 = sphi 0, %s94
    %s98 = sphi 0, %s97
    %s114 = sphi 0, %s98
    %s120 = sphi 0, %s122
    %s123 = sphi 0, %s120
    %s124 = sphi 0, %s123
    %s140 = sphi 0, %s124
  $region4: #{bottleneck_forward.4} parent=0 // loop_header_branch
    %14 = sbr.rel (%p12) target = $region8
  $region5: #{bottleneck_forward.4} parent=0 // loop_body
    %s16 = ssub.s32 %s11, 1
    %s17 = ssub.s32 %s11, 2
    %s18 = sadd.s32 %s11, 1
    %s19 = ssub.s32 %s11, %s18
    %p20 = scmp.eq.s32.totalorder %s19, 0
    %s22 = sadd.s32 %s21, 1
    %s23 = scalar_select %p20, %s21, %s22
    %p26 = pneg %p20
    %p27 = scmp.eq.s32.totalorder %s11, 3
    %p28 = por %p26, %p27
    %p29 = scmp.ne.s32.totalorder %s21, %s24
    %p30 = scmp.eq.s32.totalorder %s11, 0
    %p31 = por %p29, %p30
    %p32 = scmp.ne.s32.totalorder %s21, %s24
    %p33 = scmp.eq.s32.totalorder %s16, 3
    %p34 = por %p32, %p33
    %p35 = scmp.ne.s32.totalorder %s24, %s25
    %p36 = scmp.eq.s32.totalorder %s16, 0
    %p37 = por %p35, %p36
    %p38 = scmp.ne.s32.totalorder %s24, %s25
    %p39 = scmp.eq.s32.totalorder %s17, 3
    %p40 = por %p38, %p39
    %p42 = scmp.ne.s32.totalorder %s25, %s41
    %p43 = scmp.eq.s32.totalorder %s17, 0
    %p44 = por %p42, %p43
    %s46 = sadd.s32 %s45, 1
    %p49 = scmp.eq.s32.totalorder %s11, 3
    %p50 = scmp.ne.s32.totalorder %s45, %s47
    %p51 = scmp.eq.s32.totalorder %s11, 0
    %p52 = por %p50, %p51
    %p53 = scmp.ne.s32.totalorder %s45, %s47
    %p54 = scmp.eq.s32.totalorder %s16, 3
    %p55 = por %p53, %p54
    %p56 = scmp.ne.s32.totalorder %s47, %s48
    %p57 = scmp.eq.s32.totalorder %s16, 0
    %p58 = por %p56, %p57
    %p59 = scmp.ne.s32.totalorder %s47, %s48
    %p60 = scmp.eq.s32.totalorder %s17, 3
    %p61 = por %p59, %p60
    %p63 = scmp.ne.s32.totalorder %s48, %s62
    %p64 = scmp.eq.s32.totalorder %s17, 0
    %p65 = por %p63, %p64
    %s66 = ssub.s32 %s11, %s18
    %p67 = scmp.eq.s32.totalorder %s66, 0
    %s69 = sadd.s32 %s68, 1
    %s70 = scalar_select %p67, %s68, %s69
    %p73 = pneg %p67
    %p74 = scmp.eq.s32.totalorder %s11, 3
    %p75 = por %p73, %p74
    %p76 = scmp.ne.s32.totalorder %s68, %s71
    %p77 = scmp.eq.s32.totalorder %s11, 0
    %p78 = por %p76, %p77
    %p79 = scmp.ne.s32.totalorder %s68, %s71
    %p80 = scmp.eq.s32.totalorder %s16, 3
    %p81 = por %p79, %p80
    %p82 = scmp.ne.s32.totalorder %s71, %s72
    %p83 = scmp.eq.s32.totalorder %s16, 0
    %p84 = por %p82, %p83
    %p85 = scmp.ne.s32.totalorder %s71, %s72
    %p86 = scmp.eq.s32.totalorder %s17, 3
    %p87 = por %p85, %p86
    %p89 = scmp.ne.s32.totalorder %s72, %s88
    %p90 = scmp.eq.s32.totalorder %s17, 0
    %p91 = por %p89, %p90
    %s92 = ssub.s32 %s11, %s18
    %p93 = scmp.eq.s32.totalorder %s92, 0
    %s95 = sadd.s32 %s94, 1
    %s96 = scalar_select %p93, %s94, %s95
    %p99 = pneg %p93
    %p100 = scmp.eq.s32.totalorder %s11, 3
    %p101 = por %p99, %p100
    %p102 = scmp.ne.s32.totalorder %s94, %s97
    %p103 = scmp.eq.s32.totalorder %s11, 0
    %p104 = por %p102, %p103
    %p105 = scmp.ne.s32.totalorder %s94, %s97
    %p106 = scmp.eq.s32.totalorder %s16, 3
    %p107 = por %p105, %p106
    %p108 = scmp.ne.s32.totalorder %s97, %s98
    %p109 = scmp.eq.s32.totalorder %s16, 0
    %p110 = por %p108, %p109
    %p111 = scmp.ne.s32.totalorder %s97, %s98
    %p112 = scmp.eq.s32.totalorder %s17, 3
    %p113 = por %p111, %p112
    %p115 = scmp.ne.s32.totalorder %s98, %s114
    %p116 = scmp.eq.s32.totalorder %s17, 0
    %p117 = por %p115, %p116
    %s118 = ssub.s32 %s11, %s18
    %p119 = scmp.eq.s32.totalorder %s118, 0
    %s121 = sadd.s32 %s120, 1
    %s122 = scalar_select %p119, %s120, %s121
    %p125 = pneg %p119
    %p126 = scmp.eq.s32.totalorder %s11, 3
    %p127 = por %p125, %p126
    %p128 = scmp.ne.s32.totalorder %s120, %s123
    %p129 = scmp.eq.s32.totalorder %s11, 0
    %p130 = por %p128, %p129
    %p131 = scmp.ne.s32.totalorder %s120, %s123
    %p132 = scmp.eq.s32.totalorder %s16, 3
    %p133 = por %p131, %p132
    %p134 = scmp.ne.s32.totalorder %s123, %s124
    %p135 = scmp.eq.s32.totalorder %s16, 0
    %p136 = por %p134, %p135
    %p137 = scmp.ne.s32.totalorder %s123, %s124
    %p138 = scmp.eq.s32.totalorder %s17, 3
    %p139 = por %p137, %p138
    %p141 = scmp.ne.s32.totalorder %s124, %s140
    %p142 = scmp.eq.s32.totalorder %s17, 0
    %p143 = por %p141, %p142
    %p144 = scmp.le.s32.totalorder 1, %s11
    %p145 = scmp.lt.s32.totalorder %s11, 5
    %p146 = pnand %p144, %p145
    %p147 = pneg %p146
    // Predicated region
    $region9: #{bottleneck_forward.4} parent=5 // pred_check
      _
    $region10: #{bottleneck_forward.4} parent=5 // pred_check_branch
      %149 = sbr.rel (%p146) target = $region12
    $region11: #{bottleneck_forward.4} parent=5 // pred_region
      %s150 = ssub.s32 %s11, 1
      // Predicated region
      $region13: #{bottleneck_forward.4} parent=11 // pred_check
        %p151 = pneg %p58
      $region14: #{bottleneck_forward.4} parent=11 // pred_check_branch
        %153 = sbr.rel (%p151) target = $region16
      $region15: #{bottleneck_forward.4} parent=11 // pred_region
        _
      $region16: #{bottleneck_forward.4} parent=11 // pred_fallthru
        _
    $region12: #{bottleneck_forward.4} parent=5 // pred_fallthru
      _
    %p154 = scmp.lt.s32.totalorder %s11, 4
    // Predicated region
    $region17: #{bottleneck_forward.4} parent=5 // pred_check
      %p155 = pneg %p154
    $region18: #{bottleneck_forward.4} parent=5 // pred_check_branch
      %157 = sbr.rel (%p155) target = $region20
    $region19: #{bottleneck_forward.4} parent=5 // pred_region
      // Predicated region
      $region21: #{bottleneck_forward.4} parent=19 // pred_check
        %p158 = pneg %p31
      $region22: #{bottleneck_forward.4} parent=19 // pred_check_branch
        %160 = sbr.rel (%p158) target = $region24
      $region23: #{bottleneck_forward.4} parent=19 // pred_region
        %s161 = smul.u32 16, %s11
        %p162 = scmp.lt.s32.totalorder %s161, 63
        %s163 = scalar_select %p162, %s161, 63
        %s164 = smul.addr %s163, 8
        %s165 = scalar_lea.vmem %s0, %s164
        %s166 = smul.u32 16, %s11
      $region24: #{bottleneck_forward.4} parent=19 // pred_fallthru
        _
    $region20: #{bottleneck_forward.4} parent=5 // pred_fallthru
      _
    %p167 = scmp.le.s32.totalorder 1, %s11
    %p168 = scmp.lt.s32.totalorder %s11, 5
    %p169 = pnand %p167, %p168
    %p170 = pneg %p169
    // Predicated region
    $region25: #{bottleneck_forward.4} parent=5 // pred_check
      _
    $region26: #{bottleneck_forward.4} parent=5 // pred_check_branch
      %172 = sbr.rel (%p169) target = $region28
    $region27: #{bottleneck_forward.4} parent=5 // pred_region
      %s173 = ssub.s32 %s11, 1
      %s174 = smul.u32 16, %s16
      %p175 = scmp.lt.s32.totalorder %s174, 63
      %s176 = scalar_select %p175, %s174, 63
      %s177 = smul.addr %s176, 8
      %s178 = scalar_lea.vmem %s0, %s177
      %p179 = pneg %p37
      %p180 = pneg %p34
      %p181 = pneg %p58
      %p182 = pneg %p55
      %p183 = pneg %p84
      %p184 = pneg %p81
      %s185 = smul.u32 16, %s16
      %p186 = scmp.lt.s32.totalorder %s185, 63
      %s187 = scalar_select %p186, %s185, 63
      %s188 = smul.addr %s187, 4
      %s189 = scalar_lea.vmem %s2, %s188
      %p190 = pneg %p110
      %p191 = pneg %p107
      %p192 = scmp.lt.s32.totalorder %s16, 3
      %s193 = scalar_select %p192, %s16, 3
      %s194 = scalar_lea.vmem %s3, %s193
      %p195 = pneg %p136
      %p196 = pneg %p133
      %p197 = scmp.lt.s32.totalorder %s16, 3
      %s198 = scalar_select %p197, %s16, 3
      %s199 = scalar_lea.vmem %s4, %s198
      %s200 = smul.u32 16, %s16
      %p201 = scmp.lt.s32.totalorder %s200, 63
      %s202 = scalar_select %p201, %s200, 63
      %s203 = smul.addr %s202, 8
      %s204 = scalar_lea.vmem %s0, %s203
      %s205 = smul.u32 16, %s16
      %s206 = smul.u32 16, %s16
      %p207 = scmp.lt.s32.totalorder %s206, 63
      %s208 = scalar_select %p207, %s206, 63
      %s209 = smul.addr %s208, 4
      %s210 = scalar_lea.vmem %s2, %s209
      %s211 = smul.u32 16, %s16
      %p212 = scmp.lt.s32.totalorder %s16, 3
      %s213 = scalar_select %p212, %s16, 3
      %s214 = scalar_lea.vmem %s3, %s213
      %p215 = scmp.lt.s32.totalorder %s16, 3
      %s216 = scalar_select %p215, %s16, 3
      %s217 = scalar_lea.vmem %s4, %s216
      %v219 = vld [vmem:[%s204] sm:$0xff]
      %v220 = vld [vmem:[%s204 + $0x8] sm:$0xff]
      %v221 = vld [vmem:[%s204 + $0x10] sm:$0xff]
      %v222 = vld [vmem:[%s204 + $0x18] sm:$0xff]
      %v223 = vld [vmem:[%s204 + $0x20] sm:$0xff]
      %v224 = vld [vmem:[%s204 + $0x28] sm:$0xff]
      %v225 = vld [vmem:[%s204 + $0x30] sm:$0xff]
      %v226 = vld [vmem:[%s204 + $0x38] sm:$0xff]
      %v227 = vld [vmem:[%s204 + $0x40] sm:$0xff]
      %v228 = vld [vmem:[%s204 + $0x48] sm:$0xff]
      %v229 = vld [vmem:[%s204 + $0x50] sm:$0xff]
      %v230 = vld [vmem:[%s204 + $0x58] sm:$0xff]
      %v231 = vld [vmem:[%s204 + $0x60] sm:$0xff]
      %v232 = vld [vmem:[%s204 + $0x68] sm:$0xff]
      %v233 = vld [vmem:[%s204 + $0x70] sm:$0xff]
      %v234 = vld [vmem:[%s204 + $0x78] sm:$0xff]
      %v235 = vpack.c.bf16 %v220, %v219
      %v236 = vpack.c.bf16 %v222, %v221
      %v237 = vpack.c.bf16 %v224, %v223
      %v238 = vpack.c.bf16 %v226, %v225
      %v239 = vpack.c.bf16 %v228, %v227
      %v240 = vpack.c.bf16 %v230, %v229
      %v241 = vpack.c.bf16 %v232, %v231
      %v242 = vpack.c.bf16 %v234, %v233
      %v243 = vld [vmem:[%s1] sm:$0xf]
      %v244 = vld [vmem:[%s1 + $0x4] sm:$0xf]
      %v247 = vunpack.c.l.b16 %v243
      %v248 = vunpack.c.l.b16 %v244
      %v249 = vpack.c.b16 %v248, %v247
      %vm251 = vcmask 130048
      %v253 = vsel %vm251, %v235, 0
      %v256 = vsel %vm251, %v236, 0
      %v259 = vsel %vm251, %v237, 0
      %v262 = vsel %vm251, %v238, 0
      %v265 = vsel %vm251, %v239, 0
      %v268 = vsel %vm251, %v240, 0
      %v271 = vsel %vm251, %v241, 0
      %v274 = vsel %vm251, %v242, 0
      %276 = vmatprep.subr.bf16.mxu0 0
      %277 = vmatpush1.bf16.msra.mxu0 %v249
      %278 = vmatprep.subr.bf16.mxu0 0
      %279 = vmatpush1.bf16.msra.mxu0 0
      %280 = vmatprep.subr.bf16.mxu0 0
      %281 = vmatpush1.bf16.msra.mxu0 0
      %282 = vmatprep.subr.bf16.mxu0 0
      %283 = vmatpush1.bf16.msra.mxu0 0
      %284 = vmatprep.subr.bf16.mxu0 0
      %285 = vmatpush1.bf16.msra.mxu0 0
      %286 = vmatprep.subr.bf16.mxu0 0
      %287 = vmatpush1.bf16.msra.mxu0 0
      %288 = vmatprep.subr.bf16.mxu0 0
      %289 = vmatpush1.bf16.msra.mxu0 0
      %290 = vmatprep.subr.bf16.mxu0 0
      %291 = vmatpush1.bf16.msra.mxu0 0
      %292 = vmatprep.subr.bf16.mxu0 0
      %293 = vmatpush1.bf16.msra.mxu0 0
      %294 = vmatprep.subr.bf16.mxu0 0
      %295 = vmatpush1.bf16.msra.mxu0 0
      %296 = vmatprep.subr.bf16.mxu0 0
      %297 = vmatpush1.bf16.msra.mxu0 0
      %298 = vmatprep.subr.bf16.mxu0 0
      %299 = vmatpush1.bf16.msra.mxu0 0
      %300 = vmatprep.subr.bf16.mxu0 0
      %301 = vmatpush1.bf16.msra.mxu0 0
      %302 = vmatprep.subr.bf16.mxu0 0
      %303 = vmatpush1.bf16.msra.mxu0 0
      %304 = vmatprep.subr.bf16.mxu0 0
      %305 = vmatpush1.bf16.msra.mxu0 0
      %306 = vmatprep.subr.bf16.mxu0 0
      %307 = vmatpush1.bf16.msra.mxu0 0
      %308 = vmatprep.mubr.bf16.mxu0 0
      %309 = vmatmul.mubr.bf16.gmra.mrb[0].mxu0 %v253
      %v310 = vpop.f32.mrb[0].mxu0
      %v311 = vadd.f32 0.0, %v310
      %v312 = vpop.f32.mrb[0].mxu0
      %v313 = vpop.f32.mrb[0].mxu0
      %v314 = vadd.f32 0.0, %v313
      %v315 = vpop.f32.mrb[0].mxu0
      %316 = vmatprep.mubr.bf16.mxu0 0
      %317 = vmatmul.mubr.bf16.gmra.mrb[0].mxu0 %v256
      %v318 = vpop.f32.mrb[0].mxu0
      %v319 = vadd.f32 0.0, %v318
      %v320 = vpop.f32.mrb[0].mxu0
      %v321 = vpop.f32.mrb[0].mxu0
      %v322 = vadd.f32 0.0, %v321
      %v323 = vpop.f32.mrb[0].mxu0
      %324 = vmatprep.mubr.bf16.mxu0 0
      %325 = vmatmul.mubr.bf16.gmra.mrb[0].mxu0 %v259
      %v326 = vpop.f32.mrb[0].mxu0
      %v327 = vadd.f32 0.0, %v326
      %v328 = vpop.f32.mrb[0].mxu0
      %v329 = vpop.f32.mrb[0].mxu0
      %v330 = vadd.f32 0.0, %v329
      %v331 = vpop.f32.mrb[0].mxu0
      %332 = vmatprep.mubr.bf16.mxu0 0
      %333 = vmatmul.mubr.bf16.gmra.mrb[0].mxu0 %v262
      %v334 = vpop.f32.mrb[0].mxu0
      %v335 = vadd.f32 0.0, %v334
      %v336 = vpop.f32.mrb[0].mxu0
      %v337 = vpop.f32.mrb[0].mxu0
      %v338 = vadd.f32 0.0, %v337
      %v339 = vpop.f32.mrb[0].mxu0
      %340 = vmatprep.mubr.bf16.mxu0 0
      %341 = vmatmul.mubr.bf16.gmra.mrb[0].mxu0 %v265
      %v342 = vpop.f32.mrb[0].mxu0
      %v343 = vadd.f32 0.0, %v342
      %v344 = vpop.f32.mrb[0].mxu0
      %v345 = vpop.f32.mrb[0].mxu0
      %v346 = vadd.f32 0.0, %v345
      %v347 = vpop.f32.mrb[0].mxu0
      %348 = vmatprep.mubr.bf16.mxu0 0
      %349 = vmatmul.mubr.bf16.gmra.mrb[0].mxu0 %v268
      %v350 = vpop.f32.mrb[0].mxu0
      %v351 = vadd.f32 0.0, %v350
      %v352 = vpop.f32.mrb[0].mxu0
      %v353 = vpop.f32.mrb[0].mxu0
      %v354 = vadd.f32 0.0, %v353
      %v355 = vpop.f32.mrb[0].mxu0
      %356 = vmatprep.mubr.bf16.mxu0 0
      %357 = vmatmul.mubr.bf16.gmra.mrb[0].mxu0 %v271
      %v358 = vpop.f32.mrb[0].mxu0
      %v359 = vadd.f32 0.0, %v358
      %v360 = vpop.f32.mrb[0].mxu0
      %v361 = vpop.f32.mrb[0].mxu0
      %v362 = vadd.f32 0.0, %v361
      %v363 = vpop.f32.mrb[0].mxu0
      %364 = vmatprep.mubr.bf16.mxu0 0
      %365 = vmatmul.mubr.bf16.gmra.mrb[0].mxu0 %v274
      %v366 = vpop.f32.mrb[0].mxu0
      %v367 = vadd.f32 0.0, %v366
      %v368 = vpop.f32.mrb[0].mxu0
      %v369 = vpop.f32.mrb[0].mxu0
      %v370 = vadd.f32 0.0, %v369
      %v371 = vpop.f32.mrb[0].mxu0
      %372 = vdwg.mxu0
      %v373 = vpack.c.bf16 %v314, %v311
      %v374 = vpack.c.bf16 %v322, %v319
      %v375 = vpack.c.bf16 %v330, %v327
      %v376 = vpack.c.bf16 %v338, %v335
      %v377 = vpack.c.bf16 %v346, %v343
      %v378 = vpack.c.bf16 %v354, %v351
      %v379 = vpack.c.bf16 %v362, %v359
      %v380 = vpack.c.bf16 %v370, %v367
      %v389 = vunpack.c.l.b16 %v373
      %v390 = vunpack.c.h.b16 %v373
      %v391 = vunpack.c.l.b16 %v374
      %v392 = vunpack.c.h.b16 %v374
      %v393 = vunpack.c.l.b16 %v375
      %v394 = vunpack.c.h.b16 %v375
      %v395 = vunpack.c.l.b16 %v376
      %v396 = vunpack.c.h.b16 %v376
      %v397 = vunpack.c.l.b16 %v377
      %v398 = vunpack.c.h.b16 %v377
      %v399 = vunpack.c.l.b16 %v378
      %v400 = vunpack.c.h.b16 %v378
      %v401 = vunpack.c.l.b16 %v379
      %v402 = vunpack.c.h.b16 %v379
      %v403 = vunpack.c.l.b16 %v380
      %v404 = vunpack.c.h.b16 %v380
      %v405 = vpack.c.b16 %v389, %v389
      %v406 = vpack.c.b16 %v390, %v390
      %v407 = vpack.c.b16 %v391, %v391
      %v408 = vpack.c.b16 %v392, %v392
      %v409 = vpack.c.b16 %v393, %v393
      %v410 = vpack.c.b16 %v394, %v394
      %v411 = vpack.c.b16 %v395, %v395
      %v412 = vpack.c.b16 %v396, %v396
      %v413 = vpack.c.b16 %v397, %v397
      %v414 = vpack.c.b16 %v398, %v398
      %v415 = vpack.c.b16 %v399, %v399
      %v416 = vpack.c.b16 %v400, %v400
      %v417 = vpack.c.b16 %v401, %v401
      %v418 = vpack.c.b16 %v402, %v402
      %v419 = vpack.c.b16 %v403, %v403
      %v420 = vpack.c.b16 %v404, %v404
      %vm437 = vcmask 27648
      %438 = vst.msk [vmem:[%s210] sm:$0xf] %vm437, %v405
      %439 = vst.msk [vmem:[%s210 + $0x4] sm:$0xf] %vm437, %v406
      %440 = vst.msk [vmem:[%s210 + $0x8] sm:$0xf] %vm437, %v407
      %441 = vst.msk [vmem:[%s210 + $0xc] sm:$0xf] %vm437, %v408
      %442 = vst.msk [vmem:[%s210 + $0x10] sm:$0xf] %vm437, %v409
      %443 = vst.msk [vmem:[%s210 + $0x14] sm:$0xf] %vm437, %v410
      %444 = vst.msk [vmem:[%s210 + $0x18] sm:$0xf] %vm437, %v411
      %445 = vst.msk [vmem:[%s210 + $0x1c] sm:$0xf] %vm437, %v412
      %446 = vst.msk [vmem:[%s210 + $0x20] sm:$0xf] %vm437, %v413
      %447 = vst.msk [vmem:[%s210 + $0x24] sm:$0xf] %vm437, %v414
      %448 = vst.msk [vmem:[%s210 + $0x28] sm:$0xf] %vm437, %v415
      %449 = vst.msk [vmem:[%s210 + $0x2c] sm:$0xf] %vm437, %v416
      %450 = vst.msk [vmem:[%s210 + $0x30] sm:$0xf] %vm437, %v417
      %451 = vst.msk [vmem:[%s210 + $0x34] sm:$0xf] %vm437, %v418
      %452 = vst.msk [vmem:[%s210 + $0x38] sm:$0xf] %vm437, %v419
      %453 = vst.msk [vmem:[%s210 + $0x3c] sm:$0xf] %vm437, %v420
      %v454 = vunpack.c.l.bf16 %v373
      %v455 = vunpack.c.h.bf16 %v373
      %v456 = vunpack.c.l.bf16 %v374
      %v457 = vunpack.c.h.bf16 %v374
      %v458 = vunpack.c.l.bf16 %v375
      %v459 = vunpack.c.h.bf16 %v375
      %v460 = vunpack.c.l.bf16 %v376
      %v461 = vunpack.c.h.bf16 %v376
      %v462 = vunpack.c.l.bf16 %v377
      %v463 = vunpack.c.h.bf16 %v377
      %v464 = vunpack.c.l.bf16 %v378
      %v465 = vunpack.c.h.bf16 %v378
      %v466 = vunpack.c.l.bf16 %v379
      %v467 = vunpack.c.h.bf16 %v379
      %v468 = vunpack.c.l.bf16 %v380
      %v469 = vunpack.c.h.bf16 %v380
      %vm470 = vcmask 31744
      %v471 = vsel %vm470, %v454, 0.0
      %v472 = vsel %vm470, %v455, 0.0
      %v473 = vadd.f32 %v471, %v472
      %v474 = vsel %vm470, %v456, 0.0
      %v475 = vadd.f32 %v473, %v474
      %v476 = vsel %vm470, %v457, 0.0
      %v477 = vadd.f32 %v475, %v476
      %v478 = vsel %vm470, %v458, 0.0
      %v479 = vadd.f32 %v477, %v478
      %v480 = vsel %vm470, %v459, 0.0
      %v481 = vadd.f32 %v479, %v480
      %v482 = vsel %vm470, %v460, 0.0
      %v483 = vadd.f32 %v481, %v482
      %v484 = vsel %vm470, %v461, 0.0
      %v485 = vadd.f32 %v483, %v484
      %v486 = vsel %vm470, %v462, 0.0
      %v487 = vadd.f32 %v485, %v486
      %v488 = vsel %vm470, %v463, 0.0
      %v489 = vadd.f32 %v487, %v488
      %v490 = vsel %vm470, %v464, 0.0
      %v491 = vadd.f32 %v489, %v490
      %v492 = vsel %vm470, %v465, 0.0
      %v493 = vadd.f32 %v491, %v492
      %v494 = vsel %vm470, %v466, 0.0
      %v495 = vadd.f32 %v493, %v494
      %v496 = vsel %vm470, %v467, 0.0
      %v497 = vadd.f32 %v495, %v496
      %v498 = vsel %vm470, %v468, 0.0
      %v499 = vadd.f32 %v497, %v498
      %v500 = vsel %vm470, %v469, 0.0
      %v501 = vadd.f32 %v499, %v500
      %v502 = vrot.slane %v501, 4
      %v503 = vadd.f32 %v501, %v502
      %v504 = vrot.slane %v503, 2
      %v505 = vadd.f32 %v503, %v504
      %v506 = vrot.slane %v505, 1
      %v507 = vadd.f32 %v505, %v506
      %vm508 = vcmask 24576
      %509 = vst.msk [vmem:[%s214] sm:$0x1] %vm508, %v507
      %v510 = vmul.f32 %v454, %v454
      %v511 = vmul.f32 %v455, %v455
      %v512 = vmul.f32 %v456, %v456
      %v513 = vmul.f32 %v457, %v457
      %v514 = vmul.f32 %v458, %v458
      %v515 = vmul.f32 %v459, %v459
      %v516 = vmul.f32 %v460, %v460
      %v517 = vmul.f32 %v461, %v461
      %v518 = vmul.f32 %v462, %v462
      %v519 = vmul.f32 %v463, %v463
      %v520 = vmul.f32 %v464, %v464
      %v521 = vmul.f32 %v465, %v465
      %v522 = vmul.f32 %v466, %v466
      %v523 = vmul.f32 %v467, %v467
      %v524 = vmul.f32 %v468, %v468
      %v525 = vmul.f32 %v469, %v469
      %v526 = vsel %vm470, %v510, 0.0
      %v527 = vsel %vm470, %v511, 0.0
      %v528 = vadd.f32 %v526, %v527
      %v529 = vsel %vm470, %v512, 0.0
      %v530 = vadd.f32 %v528, %v529
      %v531 = vsel %vm470, %v513, 0.0
      %v532 = vadd.f32 %v530, %v531
      %v533 = vsel %vm470, %v514, 0.0
      %v534 = vadd.f32 %v532, %v533
      %v535 = vsel %vm470, %v515, 0.0
      %v536 = vadd.f32 %v534, %v535
      %v537 = vsel %vm470, %v516, 0.0
      %v538 = vadd.f32 %v536, %v537
      %v539 = vsel %vm470, %v517, 0.0
      %v540 = vadd.f32 %v538, %v539
      %v541 = vsel %vm470, %v518, 0.0
      %v542 = vadd.f32 %v540, %v541
      %v543 = vsel %vm470, %v519, 0.0
      %v544 = vadd.f32 %v542, %v543
      %v545 = vsel %vm470, %v520, 0.0
      %v546 = vadd.f32 %v544, %v545
      %v547 = vsel %vm470, %v521, 0.0
      %v548 = vadd.f32 %v546, %v547
      %v549 = vsel %vm470, %v522, 0.0
      %v550 = vadd.f32 %v548, %v549
      %v551 = vsel %vm470, %v523, 0.0
      %v552 = vadd.f32 %v550, %v551
      %v553 = vsel %vm470, %v524, 0.0
      %v554 = vadd.f32 %v552, %v553
      %v555 = vsel %vm470, %v525, 0.0
      %v556 = vadd.f32 %v554, %v555
      %v557 = vrot.slane %v556, 4
      %v558 = vadd.f32 %v556, %v557
      %v559 = vrot.slane %v558, 2
      %v560 = vadd.f32 %v558, %v559
      %v561 = vrot.slane %v560, 1
      %v562 = vadd.f32 %v560, %v561
      %563 = vst.msk [vmem:[%s217] sm:$0x1] %vm508, %v562
      %s564 = smul.u32 16, %s16
      %p565 = scmp.lt.s32.totalorder %s564, 63
      %s566 = scalar_select %p565, %s564, 63
      %s567 = smul.addr %s566, 4
      %s568 = scalar_lea.vmem %s2, %s567
      %p569 = scmp.lt.s32.totalorder %s16, 3
      %s570 = scalar_select %p569, %s16, 3
      %s571 = scalar_lea.vmem %s3, %s570
      %p572 = scmp.lt.s32.totalorder %s16, 3
      %s573 = scalar_select %p572, %s16, 3
      %s574 = scalar_lea.vmem %s4, %s573
      // Predicated region
      $region29: #{bottleneck_forward.4} parent=27 // pred_check
        %p575 = pneg %p81
      $region30: #{bottleneck_forward.4} parent=27 // pred_check_branch
        %577 = sbr.rel (%p575) target = $region32
      $region31: #{bottleneck_forward.4} parent=27 // pred_region
        %s578 = smul.u32 16, %s16
      $region32: #{bottleneck_forward.4} parent=27 // pred_fallthru
        _
      // Predicated region
      $region33: #{bottleneck_forward.4} parent=27 // pred_check
        %p579 = pneg %p107
      $region34: #{bottleneck_forward.4} parent=27 // pred_check_branch
        %581 = sbr.rel (%p579) target = $region36
      $region35: #{bottleneck_forward.4} parent=27 // pred_region
        _
      $region36: #{bottleneck_forward.4} parent=27 // pred_fallthru
        _
      // Predicated region
      $region37: #{bottleneck_forward.4} parent=27 // pred_check
        %p582 = pneg %p133
      $region38: #{bottleneck_forward.4} parent=27 // pred_check_branch
        %584 = sbr.rel (%p582) target = $region40
      $region39: #{bottleneck_forward.4} parent=27 // pred_region
        _
      $region40: #{bottleneck_forward.4} parent=27 // pred_fallthru
        _
    $region28: #{bottleneck_forward.4} parent=5 // pred_fallthru
      _
    %p585 = scmp.le.s32.totalorder 2, %s11
    // Predicated region
    $region41: #{bottleneck_forward.4} parent=5 // pred_check
      %p586 = pneg %p585
    $region42: #{bottleneck_forward.4} parent=5 // pred_check_branch
      %588 = sbr.rel (%p586) target = $region44
    $region43: #{bottleneck_forward.4} parent=5 // pred_region
      %s589 = ssub.s32 %s11, 2
      // Predicated region
      $region45: #{bottleneck_forward.4} parent=43 // pred_check
        %p590 = pneg %p87
      $region46: #{bottleneck_forward.4} parent=43 // pred_check_branch
        %592 = sbr.rel (%p590) target = $region48
      $region47: #{bottleneck_forward.4} parent=43 // pred_region
        %s593 = smul.u32 16, %s17
        %p594 = scmp.lt.s32.totalorder %s593, 63
        %s595 = scalar_select %p594, %s593, 63
        %s596 = smul.addr %s595, 4
        %s597 = scalar_lea.vmem %s2, %s596
      $region48: #{bottleneck_forward.4} parent=43 // pred_fallthru
        _
      // Predicated region
      $region49: #{bottleneck_forward.4} parent=43 // pred_check
        %p598 = pneg %p113
      $region50: #{bottleneck_forward.4} parent=43 // pred_check_branch
        %600 = sbr.rel (%p598) target = $region52
      $region51: #{bottleneck_forward.4} parent=43 // pred_region
        %p601 = scmp.lt.s32.totalorder %s17, 3
        %s602 = scalar_select %p601, %s17, 3
        %s603 = scalar_lea.vmem %s3, %s602
      $region52: #{bottleneck_forward.4} parent=43 // pred_fallthru
        _
      // Predicated region
      $region53: #{bottleneck_forward.4} parent=43 // pred_check
        %p604 = pneg %p139
      $region54: #{bottleneck_forward.4} parent=43 // pred_check_branch
        %606 = sbr.rel (%p604) target = $region56
      $region55: #{bottleneck_forward.4} parent=43 // pred_region
        %p607 = scmp.lt.s32.totalorder %s17, 3
        %s608 = scalar_select %p607, %s17, 3
        %s609 = scalar_lea.vmem %s4, %s608
      $region56: #{bottleneck_forward.4} parent=43 // pred_fallthru
        _
    $region44: #{bottleneck_forward.4} parent=5 // pred_fallthru
      _
  $region6: #{bottleneck_forward.4} parent=0 // loop_footer
    %s15 = sadd.s32 1, %s11
  $region7: #{bottleneck_forward.4} parent=0 // loop_footer_branch
    %10 = sbr.rel target = $region3
  $region8: #{bottleneck_forward.4} parent=0 // loop_exit
    _

// kernel: bottleneck_forward.6
$region0: #{bottleneck_forward.6}
  #allocation0 [shape = 'u32[]', space=smem, size = 0x4, offset = 0x4, fixed_abs, tag = 'smem constant byte address 0x4 - core index']
  #allocation1 [shape = 'u32[144,128]{1,0:T(1,128)}', space=vmem, size = 0x12000, scoped, tag = 'internal scratch']
  %s0 = inlined_call_operand.vmem [shape: bf16[512,4], index: 0, kind: input, shape index: {}]
  %s1 = inlined_call_operand.vmem [shape: f32[1,4], index: 1, kind: input, shape index: {}]
  %s2 = inlined_call_operand.vmem [shape: f32[1,4], index: 2, kind: input, shape index: {}]
  %s3 = inlined_call_operand.vmem [shape: bf16[4,16], index: 3, kind: input, shape index: {}]
  %s4 = inlined_call_operand.vmem [shape: bf16[512,16], index: 4, kind: output, shape index: {0}]
  %s5 = inlined_call_operand.vmem [shape: f32[4,1,16], index: 5, kind: output, shape index: {1}]
  %s6 = inlined_call_operand.vmem [shape: f32[4,1,16], index: 6, kind: output, shape index: {2}]
  %7 = xla_tuple %s4, %s5, %s6
  %s8 = sld [smem:[#allocation0]]
  $region65: #{bottleneck_forward.6} parent=0
    _
  %s10 = ssub.s32 1, %s8
  %s11 = scalar_select 0, %s10, %s8
  loop: start=0, step=1, limit=6
  $region2: #{bottleneck_forward.6} parent=0 // loop_pre_header
    _
  $region3: #{bottleneck_forward.6} parent=0 // loop_header
    %s13 = sphi 0, %s17
    %p14 = scmp.ge.s32.totalorder %s13, 6
    %s23 = sphi 0, %s25
    %s26 = sphi 0, %s23
    %s27 = sphi 0, %s26
    %s43 = sphi 0, %s27
    %s47 = sphi 0, %s47
    %s49 = sphi 0, %s47
    %s50 = sphi 0, %s49
    %s64 = sphi 0, %s50
    %s68 = sphi 0, %s68
    %s70 = sphi 0, %s68
    %s71 = sphi 0, %s70
    %s85 = sphi 0, %s71
    %s89 = sphi 0, %s89
    %s91 = sphi 0, %s89
    %s92 = sphi 0, %s91
    %s106 = sphi 0, %s92
    %s112 = sphi 0, %s114
    %s115 = sphi 0, %s112
    %s116 = sphi 0, %s115
    %s132 = sphi 0, %s116
    %s138 = sphi 0, %s140
    %s141 = sphi 0, %s138
    %s142 = sphi 0, %s141
    %s158 = sphi 0, %s142
    %s164 = sphi 0, %s166
    %s167 = sphi 0, %s164
    %s168 = sphi 0, %s167
    %s184 = sphi 0, %s168
  $region4: #{bottleneck_forward.6} parent=0 // loop_header_branch
    %16 = sbr.rel (%p14) target = $region8
  $region5: #{bottleneck_forward.6} parent=0 // loop_body
    %s18 = ssub.s32 %s13, 1
    %s19 = ssub.s32 %s13, 2
    %s20 = sadd.s32 %s13, 1
    %s21 = ssub.s32 %s13, %s20
    %p22 = scmp.eq.s32.totalorder %s21, 0
    %s24 = sadd.s32 %s23, 1
    %s25 = scalar_select %p22, %s23, %s24
    %p28 = pneg %p22
    %p29 = scmp.eq.s32.totalorder %s13, 3
    %p30 = por %p28, %p29
    %p31 = scmp.ne.s32.totalorder %s23, %s26
    %p32 = scmp.eq.s32.totalorder %s13, 0
    %p33 = por %p31, %p32
    %p34 = scmp.ne.s32.totalorder %s23, %s26
    %p35 = scmp.eq.s32.totalorder %s18, 3
    %p36 = por %p34, %p35
    %p37 = scmp.ne.s32.totalorder %s26, %s27
    %p38 = scmp.eq.s32.totalorder %s18, 0
    %p39 = por %p37, %p38
    %p40 = scmp.ne.s32.totalorder %s26, %s27
    %p41 = scmp.eq.s32.totalorder %s19, 3
    %p42 = por %p40, %p41
    %p44 = scmp.ne.s32.totalorder %s27, %s43
    %p45 = scmp.eq.s32.totalorder %s19, 0
    %p46 = por %p44, %p45
    %s48 = sadd.s32 %s47, 1
    %p51 = scmp.eq.s32.totalorder %s13, 3
    %p52 = scmp.ne.s32.totalorder %s47, %s49
    %p53 = scmp.eq.s32.totalorder %s13, 0
    %p54 = por %p52, %p53
    %p55 = scmp.ne.s32.totalorder %s47, %s49
    %p56 = scmp.eq.s32.totalorder %s18, 3
    %p57 = por %p55, %p56
    %p58 = scmp.ne.s32.totalorder %s49, %s50
    %p59 = scmp.eq.s32.totalorder %s18, 0
    %p60 = por %p58, %p59
    %p61 = scmp.ne.s32.totalorder %s49, %s50
    %p62 = scmp.eq.s32.totalorder %s19, 3
    %p63 = por %p61, %p62
    %p65 = scmp.ne.s32.totalorder %s50, %s64
    %p66 = scmp.eq.s32.totalorder %s19, 0
    %p67 = por %p65, %p66
    %s69 = sadd.s32 %s68, 1
    %p72 = scmp.eq.s32.totalorder %s13, 3
    %p73 = scmp.ne.s32.totalorder %s68, %s70
    %p74 = scmp.eq.s32.totalorder %s13, 0
    %p75 = por %p73, %p74
    %p76 = scmp.ne.s32.totalorder %s68, %s70
    %p77 = scmp.eq.s32.totalorder %s18, 3
    %p78 = por %p76, %p77
    %p79 = scmp.ne.s32.totalorder %s70, %s71
    %p80 = scmp.eq.s32.totalorder %s18, 0
    %p81 = por %p79, %p80
    %p82 = scmp.ne.s32.totalorder %s70, %s71
    %p83 = scmp.eq.s32.totalorder %s19, 3
    %p84 = por %p82, %p83
    %p86 = scmp.ne.s32.totalorder %s71, %s85
    %p87 = scmp.eq.s32.totalorder %s19, 0
    %p88 = por %p86, %p87
    %s90 = sadd.s32 %s89, 1
    %p93 = scmp.eq.s32.totalorder %s13, 3
    %p94 = scmp.ne.s32.totalorder %s89, %s91
    %p95 = scmp.eq.s32.totalorder %s13, 0
    %p96 = por %p94, %p95
    %p97 = scmp.ne.s32.totalorder %s89, %s91
    %p98 = scmp.eq.s32.totalorder %s18, 3
    %p99 = por %p97, %p98
    %p100 = scmp.ne.s32.totalorder %s91, %s92
    %p101 = scmp.eq.s32.totalorder %s18, 0
    %p102 = por %p100, %p101
    %p103 = scmp.ne.s32.totalorder %s91, %s92
    %p104 = scmp.eq.s32.totalorder %s19, 3
    %p105 = por %p103, %p104
    %p107 = scmp.ne.s32.totalorder %s92, %s106
    %p108 = scmp.eq.s32.totalorder %s19, 0
    %p109 = por %p107, %p108
    %s110 = ssub.s32 %s13, %s20
    %p111 = scmp.eq.s32.totalorder %s110, 0
    %s113 = sadd.s32 %s112, 1
    %s114 = scalar_select %p111, %s112, %s113
    %p117 = pneg %p111
    %p118 = scmp.eq.s32.totalorder %s13, 3
    %p119 = por %p117, %p118
    %p120 = scmp.ne.s32.totalorder %s112, %s115
    %p121 = scmp.eq.s32.totalorder %s13, 0
    %p122 = por %p120, %p121
    %p123 = scmp.ne.s32.totalorder %s112, %s115
    %p124 = scmp.eq.s32.totalorder %s18, 3
    %p125 = por %p123, %p124
    %p126 = scmp.ne.s32.totalorder %s115, %s116
    %p127 = scmp.eq.s32.totalorder %s18, 0
    %p128 = por %p126, %p127
    %p129 = scmp.ne.s32.totalorder %s115, %s116
    %p130 = scmp.eq.s32.totalorder %s19, 3
    %p131 = por %p129, %p130
    %p133 = scmp.ne.s32.totalorder %s116, %s132
    %p134 = scmp.eq.s32.totalorder %s19, 0
    %p135 = por %p133, %p134
    %s136 = ssub.s32 %s13, %s20
    %p137 = scmp.eq.s32.totalorder %s136, 0
    %s139 = sadd.s32 %s138, 1
    %s140 = scalar_select %p137, %s138, %s139
    %p143 = pneg %p137
    %p144 = scmp.eq.s32.totalorder %s13, 3
    %p145 = por %p143, %p144
    %p146 = scmp.ne.s32.totalorder %s138, %s141
    %p147 = scmp.eq.s32.totalorder %s13, 0
    %p148 = por %p146, %p147
    %p149 = scmp.ne.s32.totalorder %s138, %s141
    %p150 = scmp.eq.s32.totalorder %s18, 3
    %p151 = por %p149, %p150
    %p152 = scmp.ne.s32.totalorder %s141, %s142
    %p153 = scmp.eq.s32.totalorder %s18, 0
    %p154 = por %p152, %p153
    %p155 = scmp.ne.s32.totalorder %s141, %s142
    %p156 = scmp.eq.s32.totalorder %s19, 3
    %p157 = por %p155, %p156
    %p159 = scmp.ne.s32.totalorder %s142, %s158
    %p160 = scmp.eq.s32.totalorder %s19, 0
    %p161 = por %p159, %p160
    %s162 = ssub.s32 %s13, %s20
    %p163 = scmp.eq.s32.totalorder %s162, 0
    %s165 = sadd.s32 %s164, 1
    %s166 = scalar_select %p163, %s164, %s165
    %p169 = pneg %p163
    %p170 = scmp.eq.s32.totalorder %s13, 3
    %p171 = por %p169, %p170
    %p172 = scmp.ne.s32.totalorder %s164, %s167
    %p173 = scmp.eq.s32.totalorder %s13, 0
    %p174 = por %p172, %p173
    %p175 = scmp.ne.s32.totalorder %s164, %s167
    %p176 = scmp.eq.s32.totalorder %s18, 3
    %p177 = por %p175, %p176
    %p178 = scmp.ne.s32.totalorder %s167, %s168
    %p179 = scmp.eq.s32.totalorder %s18, 0
    %p180 = por %p178, %p179
    %p181 = scmp.ne.s32.totalorder %s167, %s168
    %p182 = scmp.eq.s32.totalorder %s19, 3
    %p183 = por %p181, %p182
    %p185 = scmp.ne.s32.totalorder %s168, %s184
    %p186 = scmp.eq.s32.totalorder %s19, 0
    %p187 = por %p185, %p186
    %p188 = scmp.le.s32.totalorder 1, %s13
    %p189 = scmp.lt.s32.totalorder %s13, 5
    %p190 = pnand %p188, %p189
    %p191 = pneg %p190
    // Predicated region
    $region9: #{bottleneck_forward.6} parent=5 // pred_check
      _
    $region10: #{bottleneck_forward.6} parent=5 // pred_check_branch
      %193 = sbr.rel (%p190) target = $region12
    $region11: #{bottleneck_forward.6} parent=5 // pred_region
      %s194 = ssub.s32 %s13, 1
      // Predicated region
      $region13: #{bottleneck_forward.6} parent=11 // pred_check
        %p195 = pneg %p60
      $region14: #{bottleneck_forward.6} parent=11 // pred_check_branch
        %197 = sbr.rel (%p195) target = $region16
      $region15: #{bottleneck_forward.6} parent=11 // pred_region
        _
      $region16: #{bottleneck_forward.6} parent=11 // pred_fallthru
        _
      // Predicated region
      $region17: #{bottleneck_forward.6} parent=11 // pred_check
        %p198 = pneg %p81
      $region18: #{bottleneck_forward.6} parent=11 // pred_check_branch
        %200 = sbr.rel (%p198) target = $region20
      $region19: #{bottleneck_forward.6} parent=11 // pred_region
        _
      $region20: #{bottleneck_forward.6} parent=11 // pred_fallthru
        _
      // Predicated region
      $region21: #{bottleneck_forward.6} parent=11 // pred_check
        %p201 = pneg %p102
      $region22: #{bottleneck_forward.6} parent=11 // pred_check_branch
        %203 = sbr.rel (%p201) target = $region24
      $region23: #{bottleneck_forward.6} parent=11 // pred_region
        _
      $region24: #{bottleneck_forward.6} parent=11 // pred_fallthru
        _
    $region12: #{bottleneck_forward.6} parent=5 // pred_fallthru
      _
    %p204 = scmp.lt.s32.totalorder %s13, 4
    // Predicated region
    $region25: #{bottleneck_forward.6} parent=5 // pred_check
      %p205 = pneg %p204
    $region26: #{bottleneck_forward.6} parent=5 // pred_check_branch
      %207 = sbr.rel (%p205) target = $region28
    $region27: #{bottleneck_forward.6} parent=5 // pred_region
      // Predicated region
      $region29: #{bottleneck_forward.6} parent=27 // pred_check
        %p208 = pneg %p33
      $region30: #{bottleneck_forward.6} parent=27 // pred_check_branch
        %210 = sbr.rel (%p208) target = $region32
      $region31: #{bottleneck_forward.6} parent=27 // pred_region
        %s211 = smul.u32 16, %s13
        %p212 = scmp.lt.s32.totalorder %s211, 63
        %s213 = scalar_select %p212, %s211, 63
        %s214 = smul.addr %s213, 4
        %s215 = scalar_lea.vmem %s0, %s214
        %s216 = smul.u32 16, %s13
      $region32: #{bottleneck_forward.6} parent=27 // pred_fallthru
        _
    $region28: #{bottleneck_forward.6} parent=5 // pred_fallthru
      _
    %p217 = scmp.le.s32.totalorder 1, %s13
    %p218 = scmp.lt.s32.totalorder %s13, 5
    %p219 = pnand %p217, %p218
    %p220 = pneg %p219
    // Predicated region
    $region33: #{bottleneck_forward.6} parent=5 // pred_check
      _
    $region34: #{bottleneck_forward.6} parent=5 // pred_check_branch
      %222 = sbr.rel (%p219) target = $region36
    $region35: #{bottleneck_forward.6} parent=5 // pred_region
      %s223 = ssub.s32 %s13, 1
      %s224 = smul.u32 16, %s18
      %p225 = scmp.lt.s32.totalorder %s224, 63
      %s226 = scalar_select %p225, %s224, 63
      %s227 = smul.addr %s226, 4
      %s228 = scalar_lea.vmem %s0, %s227
      %p229 = pneg %p39
      %p230 = pneg %p36
      %p231 = pneg %p60
      %p232 = pneg %p57
      %p233 = pneg %p81
      %p234 = pneg %p78
      %p235 = pneg %p102
      %p236 = pneg %p99
      %p237 = pneg %p128
      %p238 = pneg %p125
      %s239 = smul.u32 16, %s18
      %p240 = scmp.lt.s32.totalorder %s239, 63
      %s241 = scalar_select %p240, %s239, 63
      %s242 = smul.addr %s241, 4
      %s243 = scalar_lea.vmem %s4, %s242
      %p244 = pneg %p154
      %p245 = pneg %p151
      %p246 = scmp.lt.s32.totalorder %s18, 3
      %s247 = scalar_select %p246, %s18, 3
      %s248 = scalar_lea.vmem %s5, %s247
      %p249 = pneg %p180
      %p250 = pneg %p177
      %p251 = scmp.lt.s32.totalorder %s18, 3
      %s252 = scalar_select %p251, %s18, 3
      %s253 = scalar_lea.vmem %s6, %s252
      %s254 = smul.u32 16, %s18
      %p255 = scmp.lt.s32.totalorder %s254, 63
      %s256 = scalar_select %p255, %s254, 63
      %s257 = smul.addr %s256, 4
      %s258 = scalar_lea.vmem %s0, %s257
      %s259 = smul.u32 16, %s18
      %s260 = smul.u32 16, %s18
      %p261 = scmp.lt.s32.totalorder %s260, 63
      %s262 = scalar_select %p261, %s260, 63
      %s263 = smul.addr %s262, 4
      %s264 = scalar_lea.vmem %s4, %s263
      %s265 = smul.u32 16, %s18
      %p266 = scmp.lt.s32.totalorder %s18, 3
      %s267 = scalar_select %p266, %s18, 3
      %s268 = scalar_lea.vmem %s5, %s267
      %p269 = scmp.lt.s32.totalorder %s18, 3
      %s270 = scalar_select %p269, %s18, 3
      %s271 = scalar_lea.vmem %s6, %s270
      %v273 = vld [vmem:[%s258] sm:$0xf]
      %v274 = vld [vmem:[%s258 + $0x4] sm:$0xf]
      %v275 = vld [vmem:[%s258 + $0x8] sm:$0xf]
      %v276 = vld [vmem:[%s258 + $0xc] sm:$0xf]
      %v277 = vld [vmem:[%s258 + $0x10] sm:$0xf]
      %v278 = vld [vmem:[%s258 + $0x14] sm:$0xf]
      %v279 = vld [vmem:[%s258 + $0x18] sm:$0xf]
      %v280 = vld [vmem:[%s258 + $0x1c] sm:$0xf]
      %v281 = vld [vmem:[%s258 + $0x20] sm:$0xf]
      %v282 = vld [vmem:[%s258 + $0x24] sm:$0xf]
      %v283 = vld [vmem:[%s258 + $0x28] sm:$0xf]
      %v284 = vld [vmem:[%s258 + $0x2c] sm:$0xf]
      %v285 = vld [vmem:[%s258 + $0x30] sm:$0xf]
      %v286 = vld [vmem:[%s258 + $0x34] sm:$0xf]
      %v287 = vld [vmem:[%s258 + $0x38] sm:$0xf]
      %v288 = vld [vmem:[%s258 + $0x3c] sm:$0xf]
      %v289 = vunpack.c.l.bf16 %v273
      %v290 = vunpack.c.l.bf16 %v274
      %v291 = vunpack.c.l.bf16 %v275
      %v292 = vunpack.c.l.bf16 %v276
      %v293 = vunpack.c.l.bf16 %v277
      %v294 = vunpack.c.l.bf16 %v278
      %v295 = vunpack.c.l.bf16 %v279
      %v296 = vunpack.c.l.bf16 %v280
      %v297 = vunpack.c.l.bf16 %v281
      %v298 = vunpack.c.l.bf16 %v282
      %v299 = vunpack.c.l.bf16 %v283
      %v300 = vunpack.c.l.bf16 %v284
      %v301 = vunpack.c.l.bf16 %v285
      %v302 = vunpack.c.l.bf16 %v286
      %v303 = vunpack.c.l.bf16 %v287
      %v304 = vunpack.c.l.bf16 %v288
      %v305 = vld [vmem:[%s1] sm:$0x1]
      %v307 = vlaneseq
      %v308 = vshrl.u32 %v307, 7
      %v309 = vsub.s32 0, %v308
      %v310 = vrot.slane %v305, %v309
      %v312 = vmul.f32 %v289, %v310
      %v313 = vmul.f32 %v290, %v310
      %v314 = vmul.f32 %v291, %v310
      %v315 = vmul.f32 %v292, %v310
      %v316 = vmul.f32 %v293, %v310
      %v317 = vmul.f32 %v294, %v310
      %v318 = vmul.f32 %v295, %v310
      %v319 = vmul.f32 %v296, %v310
      %v320 = vmul.f32 %v297, %v310
      %v321 = vmul.f32 %v298, %v310
      %v322 = vmul.f32 %v299, %v310
      %v323 = vmul.f32 %v300, %v310
      %v324 = vmul.f32 %v301, %v310
      %v325 = vmul.f32 %v302, %v310
      %v326 = vmul.f32 %v303, %v310
      %v327 = vmul.f32 %v304, %v310
      %v328 = vld [vmem:[%s2] sm:$0x1]
      %v330 = vlaneseq
      %v331 = vshrl.u32 %v330, 7
      %v332 = vsub.s32 0, %v331
      %v333 = vrot.slane %v328, %v332
      %v335 = vadd.f32 %v312, %v333
      %v336 = vadd.f32 %v313, %v333
      %v337 = vadd.f32 %v314, %v333
      %v338 = vadd.f32 %v315, %v333
      %v339 = vadd.f32 %v316, %v333
      %v340 = vadd.f32 %v317, %v333
      %v341 = vadd.f32 %v318, %v333
      %v342 = vadd.f32 %v319, %v333
      %v343 = vadd.f32 %v320, %v333
      %v344 = vadd.f32 %v321, %v333
      %v345 = vadd.f32 %v322, %v333
      %v346 = vadd.f32 %v323, %v333
      %v347 = vadd.f32 %v324, %v333
      %v348 = vadd.f32 %v325, %v333
      %v349 = vadd.f32 %v326, %v333
      %v350 = vadd.f32 %v327, %v333
      %v351 = vmax.f32 %v335, 0.0
      %v352 = vmax.f32 %v336, 0.0
      %v353 = vmax.f32 %v337, 0.0
      %v354 = vmax.f32 %v338, 0.0
      %v355 = vmax.f32 %v339, 0.0
      %v356 = vmax.f32 %v340, 0.0
      %v357 = vmax.f32 %v341, 0.0
      %v358 = vmax.f32 %v342, 0.0
      %v359 = vmax.f32 %v343, 0.0
      %v360 = vmax.f32 %v344, 0.0
      %v361 = vmax.f32 %v345, 0.0
      %v362 = vmax.f32 %v346, 0.0
      %v363 = vmax.f32 %v347, 0.0
      %v364 = vmax.f32 %v348, 0.0
      %v365 = vmax.f32 %v349, 0.0
      %v366 = vmax.f32 %v350, 0.0
      %v367 = vpack.c.bf16 %v352, %v351
      %v368 = vpack.c.bf16 %v354, %v353
      %v369 = vpack.c.bf16 %v356, %v355
      %v370 = vpack.c.bf16 %v358, %v357
      %v371 = vpack.c.bf16 %v360, %v359
      %v372 = vpack.c.bf16 %v362, %v361
      %v373 = vpack.c.bf16 %v364, %v363
      %v374 = vpack.c.bf16 %v366, %v365
      %v375 = vld [vmem:[%s3] sm:$0x3]
      %vm376 = vcmask 31744
      %v378 = vsel %vm376, %v367, 0
      %v381 = vsel %vm376, %v368, 0
      %v384 = vsel %vm376, %v369, 0
      %v387 = vsel %vm376, %v370, 0
      %v390 = vsel %vm376, %v371, 0
      %v393 = vsel %vm376, %v372, 0
      %v396 = vsel %vm376, %v373, 0
      %v399 = vsel %vm376, %v374, 0
      %vm401 = vcmask 1041408
      %v403 = vsel %vm401, %v375, 0
      %405 = vmatprep.subr.bf16.mxu0 0
      %406 = vmatpush1.bf16.msra.mxu0 %v403
      %407 = vmatprep.subr.bf16.mxu0 0
      %408 = vmatpush1.bf16.msra.mxu0 0
      %409 = vmatprep.subr.bf16.mxu0 0
      %410 = vmatpush1.bf16.msra.mxu0 0
      %411 = vmatprep.subr.bf16.mxu0 0
      %412 = vmatpush1.bf16.msra.mxu0 0
      %413 = vmatprep.subr.bf16.mxu0 0
      %414 = vmatpush1.bf16.msra.mxu0 0
      %415 = vmatprep.subr.bf16.mxu0 0
      %416 = vmatpush1.bf16.msra.mxu0 0
      %417 = vmatprep.subr.bf16.mxu0 0
      %418 = vmatpush1.bf16.msra.mxu0 0
      %419 = vmatprep.subr.bf16.mxu0 0
      %420 = vmatpush1.bf16.msra.mxu0 0
      %421 = vmatprep.subr.bf16.mxu0 0
      %422 = vmatpush1.bf16.msra.mxu0 0
      %423 = vmatprep.subr.bf16.mxu0 0
      %424 = vmatpush1.bf16.msra.mxu0 0
      %425 = vmatprep.subr.bf16.mxu0 0
      %426 = vmatpush1.bf16.msra.mxu0 0
      %427 = vmatprep.subr.bf16.mxu0 0
      %428 = vmatpush1.bf16.msra.mxu0 0
      %429 = vmatprep.subr.bf16.mxu0 0
      %430 = vmatpush1.bf16.msra.mxu0 0
      %431 = vmatprep.subr.bf16.mxu0 0
      %432 = vmatpush1.bf16.msra.mxu0 0
      %433 = vmatprep.subr.bf16.mxu0 0
      %434 = vmatpush1.bf16.msra.mxu0 0
      %435 = vmatprep.subr.bf16.mxu0 0
      %436 = vmatpush1.bf16.msra.mxu0 0
      %437 = vmatprep.mubr.bf16.mxu0 0
      %438 = vmatmul.mubr.bf16.gmra.mrb[0].mxu0 %v378
      %v439 = vpop.f32.mrb[0].mxu0
      %v440 = vadd.f32 0.0, %v439
      %v441 = vpop.f32.mrb[0].mxu0
      %v442 = vpop.f32.mrb[0].mxu0
      %v443 = vadd.f32 0.0, %v442
      %v444 = vpop.f32.mrb[0].mxu0
      %445 = vmatprep.mubr.bf16.mxu0 0
      %446 = vmatmul.mubr.bf16.gmra.mrb[0].mxu0 %v381
      %v447 = vpop.f32.mrb[0].mxu0
      %v448 = vadd.f32 0.0, %v447
      %v449 = vpop.f32.mrb[0].mxu0
      %v450 = vpop.f32.mrb[0].mxu0
      %v451 = vadd.f32 0.0, %v450
      %v452 = vpop.f32.mrb[0].mxu0
      %453 = vmatprep.mubr.bf16.mxu0 0
      %454 = vmatmul.mubr.bf16.gmra.mrb[0].mxu0 %v384
      %v455 = vpop.f32.mrb[0].mxu0
      %v456 = vadd.f32 0.0, %v455
      %v457 = vpop.f32.mrb[0].mxu0
      %v458 = vpop.f32.mrb[0].mxu0
      %v459 = vadd.f32 0.0, %v458
      %v460 = vpop.f32.mrb[0].mxu0
      %461 = vmatprep.mubr.bf16.mxu0 0
      %462 = vmatmul.mubr.bf16.gmra.mrb[0].mxu0 %v387
      %v463 = vpop.f32.mrb[0].mxu0
      %v464 = vadd.f32 0.0, %v463
      %v465 = vpop.f32.mrb[0].mxu0
      %v466 = vpop.f32.mrb[0].mxu0
      %v467 = vadd.f32 0.0, %v466
      %v468 = vpop.f32.mrb[0].mxu0
      %469 = vmatprep.mubr.bf16.mxu0 0
      %470 = vmatmul.mubr.bf16.gmra.mrb[0].mxu0 %v390
      %v471 = vpop.f32.mrb[0].mxu0
      %v472 = vadd.f32 0.0, %v471
      %v473 = vpop.f32.mrb[0].mxu0
      %v474 = vpop.f32.mrb[0].mxu0
      %v475 = vadd.f32 0.0, %v474
      %v476 = vpop.f32.mrb[0].mxu0
      %477 = vmatprep.mubr.bf16.mxu0 0
      %478 = vmatmul.mubr.bf16.gmra.mrb[0].mxu0 %v393
      %v479 = vpop.f32.mrb[0].mxu0
      %v480 = vadd.f32 0.0, %v479
      %v481 = vpop.f32.mrb[0].mxu0
      %v482 = vpop.f32.mrb[0].mxu0
      %v483 = vadd.f32 0.0, %v482
      %v484 = vpop.f32.mrb[0].mxu0
      %485 = vmatprep.mubr.bf16.mxu0 0
      %486 = vmatmul.mubr.bf16.gmra.mrb[0].mxu0 %v396
      %v487 = vpop.f32.mrb[0].mxu0
      %v488 = vadd.f32 0.0, %v487
      %v489 = vpop.f32.mrb[0].mxu0
      %v490 = vpop.f32.mrb[0].mxu0
      %v491 = vadd.f32 0.0, %v490
      %v492 = vpop.f32.mrb[0].mxu0
      %493 = vmatprep.mubr.bf16.mxu0 0
      %494 = vmatmul.mubr.bf16.gmra.mrb[0].mxu0 %v399
      %v495 = vpop.f32.mrb[0].mxu0
      %v496 = vadd.f32 0.0, %v495
      %v497 = vpop.f32.mrb[0].mxu0
      %v498 = vpop.f32.mrb[0].mxu0
      %v499 = vadd.f32 0.0, %v498
      %v500 = vpop.f32.mrb[0].mxu0
      %501 = vdwg.mxu0
      %v502 = vpack.c.bf16 %v443, %v440
      %v503 = vpack.c.bf16 %v451, %v448
      %v504 = vpack.c.bf16 %v459, %v456
      %v505 = vpack.c.bf16 %v467, %v464
      %v506 = vpack.c.bf16 %v475, %v472
      %v507 = vpack.c.bf16 %v483, %v480
      %v508 = vpack.c.bf16 %v491, %v488
      %v509 = vpack.c.bf16 %v499, %v496
      %v518 = vunpack.c.l.b16 %v502
      %v519 = vunpack.c.h.b16 %v502
      %v520 = vunpack.c.l.b16 %v503
      %v521 = vunpack.c.h.b16 %v503
      %v522 = vunpack.c.l.b16 %v504
      %v523 = vunpack.c.h.b16 %v504
      %v524 = vunpack.c.l.b16 %v505
      %v525 = vunpack.c.h.b16 %v505
      %v526 = vunpack.c.l.b16 %v506
      %v527 = vunpack.c.h.b16 %v506
      %v528 = vunpack.c.l.b16 %v507
      %v529 = vunpack.c.h.b16 %v507
      %v530 = vunpack.c.l.b16 %v508
      %v531 = vunpack.c.h.b16 %v508
      %v532 = vunpack.c.l.b16 %v509
      %v533 = vunpack.c.h.b16 %v509
      %v534 = vpack.c.b16 %v518, %v518
      %v535 = vpack.c.b16 %v519, %v519
      %v536 = vpack.c.b16 %v520, %v520
      %v537 = vpack.c.b16 %v521, %v521
      %v538 = vpack.c.b16 %v522, %v522
      %v539 = vpack.c.b16 %v523, %v523
      %v540 = vpack.c.b16 %v524, %v524
      %v541 = vpack.c.b16 %v525, %v525
      %v542 = vpack.c.b16 %v526, %v526
      %v543 = vpack.c.b16 %v527, %v527
      %v544 = vpack.c.b16 %v528, %v528
      %v545 = vpack.c.b16 %v529, %v529
      %v546 = vpack.c.b16 %v530, %v530
      %v547 = vpack.c.b16 %v531, %v531
      %v548 = vpack.c.b16 %v532, %v532
      %v549 = vpack.c.b16 %v533, %v533
      %vm566 = vcmask 125952
      %567 = vst.msk [vmem:[%s264] sm:$0xf] %vm566, %v534
      %568 = vst.msk [vmem:[%s264 + $0x4] sm:$0xf] %vm566, %v535
      %569 = vst.msk [vmem:[%s264 + $0x8] sm:$0xf] %vm566, %v536
      %570 = vst.msk [vmem:[%s264 + $0xc] sm:$0xf] %vm566, %v537
      %571 = vst.msk [vmem:[%s264 + $0x10] sm:$0xf] %vm566, %v538
      %572 = vst.msk [vmem:[%s264 + $0x14] sm:$0xf] %vm566, %v539
      %573 = vst.msk [vmem:[%s264 + $0x18] sm:$0xf] %vm566, %v540
      %574 = vst.msk [vmem:[%s264 + $0x1c] sm:$0xf] %vm566, %v541
      %575 = vst.msk [vmem:[%s264 + $0x20] sm:$0xf] %vm566, %v542
      %576 = vst.msk [vmem:[%s264 + $0x24] sm:$0xf] %vm566, %v543
      %577 = vst.msk [vmem:[%s264 + $0x28] sm:$0xf] %vm566, %v544
      %578 = vst.msk [vmem:[%s264 + $0x2c] sm:$0xf] %vm566, %v545
      %579 = vst.msk [vmem:[%s264 + $0x30] sm:$0xf] %vm566, %v546
      %580 = vst.msk [vmem:[%s264 + $0x34] sm:$0xf] %vm566, %v547
      %581 = vst.msk [vmem:[%s264 + $0x38] sm:$0xf] %vm566, %v548
      %582 = vst.msk [vmem:[%s264 + $0x3c] sm:$0xf] %vm566, %v549
      %v583 = vunpack.c.l.bf16 %v502
      %v584 = vunpack.c.h.bf16 %v502
      %v585 = vunpack.c.l.bf16 %v503
      %v586 = vunpack.c.h.bf16 %v503
      %v587 = vunpack.c.l.bf16 %v504
      %v588 = vunpack.c.h.bf16 %v504
      %v589 = vunpack.c.l.bf16 %v505
      %v590 = vunpack.c.h.bf16 %v505
      %v591 = vunpack.c.l.bf16 %v506
      %v592 = vunpack.c.h.bf16 %v506
      %v593 = vunpack.c.l.bf16 %v507
      %v594 = vunpack.c.h.bf16 %v507
      %v595 = vunpack.c.l.bf16 %v508
      %v596 = vunpack.c.h.bf16 %v508
      %v597 = vunpack.c.l.bf16 %v509
      %v598 = vunpack.c.h.bf16 %v509
      %vm599 = vcmask 130048
      %v600 = vsel %vm599, %v583, 0.0
      %v601 = vsel %vm599, %v584, 0.0
      %v602 = vadd.f32 %v600, %v601
      %v603 = vsel %vm599, %v585, 0.0
      %v604 = vadd.f32 %v602, %v603
      %v605 = vsel %vm599, %v586, 0.0
      %v606 = vadd.f32 %v604, %v605
      %v607 = vsel %vm599, %v587, 0.0
      %v608 = vadd.f32 %v606, %v607
      %v609 = vsel %vm599, %v588, 0.0
      %v610 = vadd.f32 %v608, %v609
      %v611 = vsel %vm599, %v589, 0.0
      %v612 = vadd.f32 %v610, %v611
      %v613 = vsel %vm599, %v590, 0.0
      %v614 = vadd.f32 %v612, %v613
      %v615 = vsel %vm599, %v591, 0.0
      %v616 = vadd.f32 %v614, %v615
      %v617 = vsel %vm599, %v592, 0.0
      %v618 = vadd.f32 %v616, %v617
      %v619 = vsel %vm599, %v593, 0.0
      %v620 = vadd.f32 %v618, %v619
      %v621 = vsel %vm599, %v594, 0.0
      %v622 = vadd.f32 %v620, %v621
      %v623 = vsel %vm599, %v595, 0.0
      %v624 = vadd.f32 %v622, %v623
      %v625 = vsel %vm599, %v596, 0.0
      %v626 = vadd.f32 %v624, %v625
      %v627 = vsel %vm599, %v597, 0.0
      %v628 = vadd.f32 %v626, %v627
      %v629 = vsel %vm599, %v598, 0.0
      %v630 = vadd.f32 %v628, %v629
      %v631 = vrot.slane %v630, 4
      %v632 = vadd.f32 %v630, %v631
      %v633 = vrot.slane %v632, 2
      %v634 = vadd.f32 %v632, %v633
      %v635 = vrot.slane %v634, 1
      %v636 = vadd.f32 %v634, %v635
      %vm637 = vcmask 122880
      %638 = vst.msk [vmem:[%s268] sm:$0x1] %vm637, %v636
      %v639 = vmul.f32 %v583, %v583
      %v640 = vmul.f32 %v584, %v584
      %v641 = vmul.f32 %v585, %v585
      %v642 = vmul.f32 %v586, %v586
      %v643 = vmul.f32 %v587, %v587
      %v644 = vmul.f32 %v588, %v588
      %v645 = vmul.f32 %v589, %v589
      %v646 = vmul.f32 %v590, %v590
      %v647 = vmul.f32 %v591, %v591
      %v648 = vmul.f32 %v592, %v592
      %v649 = vmul.f32 %v593, %v593
      %v650 = vmul.f32 %v594, %v594
      %v651 = vmul.f32 %v595, %v595
      %v652 = vmul.f32 %v596, %v596
      %v653 = vmul.f32 %v597, %v597
      %v654 = vmul.f32 %v598, %v598
      %v655 = vsel %vm599, %v639, 0.0
      %v656 = vsel %vm599, %v640, 0.0
      %v657 = vadd.f32 %v655, %v656
      %v658 = vsel %vm599, %v641, 0.0
      %v659 = vadd.f32 %v657, %v658
      %v660 = vsel %vm599, %v642, 0.0
      %v661 = vadd.f32 %v659, %v660
      %v662 = vsel %vm599, %v643, 0.0
      %v663 = vadd.f32 %v661, %v662
      %v664 = vsel %vm599, %v644, 0.0
      %v665 = vadd.f32 %v663, %v664
      %v666 = vsel %vm599, %v645, 0.0
      %v667 = vadd.f32 %v665, %v666
      %v668 = vsel %vm599, %v646, 0.0
      %v669 = vadd.f32 %v667, %v668
      %v670 = vsel %vm599, %v647, 0.0
      %v671 = vadd.f32 %v669, %v670
      %v672 = vsel %vm599, %v648, 0.0
      %v673 = vadd.f32 %v671, %v672
      %v674 = vsel %vm599, %v649, 0.0
      %v675 = vadd.f32 %v673, %v674
      %v676 = vsel %vm599, %v650, 0.0
      %v677 = vadd.f32 %v675, %v676
      %v678 = vsel %vm599, %v651, 0.0
      %v679 = vadd.f32 %v677, %v678
      %v680 = vsel %vm599, %v652, 0.0
      %v681 = vadd.f32 %v679, %v680
      %v682 = vsel %vm599, %v653, 0.0
      %v683 = vadd.f32 %v681, %v682
      %v684 = vsel %vm599, %v654, 0.0
      %v685 = vadd.f32 %v683, %v684
      %v686 = vrot.slane %v685, 4
      %v687 = vadd.f32 %v685, %v686
      %v688 = vrot.slane %v687, 2
      %v689 = vadd.f32 %v687, %v688
      %v690 = vrot.slane %v689, 1
      %v691 = vadd.f32 %v689, %v690
      %692 = vst.msk [vmem:[%s271] sm:$0x1] %vm637, %v691
      %s693 = smul.u32 16, %s18
      %p694 = scmp.lt.s32.totalorder %s693, 63
      %s695 = scalar_select %p694, %s693, 63
      %s696 = smul.addr %s695, 4
      %s697 = scalar_lea.vmem %s4, %s696
      %p698 = scmp.lt.s32.totalorder %s18, 3
      %s699 = scalar_select %p698, %s18, 3
      %s700 = scalar_lea.vmem %s5, %s699
      %p701 = scmp.lt.s32.totalorder %s18, 3
      %s702 = scalar_select %p701, %s18, 3
      %s703 = scalar_lea.vmem %s6, %s702
      // Predicated region
      $region37: #{bottleneck_forward.6} parent=35 // pred_check
        %p704 = pneg %p125
      $region38: #{bottleneck_forward.6} parent=35 // pred_check_branch
        %706 = sbr.rel (%p704) target = $region40
      $region39: #{bottleneck_forward.6} parent=35 // pred_region
        %s707 = smul.u32 16, %s18
      $region40: #{bottleneck_forward.6} parent=35 // pred_fallthru
        _
      // Predicated region
      $region41: #{bottleneck_forward.6} parent=35 // pred_check
        %p708 = pneg %p151
      $region42: #{bottleneck_forward.6} parent=35 // pred_check_branch
        %710 = sbr.rel (%p708) target = $region44
      $region43: #{bottleneck_forward.6} parent=35 // pred_region
        _
      $region44: #{bottleneck_forward.6} parent=35 // pred_fallthru
        _
      // Predicated region
      $region45: #{bottleneck_forward.6} parent=35 // pred_check
        %p711 = pneg %p177
      $region46: #{bottleneck_forward.6} parent=35 // pred_check_branch
        %713 = sbr.rel (%p711) target = $region48
      $region47: #{bottleneck_forward.6} parent=35 // pred_region
        _
      $region48: #{bottleneck_forward.6} parent=35 // pred_fallthru
        _
    $region36: #{bottleneck_forward.6} parent=5 // pred_fallthru
      _
    %p714 = scmp.le.s32.totalorder 2, %s13
    // Predicated region
    $region49: #{bottleneck_forward.6} parent=5 // pred_check
      %p715 = pneg %p714
    $region50: #{bottleneck_forward.6} parent=5 // pred_check_branch
      %717 = sbr.rel (%p715) target = $region52
    $region51: #{bottleneck_forward.6} parent=5 // pred_region
      %s718 = ssub.s32 %s13, 2
      // Predicated region
      $region53: #{bottleneck_forward.6} parent=51 // pred_check
        %p719 = pneg %p131
      $region54: #{bottleneck_forward.6} parent=51 // pred_check_branch
        %721 = sbr.rel (%p719) target = $region56
      $region55: #{bottleneck_forward.6} parent=51 // pred_region
        %s722 = smul.u32 16, %s19
        %p723 = scmp.lt.s32.totalorder %s722, 63
        %s724 = scalar_select %p723, %s722, 63
        %s725 = smul.addr %s724, 4
        %s726 = scalar_lea.vmem %s4, %s725
      $region56: #{bottleneck_forward.6} parent=51 // pred_fallthru
        _
      // Predicated region
      $region57: #{bottleneck_forward.6} parent=51 // pred_check
        %p727 = pneg %p157
      $region58: #{bottleneck_forward.6} parent=51 // pred_check_branch
        %729 = sbr.rel (%p727) target = $region60
      $region59: #{bottleneck_forward.6} parent=51 // pred_region
        %p730 = scmp.lt.s32.totalorder %s19, 3
        %s731 = scalar_select %p730, %s19, 3
        %s732 = scalar_lea.vmem %s5, %s731
      $region60: #{bottleneck_forward.6} parent=51 // pred_fallthru
        _
      // Predicated region
      $region61: #{bottleneck_forward.6} parent=51 // pred_check
        %p733 = pneg %p183
      $region62: #{bottleneck_forward.6} parent=51 // pred_check_branch
        %735 = sbr.rel (%p733) target = $region64
      $region63: #{bottleneck_forward.6} parent=51 // pred_region
        %p736 = scmp.lt.s32.totalorder %s19, 3
        %s737 = scalar_select %p736, %s19, 3
        %s738 = scalar_lea.vmem %s6, %s737
      $region64: #{bottleneck_forward.6} parent=51 // pred_fallthru
        _
    $region52: #{bottleneck_forward.6} parent=5 // pred_fallthru
      _
  $region6: #{bottleneck_forward.6} parent=0 // loop_footer
    %s17 = sadd.s32 1, %s13
  $region7: #{bottleneck_forward.6} parent=0 // loop_footer_branch
    %12 = sbr.rel target = $region3
  $region8: #{bottleneck_forward.6} parent=0 // loop_exit
    _

// kernel: bottleneck_forward.7
$region0: #{bottleneck_forward.7}
  #allocation0 [shape = 'u32[]', space=smem, size = 0x4, offset = 0x4, fixed_abs, tag = 'smem constant byte address 0x4 - core index']
  #allocation1 [shape = 'u32[144,128]{1,0:T(1,128)}', space=vmem, size = 0x12000, scoped, tag = 'internal scratch']
  %s0 = inlined_call_operand.vmem [shape: bf16[512,16], index: 0, kind: input, shape index: {}]
  %s1 = inlined_call_operand.vmem [shape: f32[1,16], index: 1, kind: input, shape index: {}]
  %s2 = inlined_call_operand.vmem [shape: f32[1,16], index: 2, kind: input, shape index: {}]
  %s3 = inlined_call_operand.vmem [shape: f32[512,16], index: 3, kind: input, shape index: {}, may-alias: {3,4}]
  %s4 = inlined_call_operand.vmem [shape: f32[512,16], index: 4, kind: output, shape index: {}, may-alias: {3,4}]
  %s5 = sld [smem:[#allocation0]]
  $region49: #{bottleneck_forward.7} parent=0
    _
  %s7 = ssub.s32 1, %s5
  %s8 = scalar_select 0, %s7, %s5
  loop: start=0, step=1, limit=6
  $region2: #{bottleneck_forward.7} parent=0 // loop_pre_header
    _
  $region3: #{bottleneck_forward.7} parent=0 // loop_header
    %s10 = sphi 0, %s14
    %p11 = scmp.ge.s32.totalorder %s10, 6
    %s20 = sphi 0, %s22
    %s23 = sphi 0, %s20
    %s24 = sphi 0, %s23
    %s40 = sphi 0, %s24
    %s44 = sphi 0, %s44
    %s46 = sphi 0, %s44
    %s47 = sphi 0, %s46
    %s61 = sphi 0, %s47
    %s65 = sphi 0, %s65
    %s67 = sphi 0, %s65
    %s68 = sphi 0, %s67
    %s82 = sphi 0, %s68
    %s88 = sphi 0, %s90
    %s91 = sphi 0, %s88
    %s92 = sphi 0, %s91
    %s108 = sphi 0, %s92
    %s114 = sphi 0, %s116
    %s117 = sphi 0, %s114
    %s118 = sphi 0, %s117
    %s134 = sphi 0, %s118
  $region4: #{bottleneck_forward.7} parent=0 // loop_header_branch
    %13 = sbr.rel (%p11) target = $region8
  $region5: #{bottleneck_forward.7} parent=0 // loop_body
    %s15 = ssub.s32 %s10, 1
    %s16 = ssub.s32 %s10, 2
    %s17 = sadd.s32 %s10, 1
    %s18 = ssub.s32 %s10, %s17
    %p19 = scmp.eq.s32.totalorder %s18, 0
    %s21 = sadd.s32 %s20, 1
    %s22 = scalar_select %p19, %s20, %s21
    %p25 = pneg %p19
    %p26 = scmp.eq.s32.totalorder %s10, 3
    %p27 = por %p25, %p26
    %p28 = scmp.ne.s32.totalorder %s20, %s23
    %p29 = scmp.eq.s32.totalorder %s10, 0
    %p30 = por %p28, %p29
    %p31 = scmp.ne.s32.totalorder %s20, %s23
    %p32 = scmp.eq.s32.totalorder %s15, 3
    %p33 = por %p31, %p32
    %p34 = scmp.ne.s32.totalorder %s23, %s24
    %p35 = scmp.eq.s32.totalorder %s15, 0
    %p36 = por %p34, %p35
    %p37 = scmp.ne.s32.totalorder %s23, %s24
    %p38 = scmp.eq.s32.totalorder %s16, 3
    %p39 = por %p37, %p38
    %p41 = scmp.ne.s32.totalorder %s24, %s40
    %p42 = scmp.eq.s32.totalorder %s16, 0
    %p43 = por %p41, %p42
    %s45 = sadd.s32 %s44, 1
    %p48 = scmp.eq.s32.totalorder %s10, 3
    %p49 = scmp.ne.s32.totalorder %s44, %s46
    %p50 = scmp.eq.s32.totalorder %s10, 0
    %p51 = por %p49, %p50
    %p52 = scmp.ne.s32.totalorder %s44, %s46
    %p53 = scmp.eq.s32.totalorder %s15, 3
    %p54 = por %p52, %p53
    %p55 = scmp.ne.s32.totalorder %s46, %s47
    %p56 = scmp.eq.s32.totalorder %s15, 0
    %p57 = por %p55, %p56
    %p58 = scmp.ne.s32.totalorder %s46, %s47
    %p59 = scmp.eq.s32.totalorder %s16, 3
    %p60 = por %p58, %p59
    %p62 = scmp.ne.s32.totalorder %s47, %s61
    %p63 = scmp.eq.s32.totalorder %s16, 0
    %p64 = por %p62, %p63
    %s66 = sadd.s32 %s65, 1
    %p69 = scmp.eq.s32.totalorder %s10, 3
    %p70 = scmp.ne.s32.totalorder %s65, %s67
    %p71 = scmp.eq.s32.totalorder %s10, 0
    %p72 = por %p70, %p71
    %p73 = scmp.ne.s32.totalorder %s65, %s67
    %p74 = scmp.eq.s32.totalorder %s15, 3
    %p75 = por %p73, %p74
    %p76 = scmp.ne.s32.totalorder %s67, %s68
    %p77 = scmp.eq.s32.totalorder %s15, 0
    %p78 = por %p76, %p77
    %p79 = scmp.ne.s32.totalorder %s67, %s68
    %p80 = scmp.eq.s32.totalorder %s16, 3
    %p81 = por %p79, %p80
    %p83 = scmp.ne.s32.totalorder %s68, %s82
    %p84 = scmp.eq.s32.totalorder %s16, 0
    %p85 = por %p83, %p84
    %s86 = ssub.s32 %s10, %s17
    %p87 = scmp.eq.s32.totalorder %s86, 0
    %s89 = sadd.s32 %s88, 1
    %s90 = scalar_select %p87, %s88, %s89
    %p93 = pneg %p87
    %p94 = scmp.eq.s32.totalorder %s10, 3
    %p95 = por %p93, %p94
    %p96 = scmp.ne.s32.totalorder %s88, %s91
    %p97 = scmp.eq.s32.totalorder %s10, 0
    %p98 = por %p96, %p97
    %p99 = scmp.ne.s32.totalorder %s88, %s91
    %p100 = scmp.eq.s32.totalorder %s15, 3
    %p101 = por %p99, %p100
    %p102 = scmp.ne.s32.totalorder %s91, %s92
    %p103 = scmp.eq.s32.totalorder %s15, 0
    %p104 = por %p102, %p103
    %p105 = scmp.ne.s32.totalorder %s91, %s92
    %p106 = scmp.eq.s32.totalorder %s16, 3
    %p107 = por %p105, %p106
    %p109 = scmp.ne.s32.totalorder %s92, %s108
    %p110 = scmp.eq.s32.totalorder %s16, 0
    %p111 = por %p109, %p110
    %s112 = ssub.s32 %s10, %s17
    %p113 = scmp.eq.s32.totalorder %s112, 0
    %s115 = sadd.s32 %s114, 1
    %s116 = scalar_select %p113, %s114, %s115
    %p119 = pneg %p113
    %p120 = scmp.eq.s32.totalorder %s10, 3
    %p121 = por %p119, %p120
    %p122 = scmp.ne.s32.totalorder %s114, %s117
    %p123 = scmp.eq.s32.totalorder %s10, 0
    %p124 = por %p122, %p123
    %p125 = scmp.ne.s32.totalorder %s114, %s117
    %p126 = scmp.eq.s32.totalorder %s15, 3
    %p127 = por %p125, %p126
    %p128 = scmp.ne.s32.totalorder %s117, %s118
    %p129 = scmp.eq.s32.totalorder %s15, 0
    %p130 = por %p128, %p129
    %p131 = scmp.ne.s32.totalorder %s117, %s118
    %p132 = scmp.eq.s32.totalorder %s16, 3
    %p133 = por %p131, %p132
    %p135 = scmp.ne.s32.totalorder %s118, %s134
    %p136 = scmp.eq.s32.totalorder %s16, 0
    %p137 = por %p135, %p136
    %p138 = scmp.le.s32.totalorder 1, %s10
    %p139 = scmp.lt.s32.totalorder %s10, 5
    %p140 = pnand %p138, %p139
    %p141 = pneg %p140
    // Predicated region
    $region9: #{bottleneck_forward.7} parent=5 // pred_check
      _
    $region10: #{bottleneck_forward.7} parent=5 // pred_check_branch
      %143 = sbr.rel (%p140) target = $region12
    $region11: #{bottleneck_forward.7} parent=5 // pred_region
      %s144 = ssub.s32 %s10, 1
      // Predicated region
      $region13: #{bottleneck_forward.7} parent=11 // pred_check
        %p145 = pneg %p57
      $region14: #{bottleneck_forward.7} parent=11 // pred_check_branch
        %147 = sbr.rel (%p145) target = $region16
      $region15: #{bottleneck_forward.7} parent=11 // pred_region
        _
      $region16: #{bottleneck_forward.7} parent=11 // pred_fallthru
        _
      // Predicated region
      $region17: #{bottleneck_forward.7} parent=11 // pred_check
        %p148 = pneg %p78
      $region18: #{bottleneck_forward.7} parent=11 // pred_check_branch
        %150 = sbr.rel (%p148) target = $region20
      $region19: #{bottleneck_forward.7} parent=11 // pred_region
        _
      $region20: #{bottleneck_forward.7} parent=11 // pred_fallthru
        _
    $region12: #{bottleneck_forward.7} parent=5 // pred_fallthru
      _
    %p151 = scmp.lt.s32.totalorder %s10, 4
    // Predicated region
    $region21: #{bottleneck_forward.7} parent=5 // pred_check
      %p152 = pneg %p151
    $region22: #{bottleneck_forward.7} parent=5 // pred_check_branch
      %154 = sbr.rel (%p152) target = $region24
    $region23: #{bottleneck_forward.7} parent=5 // pred_region
      // Predicated region
      $region25: #{bottleneck_forward.7} parent=23 // pred_check
        %p155 = pneg %p30
      $region26: #{bottleneck_forward.7} parent=23 // pred_check_branch
        %157 = sbr.rel (%p155) target = $region28
      $region27: #{bottleneck_forward.7} parent=23 // pred_region
        %s158 = smul.u32 16, %s10
        %p159 = scmp.lt.s32.totalorder %s158, 63
        %s160 = scalar_select %p159, %s158, 63
        %s161 = smul.addr %s160, 4
        %s162 = scalar_lea.vmem %s0, %s161
        %s163 = smul.u32 16, %s10
      $region28: #{bottleneck_forward.7} parent=23 // pred_fallthru
        _
      // Predicated region
      $region29: #{bottleneck_forward.7} parent=23 // pred_check
        %p164 = pneg %p98
      $region30: #{bottleneck_forward.7} parent=23 // pred_check_branch
        %166 = sbr.rel (%p164) target = $region32
      $region31: #{bottleneck_forward.7} parent=23 // pred_region
        %s167 = smul.u32 16, %s10
        %p168 = scmp.lt.s32.totalorder %s167, 63
        %s169 = scalar_select %p168, %s167, 63
        %s170 = smul.addr %s169, 8
        %s171 = scalar_lea.vmem %s3, %s170
        %s172 = smul.u32 16, %s10
      $region32: #{bottleneck_forward.7} parent=23 // pred_fallthru
        _
    $region24: #{bottleneck_forward.7} parent=5 // pred_fallthru
      _
    %p173 = scmp.le.s32.totalorder 1, %s10
    %p174 = scmp.lt.s32.totalorder %s10, 5
    %p175 = pnand %p173, %p174
    %p176 = pneg %p175
    // Predicated region
    $region33: #{bottleneck_forward.7} parent=5 // pred_check
      _
    $region34: #{bottleneck_forward.7} parent=5 // pred_check_branch
      %178 = sbr.rel (%p175) target = $region36
    $region35: #{bottleneck_forward.7} parent=5 // pred_region
      %s179 = ssub.s32 %s10, 1
      %s180 = smul.u32 16, %s15
      %p181 = scmp.lt.s32.totalorder %s180, 63
      %s182 = scalar_select %p181, %s180, 63
      %s183 = smul.addr %s182, 4
      %s184 = scalar_lea.vmem %s0, %s183
      %p185 = pneg %p36
      %p186 = pneg %p33
      %p187 = pneg %p57
      %p188 = pneg %p54
      %p189 = pneg %p78
      %p190 = pneg %p75
      %s191 = smul.u32 16, %s15
      %p192 = scmp.lt.s32.totalorder %s191, 63
      %s193 = scalar_select %p192, %s191, 63
      %s194 = smul.addr %s193, 8
      %s195 = scalar_lea.vmem %s3, %s194
      %p196 = pneg %p104
      %p197 = pneg %p101
      %p198 = pneg %p130
      %p199 = pneg %p127
      %s200 = smul.u32 16, %s15
      %p201 = scmp.lt.s32.totalorder %s200, 63
      %s202 = scalar_select %p201, %s200, 63
      %s203 = smul.addr %s202, 8
      %s204 = scalar_lea.vmem %s4, %s203
      %s205 = smul.u32 16, %s15
      %p206 = scmp.lt.s32.totalorder %s205, 63
      %s207 = scalar_select %p206, %s205, 63
      %s208 = smul.addr %s207, 4
      %s209 = scalar_lea.vmem %s0, %s208
      %s210 = smul.u32 16, %s15
      %s211 = smul.u32 16, %s15
      %p212 = scmp.lt.s32.totalorder %s211, 63
      %s213 = scalar_select %p212, %s211, 63
      %s214 = smul.addr %s213, 8
      %s215 = scalar_lea.vmem %s3, %s214
      %s216 = smul.u32 16, %s15
      %s217 = smul.u32 16, %s15
      %p218 = scmp.lt.s32.totalorder %s217, 63
      %s219 = scalar_select %p218, %s217, 63
      %s220 = smul.addr %s219, 8
      %s221 = scalar_lea.vmem %s4, %s220
      %s222 = smul.u32 16, %s15
      %v223 = vld [vmem:[%s209] sm:$0xf]
      %v224 = vld [vmem:[%s209 + $0x4] sm:$0xf]
      %v225 = vld [vmem:[%s209 + $0x8] sm:$0xf]
      %v226 = vld [vmem:[%s209 + $0xc] sm:$0xf]
      %v227 = vld [vmem:[%s209 + $0x10] sm:$0xf]
      %v228 = vld [vmem:[%s209 + $0x14] sm:$0xf]
      %v229 = vld [vmem:[%s209 + $0x18] sm:$0xf]
      %v230 = vld [vmem:[%s209 + $0x1c] sm:$0xf]
      %v231 = vld [vmem:[%s209 + $0x20] sm:$0xf]
      %v232 = vld [vmem:[%s209 + $0x24] sm:$0xf]
      %v233 = vld [vmem:[%s209 + $0x28] sm:$0xf]
      %v234 = vld [vmem:[%s209 + $0x2c] sm:$0xf]
      %v235 = vld [vmem:[%s209 + $0x30] sm:$0xf]
      %v236 = vld [vmem:[%s209 + $0x34] sm:$0xf]
      %v237 = vld [vmem:[%s209 + $0x38] sm:$0xf]
      %v238 = vld [vmem:[%s209 + $0x3c] sm:$0xf]
      %v239 = vunpack.c.l.bf16 %v223
      %v240 = vunpack.c.l.bf16 %v224
      %v241 = vunpack.c.l.bf16 %v225
      %v242 = vunpack.c.l.bf16 %v226
      %v243 = vunpack.c.l.bf16 %v227
      %v244 = vunpack.c.l.bf16 %v228
      %v245 = vunpack.c.l.bf16 %v229
      %v246 = vunpack.c.l.bf16 %v230
      %v247 = vunpack.c.l.bf16 %v231
      %v248 = vunpack.c.l.bf16 %v232
      %v249 = vunpack.c.l.bf16 %v233
      %v250 = vunpack.c.l.bf16 %v234
      %v251 = vunpack.c.l.bf16 %v235
      %v252 = vunpack.c.l.bf16 %v236
      %v253 = vunpack.c.l.bf16 %v237
      %v254 = vunpack.c.l.bf16 %v238
      %v255 = vld [vmem:[%s1] sm:$0x1]
      %v257 = vlaneseq
      %v258 = vshrl.u32 %v257, 7
      %v259 = vsub.s32 0, %v258
      %v260 = vrot.slane %v255, %v259
      %v262 = vmul.f32 %v239, %v260
      %v263 = vmul.f32 %v240, %v260
      %v264 = vmul.f32 %v241, %v260
      %v265 = vmul.f32 %v242, %v260
      %v266 = vmul.f32 %v243, %v260
      %v267 = vmul.f32 %v244, %v260
      %v268 = vmul.f32 %v245, %v260
      %v269 = vmul.f32 %v246, %v260
      %v270 = vmul.f32 %v247, %v260
      %v271 = vmul.f32 %v248, %v260
      %v272 = vmul.f32 %v249, %v260
      %v273 = vmul.f32 %v250, %v260
      %v274 = vmul.f32 %v251, %v260
      %v275 = vmul.f32 %v252, %v260
      %v276 = vmul.f32 %v253, %v260
      %v277 = vmul.f32 %v254, %v260
      %v278 = vld [vmem:[%s2] sm:$0x1]
      %v280 = vlaneseq
      %v281 = vshrl.u32 %v280, 7
      %v282 = vsub.s32 0, %v281
      %v283 = vrot.slane %v278, %v282
      %v285 = vadd.f32 %v262, %v283
      %v286 = vadd.f32 %v263, %v283
      %v287 = vadd.f32 %v264, %v283
      %v288 = vadd.f32 %v265, %v283
      %v289 = vadd.f32 %v266, %v283
      %v290 = vadd.f32 %v267, %v283
      %v291 = vadd.f32 %v268, %v283
      %v292 = vadd.f32 %v269, %v283
      %v293 = vadd.f32 %v270, %v283
      %v294 = vadd.f32 %v271, %v283
      %v295 = vadd.f32 %v272, %v283
      %v296 = vadd.f32 %v273, %v283
      %v297 = vadd.f32 %v274, %v283
      %v298 = vadd.f32 %v275, %v283
      %v299 = vadd.f32 %v276, %v283
      %v300 = vadd.f32 %v277, %v283
      %v301 = vld [vmem:[%s215] sm:$0xff]
      %v302 = vld [vmem:[%s215 + $0x8] sm:$0xff]
      %v303 = vld [vmem:[%s215 + $0x10] sm:$0xff]
      %v304 = vld [vmem:[%s215 + $0x18] sm:$0xff]
      %v305 = vld [vmem:[%s215 + $0x20] sm:$0xff]
      %v306 = vld [vmem:[%s215 + $0x28] sm:$0xff]
      %v307 = vld [vmem:[%s215 + $0x30] sm:$0xff]
      %v308 = vld [vmem:[%s215 + $0x38] sm:$0xff]
      %v309 = vld [vmem:[%s215 + $0x40] sm:$0xff]
      %v310 = vld [vmem:[%s215 + $0x48] sm:$0xff]
      %v311 = vld [vmem:[%s215 + $0x50] sm:$0xff]
      %v312 = vld [vmem:[%s215 + $0x58] sm:$0xff]
      %v313 = vld [vmem:[%s215 + $0x60] sm:$0xff]
      %v314 = vld [vmem:[%s215 + $0x68] sm:$0xff]
      %v315 = vld [vmem:[%s215 + $0x70] sm:$0xff]
      %v316 = vld [vmem:[%s215 + $0x78] sm:$0xff]
      %v317 = vadd.f32 %v285, %v301
      %v318 = vadd.f32 %v286, %v302
      %v319 = vadd.f32 %v287, %v303
      %v320 = vadd.f32 %v288, %v304
      %v321 = vadd.f32 %v289, %v305
      %v322 = vadd.f32 %v290, %v306
      %v323 = vadd.f32 %v291, %v307
      %v324 = vadd.f32 %v292, %v308
      %v325 = vadd.f32 %v293, %v309
      %v326 = vadd.f32 %v294, %v310
      %v327 = vadd.f32 %v295, %v311
      %v328 = vadd.f32 %v296, %v312
      %v329 = vadd.f32 %v297, %v313
      %v330 = vadd.f32 %v298, %v314
      %v331 = vadd.f32 %v299, %v315
      %v332 = vadd.f32 %v300, %v316
      %v333 = vmax.f32 %v317, 0.0
      %v334 = vmax.f32 %v318, 0.0
      %v335 = vmax.f32 %v319, 0.0
      %v336 = vmax.f32 %v320, 0.0
      %v337 = vmax.f32 %v321, 0.0
      %v338 = vmax.f32 %v322, 0.0
      %v339 = vmax.f32 %v323, 0.0
      %v340 = vmax.f32 %v324, 0.0
      %v341 = vmax.f32 %v325, 0.0
      %v342 = vmax.f32 %v326, 0.0
      %v343 = vmax.f32 %v327, 0.0
      %v344 = vmax.f32 %v328, 0.0
      %v345 = vmax.f32 %v329, 0.0
      %v346 = vmax.f32 %v330, 0.0
      %v347 = vmax.f32 %v331, 0.0
      %v348 = vmax.f32 %v332, 0.0
      %vm349 = vcmask 130048
      %350 = vst.msk [vmem:[%s221] sm:$0xff] %vm349, %v333
      %351 = vst.msk [vmem:[%s221 + $0x8] sm:$0xff] %vm349, %v334
      %352 = vst.msk [vmem:[%s221 + $0x10] sm:$0xff] %vm349, %v335
      %353 = vst.msk [vmem:[%s221 + $0x18] sm:$0xff] %vm349, %v336
      %354 = vst.msk [vmem:[%s221 + $0x20] sm:$0xff] %vm349, %v337
      %355 = vst.msk [vmem:[%s221 + $0x28] sm:$0xff] %vm349, %v338
      %356 = vst.msk [vmem:[%s221 + $0x30] sm:$0xff] %vm349, %v339
      %357 = vst.msk [vmem:[%s221 + $0x38] sm:$0xff] %vm349, %v340
      %358 = vst.msk [vmem:[%s221 + $0x40] sm:$0xff] %vm349, %v341
      %359 = vst.msk [vmem:[%s221 + $0x48] sm:$0xff] %vm349, %v342
      %360 = vst.msk [vmem:[%s221 + $0x50] sm:$0xff] %vm349, %v343
      %361 = vst.msk [vmem:[%s221 + $0x58] sm:$0xff] %vm349, %v344
      %362 = vst.msk [vmem:[%s221 + $0x60] sm:$0xff] %vm349, %v345
      %363 = vst.msk [vmem:[%s221 + $0x68] sm:$0xff] %vm349, %v346
      %364 = vst.msk [vmem:[%s221 + $0x70] sm:$0xff] %vm349, %v347
      %365 = vst.msk [vmem:[%s221 + $0x78] sm:$0xff] %vm349, %v348
      %s366 = smul.u32 16, %s15
      %p367 = scmp.lt.s32.totalorder %s366, 63
      %s368 = scalar_select %p367, %s366, 63
      %s369 = smul.addr %s368, 8
      %s370 = scalar_lea.vmem %s4, %s369
      // Predicated region
      $region37: #{bottleneck_forward.7} parent=35 // pred_check
        %p371 = pneg %p127
      $region38: #{bottleneck_forward.7} parent=35 // pred_check_branch
        %373 = sbr.rel (%p371) target = $region40
      $region39: #{bottleneck_forward.7} parent=35 // pred_region
        %s374 = smul.u32 16, %s15
      $region40: #{bottleneck_forward.7} parent=35 // pred_fallthru
        _
    $region36: #{bottleneck_forward.7} parent=5 // pred_fallthru
      _
    %p375 = scmp.le.s32.totalorder 2, %s10
    // Predicated region
    $region41: #{bottleneck_forward.7} parent=5 // pred_check
      %p376 = pneg %p375
    $region42: #{bottleneck_forward.7} parent=5 // pred_check_branch
      %378 = sbr.rel (%p376) target = $region44
    $region43: #{bottleneck_forward.7} parent=5 // pred_region
      %s379 = ssub.s32 %s10, 2
      // Predicated region
      $region45: #{bottleneck_forward.7} parent=43 // pred_check
        %p380 = pneg %p133
      $region46: #{bottleneck_forward.7} parent=43 // pred_check_branch
        %382 = sbr.rel (%p380) target = $region48
      $region47: #{bottleneck_forward.7} parent=43 // pred_region
        %s383 = smul.u32 16, %s16
        %p384 = scmp.lt.s32.totalorder %s383, 63
        %s385 = scalar_select %p384, %s383, 63
        %s386 = smul.addr %s385, 8
        %s387 = scalar_lea.vmem %s4, %s386
      $region48: #{bottleneck_forward.7} parent=43 // pred_fallthru
        _
    $region44: #{bottleneck_forward.7} parent=5 // pred_fallthru
      _
  $region6: #{bottleneck_forward.7} parent=0 // loop_footer
    %s14 = sadd.s32 1, %s10
  $region7: #{bottleneck_forward.7} parent=0 // loop_footer_branch
    %9 = sbr.rel target = $region3
  $region8: #{bottleneck_forward.7} parent=0 // loop_exit
    _

// kernel: bottleneck_forward.5
$region0: #{bottleneck_forward.5}
  #allocation0 [shape = 'u32[]', space=smem, size = 0x4, offset = 0x4, fixed_abs, tag = 'smem constant byte address 0x4 - core index']
  #allocation1 [shape = 'u32[144,128]{1,0:T(1,128)}', space=vmem, size = 0x12000, scoped, tag = 'internal scratch']
  #allocation2 [shape = 'f32[18,18,4]{2,1,0:T(8,128)}', space=vmem, size = 0x36000, scoped, tag = 'scratch operand']
  %s0 = inlined_call_operand.vmem [shape: bf16[2,16,16,4], index: 0, kind: input, shape index: {}]
  %s1 = inlined_call_operand.vmem [shape: f32[1,4], index: 1, kind: input, shape index: {}]
  %s2 = inlined_call_operand.vmem [shape: f32[1,4], index: 2, kind: input, shape index: {}]
  %s3 = inlined_call_operand.vmem [shape: bf16[36,4], index: 3, kind: input, shape index: {}]
  %s4 = inlined_call_operand.vmem [shape: bf16[2,16,16,4], index: 4, kind: output, shape index: {0}]
  %s5 = inlined_call_operand.vmem [shape: f32[2,1,4], index: 5, kind: output, shape index: {1}]
  %s6 = inlined_call_operand.vmem [shape: f32[2,1,4], index: 6, kind: output, shape index: {2}]
  %7 = xla_tuple %s4, %s5, %s6
  %s8 = sld [smem:[#allocation0]]
  $region65: #{bottleneck_forward.5} parent=0
    _
  %s10 = ssub.s32 1, %s8
  %s11 = scalar_select 0, %s10, %s8
  loop: start=0, step=1, limit=4
  $region2: #{bottleneck_forward.5} parent=0 // loop_pre_header
    _
  $region3: #{bottleneck_forward.5} parent=0 // loop_header
    %s13 = sphi 0, %s17
    %p14 = scmp.ge.s32.totalorder %s13, 4
    %s23 = sphi 0, %s25
    %s26 = sphi 0, %s23
    %s27 = sphi 0, %s26
    %s43 = sphi 0, %s27
    %s47 = sphi 0, %s47
    %s49 = sphi 0, %s47
    %s50 = sphi 0, %s49
    %s64 = sphi 0, %s50
    %s68 = sphi 0, %s68
    %s70 = sphi 0, %s68
    %s71 = sphi 0, %s70
    %s85 = sphi 0, %s71
    %s89 = sphi 0, %s89
    %s91 = sphi 0, %s89
    %s92 = sphi 0, %s91
    %s106 = sphi 0, %s92
    %s112 = sphi 0, %s114
    %s115 = sphi 0, %s112
    %s116 = sphi 0, %s115
    %s132 = sphi 0, %s116
    %s138 = sphi 0, %s140
    %s141 = sphi 0, %s138
    %s142 = sphi 0, %s141
    %s158 = sphi 0, %s142
    %s164 = sphi 0, %s166
    %s167 = sphi 0, %s164
    %s168 = sphi 0, %s167
    %s184 = sphi 0, %s168
  $region4: #{bottleneck_forward.5} parent=0 // loop_header_branch
    %16 = sbr.rel (%p14) target = $region8
  $region5: #{bottleneck_forward.5} parent=0 // loop_body
    %s18 = ssub.s32 %s13, 1
    %s19 = ssub.s32 %s13, 2
    %s20 = sadd.s32 %s13, 1
    %s21 = ssub.s32 %s13, %s20
    %p22 = scmp.eq.s32.totalorder %s21, 0
    %s24 = sadd.s32 %s23, 1
    %s25 = scalar_select %p22, %s23, %s24
    %p28 = pneg %p22
    %p29 = scmp.eq.s32.totalorder %s13, 1
    %p30 = por %p28, %p29
    %p31 = scmp.ne.s32.totalorder %s23, %s26
    %p32 = scmp.eq.s32.totalorder %s13, 0
    %p33 = por %p31, %p32
    %p34 = scmp.ne.s32.totalorder %s23, %s26
    %p35 = scmp.eq.s32.totalorder %s18, 1
    %p36 = por %p34, %p35
    %p37 = scmp.ne.s32.totalorder %s26, %s27
    %p38 = scmp.eq.s32.totalorder %s18, 0
    %p39 = por %p37, %p38
    %p40 = scmp.ne.s32.totalorder %s26, %s27
    %p41 = scmp.eq.s32.totalorder %s19, 1
    %p42 = por %p40, %p41
    %p44 = scmp.ne.s32.totalorder %s27, %s43
    %p45 = scmp.eq.s32.totalorder %s19, 0
    %p46 = por %p44, %p45
    %s48 = sadd.s32 %s47, 1
    %p51 = scmp.eq.s32.totalorder %s13, 1
    %p52 = scmp.ne.s32.totalorder %s47, %s49
    %p53 = scmp.eq.s32.totalorder %s13, 0
    %p54 = por %p52, %p53
    %p55 = scmp.ne.s32.totalorder %s47, %s49
    %p56 = scmp.eq.s32.totalorder %s18, 1
    %p57 = por %p55, %p56
    %p58 = scmp.ne.s32.totalorder %s49, %s50
    %p59 = scmp.eq.s32.totalorder %s18, 0
    %p60 = por %p58, %p59
    %p61 = scmp.ne.s32.totalorder %s49, %s50
    %p62 = scmp.eq.s32.totalorder %s19, 1
    %p63 = por %p61, %p62
    %p65 = scmp.ne.s32.totalorder %s50, %s64
    %p66 = scmp.eq.s32.totalorder %s19, 0
    %p67 = por %p65, %p66
    %s69 = sadd.s32 %s68, 1
    %p72 = scmp.eq.s32.totalorder %s13, 1
    %p73 = scmp.ne.s32.totalorder %s68, %s70
    %p74 = scmp.eq.s32.totalorder %s13, 0
    %p75 = por %p73, %p74
    %p76 = scmp.ne.s32.totalorder %s68, %s70
    %p77 = scmp.eq.s32.totalorder %s18, 1
    %p78 = por %p76, %p77
    %p79 = scmp.ne.s32.totalorder %s70, %s71
    %p80 = scmp.eq.s32.totalorder %s18, 0
    %p81 = por %p79, %p80
    %p82 = scmp.ne.s32.totalorder %s70, %s71
    %p83 = scmp.eq.s32.totalorder %s19, 1
    %p84 = por %p82, %p83
    %p86 = scmp.ne.s32.totalorder %s71, %s85
    %p87 = scmp.eq.s32.totalorder %s19, 0
    %p88 = por %p86, %p87
    %s90 = sadd.s32 %s89, 1
    %p93 = scmp.eq.s32.totalorder %s13, 1
    %p94 = scmp.ne.s32.totalorder %s89, %s91
    %p95 = scmp.eq.s32.totalorder %s13, 0
    %p96 = por %p94, %p95
    %p97 = scmp.ne.s32.totalorder %s89, %s91
    %p98 = scmp.eq.s32.totalorder %s18, 1
    %p99 = por %p97, %p98
    %p100 = scmp.ne.s32.totalorder %s91, %s92
    %p101 = scmp.eq.s32.totalorder %s18, 0
    %p102 = por %p100, %p101
    %p103 = scmp.ne.s32.totalorder %s91, %s92
    %p104 = scmp.eq.s32.totalorder %s19, 1
    %p105 = por %p103, %p104
    %p107 = scmp.ne.s32.totalorder %s92, %s106
    %p108 = scmp.eq.s32.totalorder %s19, 0
    %p109 = por %p107, %p108
    %s110 = ssub.s32 %s13, %s20
    %p111 = scmp.eq.s32.totalorder %s110, 0
    %s113 = sadd.s32 %s112, 1
    %s114 = scalar_select %p111, %s112, %s113
    %p117 = pneg %p111
    %p118 = scmp.eq.s32.totalorder %s13, 1
    %p119 = por %p117, %p118
    %p120 = scmp.ne.s32.totalorder %s112, %s115
    %p121 = scmp.eq.s32.totalorder %s13, 0
    %p122 = por %p120, %p121
    %p123 = scmp.ne.s32.totalorder %s112, %s115
    %p124 = scmp.eq.s32.totalorder %s18, 1
    %p125 = por %p123, %p124
    %p126 = scmp.ne.s32.totalorder %s115, %s116
    %p127 = scmp.eq.s32.totalorder %s18, 0
    %p128 = por %p126, %p127
    %p129 = scmp.ne.s32.totalorder %s115, %s116
    %p130 = scmp.eq.s32.totalorder %s19, 1
    %p131 = por %p129, %p130
    %p133 = scmp.ne.s32.totalorder %s116, %s132
    %p134 = scmp.eq.s32.totalorder %s19, 0
    %p135 = por %p133, %p134
    %s136 = ssub.s32 %s13, %s20
    %p137 = scmp.eq.s32.totalorder %s136, 0
    %s139 = sadd.s32 %s138, 1
    %s140 = scalar_select %p137, %s138, %s139
    %p143 = pneg %p137
    %p144 = scmp.eq.s32.totalorder %s13, 1
    %p145 = por %p143, %p144
    %p146 = scmp.ne.s32.totalorder %s138, %s141
    %p147 = scmp.eq.s32.totalorder %s13, 0
    %p148 = por %p146, %p147
    %p149 = scmp.ne.s32.totalorder %s138, %s141
    %p150 = scmp.eq.s32.totalorder %s18, 1
    %p151 = por %p149, %p150
    %p152 = scmp.ne.s32.totalorder %s141, %s142
    %p153 = scmp.eq.s32.totalorder %s18, 0
    %p154 = por %p152, %p153
    %p155 = scmp.ne.s32.totalorder %s141, %s142
    %p156 = scmp.eq.s32.totalorder %s19, 1
    %p157 = por %p155, %p156
    %p159 = scmp.ne.s32.totalorder %s142, %s158
    %p160 = scmp.eq.s32.totalorder %s19, 0
    %p161 = por %p159, %p160
    %s162 = ssub.s32 %s13, %s20
    %p163 = scmp.eq.s32.totalorder %s162, 0
    %s165 = sadd.s32 %s164, 1
    %s166 = scalar_select %p163, %s164, %s165
    %p169 = pneg %p163
    %p170 = scmp.eq.s32.totalorder %s13, 1
    %p171 = por %p169, %p170
    %p172 = scmp.ne.s32.totalorder %s164, %s167
    %p173 = scmp.eq.s32.totalorder %s13, 0
    %p174 = por %p172, %p173
    %p175 = scmp.ne.s32.totalorder %s164, %s167
    %p176 = scmp.eq.s32.totalorder %s18, 1
    %p177 = por %p175, %p176
    %p178 = scmp.ne.s32.totalorder %s167, %s168
    %p179 = scmp.eq.s32.totalorder %s18, 0
    %p180 = por %p178, %p179
    %p181 = scmp.ne.s32.totalorder %s167, %s168
    %p182 = scmp.eq.s32.totalorder %s19, 1
    %p183 = por %p181, %p182
    %p185 = scmp.ne.s32.totalorder %s168, %s184
    %p186 = scmp.eq.s32.totalorder %s19, 0
    %p187 = por %p185, %p186
    %p188 = scmp.le.s32.totalorder 1, %s13
    %p189 = scmp.lt.s32.totalorder %s13, 3
    %p190 = pnand %p188, %p189
    %p191 = pneg %p190
    // Predicated region
    $region9: #{bottleneck_forward.5} parent=5 // pred_check
      _
    $region10: #{bottleneck_forward.5} parent=5 // pred_check_branch
      %193 = sbr.rel (%p190) target = $region12
    $region11: #{bottleneck_forward.5} parent=5 // pred_region
      %s194 = ssub.s32 %s13, 1
      // Predicated region
      $region13: #{bottleneck_forward.5} parent=11 // pred_check
        %p195 = pneg %p60
      $region14: #{bottleneck_forward.5} parent=11 // pred_check_branch
        %197 = sbr.rel (%p195) target = $region16
      $region15: #{bottleneck_forward.5} parent=11 // pred_region
        _
      $region16: #{bottleneck_forward.5} parent=11 // pred_fallthru
        _
      // Predicated region
      $region17: #{bottleneck_forward.5} parent=11 // pred_check
        %p198 = pneg %p81
      $region18: #{bottleneck_forward.5} parent=11 // pred_check_branch
        %200 = sbr.rel (%p198) target = $region20
      $region19: #{bottleneck_forward.5} parent=11 // pred_region
        _
      $region20: #{bottleneck_forward.5} parent=11 // pred_fallthru
        _
      // Predicated region
      $region21: #{bottleneck_forward.5} parent=11 // pred_check
        %p201 = pneg %p102
      $region22: #{bottleneck_forward.5} parent=11 // pred_check_branch
        %203 = sbr.rel (%p201) target = $region24
      $region23: #{bottleneck_forward.5} parent=11 // pred_region
        _
      $region24: #{bottleneck_forward.5} parent=11 // pred_fallthru
        _
    $region12: #{bottleneck_forward.5} parent=5 // pred_fallthru
      _
    %p204 = scmp.lt.s32.totalorder %s13, 2
    // Predicated region
    $region25: #{bottleneck_forward.5} parent=5 // pred_check
      %p205 = pneg %p204
    $region26: #{bottleneck_forward.5} parent=5 // pred_check_branch
      %207 = sbr.rel (%p205) target = $region28
    $region27: #{bottleneck_forward.5} parent=5 // pred_region
      // Predicated region
      $region29: #{bottleneck_forward.5} parent=27 // pred_check
        %p208 = pneg %p33
      $region30: #{bottleneck_forward.5} parent=27 // pred_check_branch
        %210 = sbr.rel (%p208) target = $region32
      $region31: #{bottleneck_forward.5} parent=27 // pred_region
        %p211 = scmp.lt.s32.totalorder %s13, 1
        %s212 = scalar_select %p211, %s13, 1
        %s213 = smul.addr %s212, 32
        %s214 = smul.addr %s213, 4
        %s215 = scalar_lea.vmem %s0, %s214
      $region32: #{bottleneck_forward.5} parent=27 // pred_fallthru
        _
    $region28: #{bottleneck_forward.5} parent=5 // pred_fallthru
      _
    %p216 = scmp.le.s32.totalorder 1, %s13
    %p217 = scmp.lt.s32.totalorder %s13, 3
    %p218 = pnand %p216, %p217
    %p219 = pneg %p218
    // Predicated region
    $region33: #{bottleneck_forward.5} parent=5 // pred_check
      _
    $region34: #{bottleneck_forward.5} parent=5 // pred_check_branch
      %221 = sbr.rel (%p218) target = $region36
    $region35: #{bottleneck_forward.5} parent=5 // pred_region
      %s222 = ssub.s32 %s13, 1
      %p223 = scmp.lt.s32.totalorder %s18, 1
      %s224 = scalar_select %p223, %s18, 1
      %s225 = smul.addr %s224, 32
      %s226 = smul.addr %s225, 4
      %s227 = scalar_lea.vmem %s0, %s226
      %p228 = pneg %p39
      %p229 = pneg %p36
      %p230 = pneg %p60
      %p231 = pneg %p57
      %p232 = pneg %p81
      %p233 = pneg %p78
      %p234 = pneg %p102
      %p235 = pneg %p99
      %p236 = pneg %p128
      %p237 = pneg %p125
      %p238 = scmp.lt.s32.totalorder %s18, 1
      %s239 = scalar_select %p238, %s18, 1
      %s240 = smul.addr %s239, 32
      %s241 = smul.addr %s240, 4
      %s242 = scalar_lea.vmem %s4, %s241
      %p243 = pneg %p154
      %p244 = pneg %p151
      %p245 = scmp.lt.s32.totalorder %s18, 1
      %s246 = scalar_select %p245, %s18, 1
      %s247 = scalar_lea.vmem %s5, %s246
      %p248 = pneg %p180
      %p249 = pneg %p177
      %p250 = scmp.lt.s32.totalorder %s18, 1
      %s251 = scalar_select %p250, %s18, 1
      %s252 = scalar_lea.vmem %s6, %s251
      %p253 = scmp.lt.s32.totalorder %s18, 1
      %s254 = scalar_select %p253, %s18, 1
      %s255 = smul.addr %s254, 32
      %s256 = smul.addr %s255, 4
      %s257 = scalar_lea.vmem %s0, %s256
      %p258 = scmp.lt.s32.totalorder %s18, 1
      %s259 = scalar_select %p258, %s18, 1
      %s260 = smul.addr %s259, 32
      %s261 = smul.addr %s260, 4
      %s262 = scalar_lea.vmem %s4, %s261
      %p263 = scmp.lt.s32.totalorder %s18, 1
      %s264 = scalar_select %p263, %s18, 1
      %s265 = scalar_lea.vmem %s5, %s264
      %p266 = scmp.lt.s32.totalorder %s18, 1
      %s267 = scalar_select %p266, %s18, 1
      %s268 = scalar_lea.vmem %s6, %s267
      %vm270 = vcmask 31744
      %271 = vst.msk [vmem:[#allocation2] sm:$0xff] %vm270, 0.0
      %272 = vst.msk [vmem:[#allocation2 + $0x8] sm:$0xff] %vm270, 0.0
      %vm273 = vcmask 25600
      %274 = vst.msk [vmem:[#allocation2 + $0x10] sm:$0x3] %vm273, 0.0
      %s275 = scalar_lea.vmem [#allocation2], 408
      %276 = vst.msk [vmem:[%s275] sm:$0xff] %vm270, 0.0
      %277 = vst.msk [vmem:[%s275 + $0x8] sm:$0xff] %vm270, 0.0
      %278 = vst.msk [vmem:[%s275 + $0x10] sm:$0x3] %vm273, 0.0
      %s279 = scalar_lea.vmem [#allocation2], 24
      %vm280 = vcmask 24576
      %281 = vst.msk [vmem:[%s279] sm:$0x1] %vm280, 0.0
      %282 = vst.msk [vmem:[%s279 + $0x18] sm:$0x1] %vm280, 0.0
      %283 = vst.msk [vmem:[%s279 + $0x30] sm:$0x1] %vm280, 0.0
      %284 = vst.msk [vmem:[%s279 + $0x48] sm:$0x1] %vm280, 0.0
      %285 = vst.msk [vmem:[%s279 + $0x60] sm:$0x1] %vm280, 0.0
      %286 = vst.msk [vmem:[%s279 + $0x78] sm:$0x1] %vm280, 0.0
      %287 = vst.msk [vmem:[%s279 + $0x90] sm:$0x1] %vm280, 0.0
      %288 = vst.msk [vmem:[%s279 + $0xa8] sm:$0x1] %vm280, 0.0
      %289 = vst.msk [vmem:[%s279 + $0xc0] sm:$0x1] %vm280, 0.0
      %290 = vst.msk [vmem:[%s279 + $0xd8] sm:$0x1] %vm280, 0.0
      %291 = vst.msk [vmem:[%s279 + $0xf0] sm:$0x1] %vm280, 0.0
      %292 = vst.msk [vmem:[%s279 + $0x108] sm:$0x1] %vm280, 0.0
      %293 = vst.msk [vmem:[%s279 + $0x120] sm:$0x1] %vm280, 0.0
      %294 = vst.msk [vmem:[%s279 + $0x138] sm:$0x1] %vm280, 0.0
      %295 = vst.msk [vmem:[%s279 + $0x150] sm:$0x1] %vm280, 0.0
      %296 = vst.msk [vmem:[%s279 + $0x168] sm:$0x1] %vm280, 0.0
      %297 = vst.msk [vmem:[%s279 + $0x11] sm:$0x1] %vm280, 0.0
      %298 = vst.msk [vmem:[%s279 + $0x29] sm:$0x1] %vm280, 0.0
      %299 = vst.msk [vmem:[%s279 + $0x41] sm:$0x1] %vm280, 0.0
      %300 = vst.msk [vmem:[%s279 + $0x59] sm:$0x1] %vm280, 0.0
      %301 = vst.msk [vmem:[%s279 + $0x71] sm:$0x1] %vm280, 0.0
      %302 = vst.msk [vmem:[%s279 + $0x89] sm:$0x1] %vm280, 0.0
      %303 = vst.msk [vmem:[%s279 + $0xa1] sm:$0x1] %vm280, 0.0
      %304 = vst.msk [vmem:[%s279 + $0xb9] sm:$0x1] %vm280, 0.0
      %305 = vst.msk [vmem:[%s279 + $0xd1] sm:$0x1] %vm280, 0.0
      %306 = vst.msk [vmem:[%s279 + $0xe9] sm:$0x1] %vm280, 0.0
      %307 = vst.msk [vmem:[%s279 + $0x101] sm:$0x1] %vm280, 0.0
      %308 = vst.msk [vmem:[%s279 + $0x119] sm:$0x1] %vm280, 0.0
      %309 = vst.msk [vmem:[%s279 + $0x131] sm:$0x1] %vm280, 0.0
      %310 = vst.msk [vmem:[%s279 + $0x149] sm:$0x1] %vm280, 0.0
      %311 = vst.msk [vmem:[%s279 + $0x161] sm:$0x1] %vm280, 0.0
      %312 = vst.msk [vmem:[%s279 + $0x179] sm:$0x1] %vm280, 0.0
      %v313 = vld [vmem:[%s257] sm:$0xf]
      %v314 = vld [vmem:[%s257 + $0x4] sm:$0xf]
      %v315 = vld [vmem:[%s257 + $0x8] sm:$0xf]
      %v316 = vld [vmem:[%s257 + $0xc] sm:$0xf]
      %v317 = vld [vmem:[%s257 + $0x10] sm:$0xf]
      %v318 = vld [vmem:[%s257 + $0x14] sm:$0xf]
      %v319 = vld [vmem:[%s257 + $0x18] sm:$0xf]
      %v320 = vld [vmem:[%s257 + $0x1c] sm:$0xf]
      %v321 = vld [vmem:[%s257 + $0x20] sm:$0xf]
      %v322 = vld [vmem:[%s257 + $0x24] sm:$0xf]
      %v323 = vld [vmem:[%s257 + $0x28] sm:$0xf]
      %v324 = vld [vmem:[%s257 + $0x2c] sm:$0xf]
      %v325 = vld [vmem:[%s257 + $0x30] sm:$0xf]
      %v326 = vld [vmem:[%s257 + $0x34] sm:$0xf]
      %v327 = vld [vmem:[%s257 + $0x38] sm:$0xf]
      %v328 = vld [vmem:[%s257 + $0x3c] sm:$0xf]
      %v329 = vld [vmem:[%s257 + $0x40] sm:$0xf]
      %v330 = vld [vmem:[%s257 + $0x44] sm:$0xf]
      %v331 = vld [vmem:[%s257 + $0x48] sm:$0xf]
      %v332 = vld [vmem:[%s257 + $0x4c] sm:$0xf]
      %v333 = vld [vmem:[%s257 + $0x50] sm:$0xf]
      %v334 = vld [vmem:[%s257 + $0x54] sm:$0xf]
      %v335 = vld [vmem:[%s257 + $0x58] sm:$0xf]
      %v336 = vld [vmem:[%s257 + $0x5c] sm:$0xf]
      %v337 = vld [vmem:[%s257 + $0x60] sm:$0xf]
      %v338 = vld [vmem:[%s257 + $0x64] sm:$0xf]
      %v339 = vld [vmem:[%s257 + $0x68] sm:$0xf]
      %v340 = vld [vmem:[%s257 + $0x6c] sm:$0xf]
      %v341 = vld [vmem:[%s257 + $0x70] sm:$0xf]
      %v342 = vld [vmem:[%s257 + $0x74] sm:$0xf]
      %v343 = vld [vmem:[%s257 + $0x78] sm:$0xf]
      %v344 = vld [vmem:[%s257 + $0x7c] sm:$0xf]
      %v345 = vunpack.c.l.bf16 %v313
      %v346 = vunpack.c.l.bf16 %v314
      %v347 = vunpack.c.l.bf16 %v315
      %v348 = vunpack.c.l.bf16 %v316
      %v349 = vunpack.c.l.bf16 %v317
      %v350 = vunpack.c.l.bf16 %v318
      %v351 = vunpack.c.l.bf16 %v319
      %v352 = vunpack.c.l.bf16 %v320
      %v353 = vunpack.c.l.bf16 %v321
      %v354 = vunpack.c.l.bf16 %v322
      %v355 = vunpack.c.l.bf16 %v323
      %v356 = vunpack.c.l.bf16 %v324
      %v357 = vunpack.c.l.bf16 %v325
      %v358 = vunpack.c.l.bf16 %v326
      %v359 = vunpack.c.l.bf16 %v327
      %v360 = vunpack.c.l.bf16 %v328
      %v361 = vunpack.c.l.bf16 %v329
      %v362 = vunpack.c.l.bf16 %v330
      %v363 = vunpack.c.l.bf16 %v331
      %v364 = vunpack.c.l.bf16 %v332
      %v365 = vunpack.c.l.bf16 %v333
      %v366 = vunpack.c.l.bf16 %v334
      %v367 = vunpack.c.l.bf16 %v335
      %v368 = vunpack.c.l.bf16 %v336
      %v369 = vunpack.c.l.bf16 %v337
      %v370 = vunpack.c.l.bf16 %v338
      %v371 = vunpack.c.l.bf16 %v339
      %v372 = vunpack.c.l.bf16 %v340
      %v373 = vunpack.c.l.bf16 %v341
      %v374 = vunpack.c.l.bf16 %v342
      %v375 = vunpack.c.l.bf16 %v343
      %v376 = vunpack.c.l.bf16 %v344
      %v377 = vld [vmem:[%s1] sm:$0x1]
      %v379 = vlaneseq
      %v380 = vshrl.u32 %v379, 7
      %v381 = vsub.s32 0, %v380
      %v382 = vrot.slane %v377, %v381
      %v384 = vmul.f32 %v345, %v382
      %v385 = vmul.f32 %v346, %v382
      %v386 = vmul.f32 %v347, %v382
      %v387 = vmul.f32 %v348, %v382
      %v388 = vmul.f32 %v349, %v382
      %v389 = vmul.f32 %v350, %v382
      %v390 = vmul.f32 %v351, %v382
      %v391 = vmul.f32 %v352, %v382
      %v392 = vmul.f32 %v353, %v382
      %v393 = vmul.f32 %v354, %v382
      %v394 = vmul.f32 %v355, %v382
      %v395 = vmul.f32 %v356, %v382
      %v396 = vmul.f32 %v357, %v382
      %v397 = vmul.f32 %v358, %v382
      %v398 = vmul.f32 %v359, %v382
      %v399 = vmul.f32 %v360, %v382
      %v400 = vmul.f32 %v361, %v382
      %v401 = vmul.f32 %v362, %v382
      %v402 = vmul.f32 %v363, %v382
      %v403 = vmul.f32 %v364, %v382
      %v404 = vmul.f32 %v365, %v382
      %v405 = vmul.f32 %v366, %v382
      %v406 = vmul.f32 %v367, %v382
      %v407 = vmul.f32 %v368, %v382
      %v408 = vmul.f32 %v369, %v382
      %v409 = vmul.f32 %v370, %v382
      %v410 = vmul.f32 %v371, %v382
      %v411 = vmul.f32 %v372, %v382
      %v412 = vmul.f32 %v373, %v382
      %v413 = vmul.f32 %v374, %v382
      %v414 = vmul.f32 %v375, %v382
      %v415 = vmul.f32 %v376, %v382
      %v416 = vld [vmem:[%s2] sm:$0x1]
      %v418 = vlaneseq
      %v419 = vshrl.u32 %v418, 7
      %v420 = vsub.s32 0, %v419
      %v421 = vrot.slane %v416, %v420
      %v423 = vadd.f32 %v384, %v421
      %v424 = vadd.f32 %v385, %v421
      %v425 = vadd.f32 %v386, %v421
      %v426 = vadd.f32 %v387, %v421
      %v427 = vadd.f32 %v388, %v421
      %v428 = vadd.f32 %v389, %v421
      %v429 = vadd.f32 %v390, %v421
      %v430 = vadd.f32 %v391, %v421
      %v431 = vadd.f32 %v392, %v421
      %v432 = vadd.f32 %v393, %v421
      %v433 = vadd.f32 %v394, %v421
      %v434 = vadd.f32 %v395, %v421
      %v435 = vadd.f32 %v396, %v421
      %v436 = vadd.f32 %v397, %v421
      %v437 = vadd.f32 %v398, %v421
      %v438 = vadd.f32 %v399, %v421
      %v439 = vadd.f32 %v400, %v421
      %v440 = vadd.f32 %v401, %v421
      %v441 = vadd.f32 %v402, %v421
      %v442 = vadd.f32 %v403, %v421
      %v443 = vadd.f32 %v404, %v421
      %v444 = vadd.f32 %v405, %v421
      %v445 = vadd.f32 %v406, %v421
      %v446 = vadd.f32 %v407, %v421
      %v447 = vadd.f32 %v408, %v421
      %v448 = vadd.f32 %v409, %v421
      %v449 = vadd.f32 %v410, %v421
      %v450 = vadd.f32 %v411, %v421
      %v451 = vadd.f32 %v412, %v421
      %v452 = vadd.f32 %v413, %v421
      %v453 = vadd.f32 %v414, %v421
      %v454 = vadd.f32 %v415, %v421
      %v455 = vmax.f32 %v423, 0.0
      %v456 = vmax.f32 %v424, 0.0
      %v457 = vmax.f32 %v425, 0.0
      %v458 = vmax.f32 %v426, 0.0
      %v459 = vmax.f32 %v427, 0.0
      %v460 = vmax.f32 %v428, 0.0
      %v461 = vmax.f32 %v429, 0.0
      %v462 = vmax.f32 %v430, 0.0
      %v463 = vmax.f32 %v431, 0.0
      %v464 = vmax.f32 %v432, 0.0
      %v465 = vmax.f32 %v433, 0.0
      %v466 = vmax.f32 %v434, 0.0
      %v467 = vmax.f32 %v435, 0.0
      %v468 = vmax.f32 %v436, 0.0
      %v469 = vmax.f32 %v437, 0.0
      %v470 = vmax.f32 %v438, 0.0
      %v471 = vmax.f32 %v439, 0.0
      %v472 = vmax.f32 %v440, 0.0
      %v473 = vmax.f32 %v441, 0.0
      %v474 = vmax.f32 %v442, 0.0
      %v475 = vmax.f32 %v443, 0.0
      %v476 = vmax.f32 %v444, 0.0
      %v477 = vmax.f32 %v445, 0.0
      %v478 = vmax.f32 %v446, 0.0
      %v479 = vmax.f32 %v447, 0.0
      %v480 = vmax.f32 %v448, 0.0
      %v481 = vmax.f32 %v449, 0.0
      %v482 = vmax.f32 %v450, 0.0
      %v483 = vmax.f32 %v451, 0.0
      %v484 = vmax.f32 %v452, 0.0
      %v485 = vmax.f32 %v453, 0.0
      %v486 = vmax.f32 %v454, 0.0
      %487 = vst.msk [vmem:[%s279 + $0x1] sm:$0xff] %vm270, %v455
      %488 = vst.msk [vmem:[%s279 + $0x9] sm:$0xff] %vm270, %v456
      %489 = vst.msk [vmem:[%s279 + $0x19] sm:$0xff] %vm270, %v457
      %490 = vst.msk [vmem:[%s279 + $0x21] sm:$0xff] %vm270, %v458
      %491 = vst.msk [vmem:[%s279 + $0x31] sm:$0xff] %vm270, %v459
      %492 = vst.msk [vmem:[%s279 + $0x39] sm:$0xff] %vm270, %v460
      %493 = vst.msk [vmem:[%s279 + $0x49] sm:$0xff] %vm270, %v461
      %494 = vst.msk [vmem:[%s279 + $0x51] sm:$0xff] %vm270, %v462
      %495 = vst.msk [vmem:[%s279 + $0x61] sm:$0xff] %vm270, %v463
      %496 = vst.msk [vmem:[%s279 + $0x69] sm:$0xff] %vm270, %v464
      %497 = vst.msk [vmem:[%s279 + $0x79] sm:$0xff] %vm270, %v465
      %498 = vst.msk [vmem:[%s279 + $0x81] sm:$0xff] %vm270, %v466
      %499 = vst.msk [vmem:[%s279 + $0x91] sm:$0xff] %vm270, %v467
      %500 = vst.msk [vmem:[%s279 + $0x99] sm:$0xff] %vm270, %v468
      %501 = vst.msk [vmem:[%s279 + $0xa9] sm:$0xff] %vm270, %v469
      %502 = vst.msk [vmem:[%s279 + $0xb1] sm:$0xff] %vm270, %v470
      %503 = vst.msk [vmem:[%s279 + $0xc1] sm:$0xff] %vm270, %v471
      %504 = vst.msk [vmem:[%s279 + $0xc9] sm:$0xff] %vm270, %v472
      %505 = vst.msk [vmem:[%s279 + $0xd9] sm:$0xff] %vm270, %v473
      %506 = vst.msk [vmem:[%s279 + $0xe1] sm:$0xff] %vm270, %v474
      %507 = vst.msk [vmem:[%s279 + $0xf1] sm:$0xff] %vm270, %v475
      %508 = vst.msk [vmem:[%s279 + $0xf9] sm:$0xff] %vm270, %v476
      %509 = vst.msk [vmem:[%s279 + $0x109] sm:$0xff] %vm270, %v477
      %510 = vst.msk [vmem:[%s279 + $0x111] sm:$0xff] %vm270, %v478
      %511 = vst.msk [vmem:[%s279 + $0x121] sm:$0xff] %vm270, %v479
      %512 = vst.msk [vmem:[%s279 + $0x129] sm:$0xff] %vm270, %v480
      %513 = vst.msk [vmem:[%s279 + $0x139] sm:$0xff] %vm270, %v481
      %514 = vst.msk [vmem:[%s279 + $0x141] sm:$0xff] %vm270, %v482
      %515 = vst.msk [vmem:[%s279 + $0x151] sm:$0xff] %vm270, %v483
      %516 = vst.msk [vmem:[%s279 + $0x159] sm:$0xff] %vm270, %v484
      %517 = vst.msk [vmem:[%s279 + $0x169] sm:$0xff] %vm270, %v485
      %518 = vst.msk [vmem:[%s279 + $0x171] sm:$0xff] %vm270, %v486
      %v519 = vld [vmem:[#allocation2] sm:$0xff]
      %v520 = vld [vmem:[#allocation2 + $0x8] sm:$0xff]
      %v521 = vld [vmem:[#allocation2 + $0x18] sm:$0xff]
      %v522 = vld [vmem:[#allocation2 + $0x20] sm:$0xff]
      %v523 = vld [vmem:[#allocation2 + $0x30] sm:$0xff]
      %v524 = vld [vmem:[#allocation2 + $0x38] sm:$0xff]
      %v525 = vld [vmem:[#allocation2 + $0x48] sm:$0xff]
      %v526 = vld [vmem:[#allocation2 + $0x50] sm:$0xff]
      %v527 = vld [vmem:[#allocation2 + $0x60] sm:$0xff]
      %v528 = vld [vmem:[#allocation2 + $0x68] sm:$0xff]
      %v529 = vld [vmem:[#allocation2 + $0x78] sm:$0xff]
      %v530 = vld [vmem:[#allocation2 + $0x80] sm:$0xff]
      %v531 = vld [vmem:[#allocation2 + $0x90] sm:$0xff]
      %v532 = vld [vmem:[#allocation2 + $0x98] sm:$0xff]
      %v533 = vld [vmem:[#allocation2 + $0xa8] sm:$0xff]
      %v534 = vld [vmem:[#allocation2 + $0xb0] sm:$0xff]
      %v535 = vld [vmem:[#allocation2 + $0xc0] sm:$0xff]
      %v536 = vld [vmem:[#allocation2 + $0xc8] sm:$0xff]
      %v537 = vld [vmem:[#allocation2 + $0xd8] sm:$0xff]
      %v538 = vld [vmem:[#allocation2 + $0xe0] sm:$0xff]
      %v539 = vld [vmem:[#allocation2 + $0xf0] sm:$0xff]
      %v540 = vld [vmem:[#allocation2 + $0xf8] sm:$0xff]
      %v541 = vld [vmem:[#allocation2 + $0x108] sm:$0xff]
      %v542 = vld [vmem:[#allocation2 + $0x110] sm:$0xff]
      %v543 = vld [vmem:[#allocation2 + $0x120] sm:$0xff]
      %v544 = vld [vmem:[#allocation2 + $0x128] sm:$0xff]
      %v545 = vld [vmem:[#allocation2 + $0x138] sm:$0xff]
      %v546 = vld [vmem:[#allocation2 + $0x140] sm:$0xff]
      %v547 = vld [vmem:[#allocation2 + $0x150] sm:$0xff]
      %v548 = vld [vmem:[#allocation2 + $0x158] sm:$0xff]
      %v549 = vld [vmem:[#allocation2 + $0x168] sm:$0xff]
      %v550 = vld [vmem:[#allocation2 + $0x170] sm:$0xff]
      %v551 = vld [vmem:[#allocation2 + $0x180] sm:$0xff]
      %v552 = vld [vmem:[#allocation2 + $0x188] sm:$0xff]
      %v553 = vld [vmem:[#allocation2 + $0x198] sm:$0xff]
      %v554 = vld [vmem:[#allocation2 + $0x1a0] sm:$0xff]
      %v555 = vpack.c.bf16 %v520, %v519
      %v556 = vpack.c.bf16 %v522, %v521
      %v557 = vpack.c.bf16 %v524, %v523
      %v558 = vpack.c.bf16 %v526, %v525
      %v559 = vpack.c.bf16 %v528, %v527
      %v560 = vpack.c.bf16 %v530, %v529
      %v561 = vpack.c.bf16 %v532, %v531
      %v562 = vpack.c.bf16 %v534, %v533
      %v563 = vpack.c.bf16 %v536, %v535
      %v564 = vpack.c.bf16 %v538, %v537
      %v565 = vpack.c.bf16 %v540, %v539
      %v566 = vpack.c.bf16 %v542, %v541
      %v567 = vpack.c.bf16 %v544, %v543
      %v568 = vpack.c.bf16 %v546, %v545
      %v569 = vpack.c.bf16 %v548, %v547
      %v570 = vpack.c.bf16 %v550, %v549
      %v571 = vpack.c.bf16 %v552, %v551
      %v572 = vpack.c.bf16 %v554, %v553
      %v573 = vld [vmem:[#allocation2 + $0x1] sm:$0xff]
      %v574 = vld [vmem:[#allocation2 + $0x9] sm:$0xff]
      %v575 = vld [vmem:[#allocation2 + $0x19] sm:$0xff]
      %v576 = vld [vmem:[#allocation2 + $0x21] sm:$0xff]
      %v577 = vld [vmem:[#allocation2 + $0x31] sm:$0xff]
      %v578 = vld [vmem:[#allocation2 + $0x39] sm:$0xff]
      %v579 = vld [vmem:[#allocation2 + $0x49] sm:$0xff]
      %v580 = vld [vmem:[#allocation2 + $0x51] sm:$0xff]
      %v581 = vld [vmem:[#allocation2 + $0x61] sm:$0xff]
      %v582 = vld [vmem:[#allocation2 + $0x69] sm:$0xff]
      %v583 = vld [vmem:[#allocation2 + $0x79] sm:$0xff]
      %v584 = vld [vmem:[#allocation2 + $0x81] sm:$0xff]
      %v585 = vld [vmem:[#allocation2 + $0x91] sm:$0xff]
      %v586 = vld [vmem:[#allocation2 + $0x99] sm:$0xff]
      %v587 = vld [vmem:[#allocation2 + $0xa9] sm:$0xff]
      %v588 = vld [vmem:[#allocation2 + $0xb1] sm:$0xff]
      %v589 = vld [vmem:[#allocation2 + $0xc1] sm:$0xff]
      %v590 = vld [vmem:[#allocation2 + $0xc9] sm:$0xff]
      %v591 = vld [vmem:[#allocation2 + $0xd9] sm:$0xff]
      %v592 = vld [vmem:[#allocation2 + $0xe1] sm:$0xff]
      %v593 = vld [vmem:[#allocation2 + $0xf1] sm:$0xff]
      %v594 = vld [vmem:[#allocation2 + $0xf9] sm:$0xff]
      %v595 = vld [vmem:[#allocation2 + $0x109] sm:$0xff]
      %v596 = vld [vmem:[#allocation2 + $0x111] sm:$0xff]
      %v597 = vld [vmem:[#allocation2 + $0x121] sm:$0xff]
      %v598 = vld [vmem:[#allocation2 + $0x129] sm:$0xff]
      %v599 = vld [vmem:[#allocation2 + $0x139] sm:$0xff]
      %v600 = vld [vmem:[#allocation2 + $0x141] sm:$0xff]
      %v601 = vld [vmem:[#allocation2 + $0x151] sm:$0xff]
      %v602 = vld [vmem:[#allocation2 + $0x159] sm:$0xff]
      %v603 = vld [vmem:[#allocation2 + $0x169] sm:$0xff]
      %v604 = vld [vmem:[#allocation2 + $0x171] sm:$0xff]
      %v605 = vld [vmem:[#allocation2 + $0x181] sm:$0xff]
      %v606 = vld [vmem:[#allocation2 + $0x189] sm:$0xff]
      %v607 = vld [vmem:[#allocation2 + $0x199] sm:$0xff]
      %v608 = vld [vmem:[#allocation2 + $0x1a1] sm:$0xff]
      %v609 = vpack.c.bf16 %v574, %v573
      %v610 = vpack.c.bf16 %v576, %v575
      %v611 = vpack.c.bf16 %v578, %v577
      %v612 = vpack.c.bf16 %v580, %v579
      %v613 = vpack.c.bf16 %v582, %v581
      %v614 = vpack.c.bf16 %v584, %v583
      %v615 = vpack.c.bf16 %v586, %v585
      %v616 = vpack.c.bf16 %v588, %v587
      %v617 = vpack.c.bf16 %v590, %v589
      %v618 = vpack.c.bf16 %v592, %v591
      %v619 = vpack.c.bf16 %v594, %v593
      %v620 = vpack.c.bf16 %v596, %v595
      %v621 = vpack.c.bf16 %v598, %v597
      %v622 = vpack.c.bf16 %v600, %v599
      %v623 = vpack.c.bf16 %v602, %v601
      %v624 = vpack.c.bf16 %v604, %v603
      %v625 = vpack.c.bf16 %v606, %v605
      %v626 = vpack.c.bf16 %v608, %v607
      %v627 = vld [vmem:[#allocation2 + $0x2] sm:$0xff]
      %v628 = vld [vmem:[#allocation2 + $0xa] sm:$0xff]
      %v629 = vld [vmem:[#allocation2 + $0x1a] sm:$0xff]
      %v630 = vld [vmem:[#allocation2 + $0x22] sm:$0xff]
      %v631 = vld [vmem:[#allocation2 + $0x32] sm:$0xff]
      %v632 = vld [vmem:[#allocation2 + $0x3a] sm:$0xff]
      %v633 = vld [vmem:[#allocation2 + $0x4a] sm:$0xff]
      %v634 = vld [vmem:[#allocation2 + $0x52] sm:$0xff]
      %v635 = vld [vmem:[#allocation2 + $0x62] sm:$0xff]
      %v636 = vld [vmem:[#allocation2 + $0x6a] sm:$0xff]
      %v637 = vld [vmem:[#allocation2 + $0x7a] sm:$0xff]
      %v638 = vld [vmem:[#allocation2 + $0x82] sm:$0xff]
      %v639 = vld [vmem:[#allocation2 + $0x92] sm:$0xff]
      %v640 = vld [vmem:[#allocation2 + $0x9a] sm:$0xff]
      %v641 = vld [vmem:[#allocation2 + $0xaa] sm:$0xff]
      %v642 = vld [vmem:[#allocation2 + $0xb2] sm:$0xff]
      %v643 = vld [vmem:[#allocation2 + $0xc2] sm:$0xff]
      %v644 = vld [vmem:[#allocation2 + $0xca] sm:$0xff]
      %v645 = vld [vmem:[#allocation2 + $0xda] sm:$0xff]
      %v646 = vld [vmem:[#allocation2 + $0xe2] sm:$0xff]
      %v647 = vld [vmem:[#allocation2 + $0xf2] sm:$0xff]
      %v648 = vld [vmem:[#allocation2 + $0xfa] sm:$0xff]
      %v649 = vld [vmem:[#allocation2 + $0x10a] sm:$0xff]
      %v650 = vld [vmem:[#allocation2 + $0x112] sm:$0xff]
      %v651 = vld [vmem:[#allocation2 + $0x122] sm:$0xff]
      %v652 = vld [vmem:[#allocation2 + $0x12a] sm:$0xff]
      %v653 = vld [vmem:[#allocation2 + $0x13a] sm:$0xff]
      %v654 = vld [vmem:[#allocation2 + $0x142] sm:$0xff]
      %v655 = vld [vmem:[#allocation2 + $0x152] sm:$0xff]
      %v656 = vld [vmem:[#allocation2 + $0x15a] sm:$0xff]
      %v657 = vld [vmem:[#allocation2 + $0x16a] sm:$0xff]
      %v658 = vld [vmem:[#allocation2 + $0x172] sm:$0xff]
      %v659 = vld [vmem:[#allocation2 + $0x182] sm:$0xff]
      %v660 = vld [vmem:[#allocation2 + $0x18a] sm:$0xff]
      %v661 = vld [vmem:[#allocation2 + $0x19a] sm:$0xff]
      %v662 = vld [vmem:[#allocation2 + $0x1a2] sm:$0xff]
      %v663 = vpack.c.bf16 %v628, %v627
      %v664 = vpack.c.bf16 %v630, %v629
      %v665 = vpack.c.bf16 %v632, %v631
      %v666 = vpack.c.bf16 %v634, %v633
      %v667 = vpack.c.bf16 %v636, %v635
      %v668 = vpack.c.bf16 %v638, %v637
      %v669 = vpack.c.bf16 %v640, %v639
      %v670 = vpack.c.bf16 %v642, %v641
      %v671 = vpack.c.bf16 %v644, %v643
      %v672 = vpack.c.bf16 %v646, %v645
      %v673 = vpack.c.bf16 %v648, %v647
      %v674 = vpack.c.bf16 %v650, %v649
      %v675 = vpack.c.bf16 %v652, %v651
      %v676 = vpack.c.bf16 %v654, %v653
      %v677 = vpack.c.bf16 %v656, %v655
      %v678 = vpack.c.bf16 %v658, %v657
      %v679 = vpack.c.bf16 %v660, %v659
      %v680 = vpack.c.bf16 %v662, %v661
      %697 = vrot.lane.b32.xlu0 %v609, 4
      %v698 = vpop.permute.xlu0 %697
      %699 = vrot.lane.b32.xlu0 %v610, 4
      %v700 = vpop.permute.xlu0 %699
      %701 = vrot.lane.b32.xlu0 %v611, 4
      %v702 = vpop.permute.xlu0 %701
      %703 = vrot.lane.b32.xlu0 %v612, 4
      %v704 = vpop.permute.xlu0 %703
      %705 = vrot.lane.b32.xlu0 %v613, 4
      %v706 = vpop.permute.xlu0 %705
      %707 = vrot.lane.b32.xlu0 %v614, 4
      %v708 = vpop.permute.xlu0 %707
      %709 = vrot.lane.b32.xlu0 %v615, 4
      %v710 = vpop.permute.xlu0 %709
      %711 = vrot.lane.b32.xlu0 %v616, 4
      %v712 = vpop.permute.xlu0 %711
      %713 = vrot.lane.b32.xlu0 %v617, 4
      %v714 = vpop.permute.xlu0 %713
      %715 = vrot.lane.b32.xlu0 %v618, 4
      %v716 = vpop.permute.xlu0 %715
      %717 = vrot.lane.b32.xlu0 %v619, 4
      %v718 = vpop.permute.xlu0 %717
      %719 = vrot.lane.b32.xlu0 %v620, 4
      %v720 = vpop.permute.xlu0 %719
      %721 = vrot.lane.b32.xlu0 %v621, 4
      %v722 = vpop.permute.xlu0 %721
      %723 = vrot.lane.b32.xlu0 %v622, 4
      %v724 = vpop.permute.xlu0 %723
      %725 = vrot.lane.b32.xlu0 %v623, 4
      %v726 = vpop.permute.xlu0 %725
      %727 = vrot.lane.b32.xlu0 %v624, 4
      %v728 = vpop.permute.xlu0 %727
      %745 = vrot.lane.b32.xlu0 %v663, 8
      %v746 = vpop.permute.xlu0 %745
      %747 = vrot.lane.b32.xlu0 %v664, 8
      %v748 = vpop.permute.xlu0 %747
      %749 = vrot.lane.b32.xlu0 %v665, 8
      %v750 = vpop.permute.xlu0 %749
      %751 = vrot.lane.b32.xlu0 %v666, 8
      %v752 = vpop.permute.xlu0 %751
      %753 = vrot.lane.b32.xlu0 %v667, 8
      %v754 = vpop.permute.xlu0 %753
      %755 = vrot.lane.b32.xlu0 %v668, 8
      %v756 = vpop.permute.xlu0 %755
      %757 = vrot.lane.b32.xlu0 %v669, 8
      %v758 = vpop.permute.xlu0 %757
      %759 = vrot.lane.b32.xlu0 %v670, 8
      %v760 = vpop.permute.xlu0 %759
      %761 = vrot.lane.b32.xlu0 %v671, 8
      %v762 = vpop.permute.xlu0 %761
      %763 = vrot.lane.b32.xlu0 %v672, 8
      %v764 = vpop.permute.xlu0 %763
      %765 = vrot.lane.b32.xlu0 %v673, 8
      %v766 = vpop.permute.xlu0 %765
      %767 = vrot.lane.b32.xlu0 %v674, 8
      %v768 = vpop.permute.xlu0 %767
      %769 = vrot.lane.b32.xlu0 %v675, 8
      %v770 = vpop.permute.xlu0 %769
      %771 = vrot.lane.b32.xlu0 %v676, 8
      %v772 = vpop.permute.xlu0 %771
      %773 = vrot.lane.b32.xlu0 %v677, 8
      %v774 = vpop.permute.xlu0 %773
      %775 = vrot.lane.b32.xlu0 %v678, 8
      %v776 = vpop.permute.xlu0 %775
      %793 = vrot.lane.b32.xlu0 %v556, 12
      %v794 = vpop.permute.xlu0 %793
      %795 = vrot.lane.b32.xlu0 %v557, 12
      %v796 = vpop.permute.xlu0 %795
      %797 = vrot.lane.b32.xlu0 %v558, 12
      %v798 = vpop.permute.xlu0 %797
      %799 = vrot.lane.b32.xlu0 %v559, 12
      %v800 = vpop.permute.xlu0 %799
      %801 = vrot.lane.b32.xlu0 %v560, 12
      %v802 = vpop.permute.xlu0 %801
      %803 = vrot.lane.b32.xlu0 %v561, 12
      %v804 = vpop.permute.xlu0 %803
      %805 = vrot.lane.b32.xlu0 %v562, 12
      %v806 = vpop.permute.xlu0 %805
      %807 = vrot.lane.b32.xlu0 %v563, 12
      %v808 = vpop.permute.xlu0 %807
      %809 = vrot.lane.b32.xlu0 %v564, 12
      %v810 = vpop.permute.xlu0 %809
      %811 = vrot.lane.b32.xlu0 %v565, 12
      %v812 = vpop.permute.xlu0 %811
      %813 = vrot.lane.b32.xlu0 %v566, 12
      %v814 = vpop.permute.xlu0 %813
      %815 = vrot.lane.b32.xlu0 %v567, 12
      %v816 = vpop.permute.xlu0 %815
      %817 = vrot.lane.b32.xlu0 %v568, 12
      %v818 = vpop.permute.xlu0 %817
      %819 = vrot.lane.b32.xlu0 %v569, 12
      %v820 = vpop.permute.xlu0 %819
      %821 = vrot.lane.b32.xlu0 %v570, 12
      %v822 = vpop.permute.xlu0 %821
      %823 = vrot.lane.b32.xlu0 %v571, 12
      %v824 = vpop.permute.xlu0 %823
      %826 = vrot.lane.b32.xlu0 %v610, 16
      %v827 = vpop.permute.xlu0 %826
      %828 = vrot.lane.b32.xlu0 %v611, 16
      %v829 = vpop.permute.xlu0 %828
      %830 = vrot.lane.b32.xlu0 %v612, 16
      %v831 = vpop.permute.xlu0 %830
      %832 = vrot.lane.b32.xlu0 %v613, 16
      %v833 = vpop.permute.xlu0 %832
      %834 = vrot.lane.b32.xlu0 %v614, 16
      %v835 = vpop.permute.xlu0 %834
      %836 = vrot.lane.b32.xlu0 %v615, 16
      %v837 = vpop.permute.xlu0 %836
      %838 = vrot.lane.b32.xlu0 %v616, 16
      %v839 = vpop.permute.xlu0 %838
      %840 = vrot.lane.b32.xlu0 %v617, 16
      %v841 = vpop.permute.xlu0 %840
      %842 = vrot.lane.b32.xlu0 %v618, 16
      %v843 = vpop.permute.xlu0 %842
      %844 = vrot.lane.b32.xlu0 %v619, 16
      %v845 = vpop.permute.xlu0 %844
      %846 = vrot.lane.b32.xlu0 %v620, 16
      %v847 = vpop.permute.xlu0 %846
      %848 = vrot.lane.b32.xlu0 %v621, 16
      %v849 = vpop.permute.xlu0 %848
      %850 = vrot.lane.b32.xlu0 %v622, 16
      %v851 = vpop.permute.xlu0 %850
      %852 = vrot.lane.b32.xlu0 %v623, 16
      %v853 = vpop.permute.xlu0 %852
      %854 = vrot.lane.b32.xlu0 %v624, 16
      %v855 = vpop.permute.xlu0 %854
      %856 = vrot.lane.b32.xlu0 %v625, 16
      %v857 = vpop.permute.xlu0 %856
      %859 = vrot.lane.b32.xlu0 %v664, 20
      %v860 = vpop.permute.xlu0 %859
      %861 = vrot.lane.b32.xlu0 %v665, 20
      %v862 = vpop.permute.xlu0 %861
      %863 = vrot.lane.b32.xlu0 %v666, 20
      %v864 = vpop.permute.xlu0 %863
      %865 = vrot.lane.b32.xlu0 %v667, 20
      %v866 = vpop.permute.xlu0 %865
      %867 = vrot.lane.b32.xlu0 %v668, 20
      %v868 = vpop.permute.xlu0 %867
      %869 = vrot.lane.b32.xlu0 %v669, 20
      %v870 = vpop.permute.xlu0 %869
      %871 = vrot.lane.b32.xlu0 %v670, 20
      %v872 = vpop.permute.xlu0 %871
      %873 = vrot.lane.b32.xlu0 %v671, 20
      %v874 = vpop.permute.xlu0 %873
      %875 = vrot.lane.b32.xlu0 %v672, 20
      %v876 = vpop.permute.xlu0 %875
      %877 = vrot.lane.b32.xlu0 %v673, 20
      %v878 = vpop.permute.xlu0 %877
      %879 = vrot.lane.b32.xlu0 %v674, 20
      %v880 = vpop.permute.xlu0 %879
      %881 = vrot.lane.b32.xlu0 %v675, 20
      %v882 = vpop.permute.xlu0 %881
      %883 = vrot.lane.b32.xlu0 %v676, 20
      %v884 = vpop.permute.xlu0 %883
      %885 = vrot.lane.b32.xlu0 %v677, 20
      %v886 = vpop.permute.xlu0 %885
      %887 = vrot.lane.b32.xlu0 %v678, 20
      %v888 = vpop.permute.xlu0 %887
      %889 = vrot.lane.b32.xlu0 %v679, 20
      %v890 = vpop.permute.xlu0 %889
      %892 = vrot.lane.b32.xlu0 %v557, 24
      %v893 = vpop.permute.xlu0 %892
      %894 = vrot.lane.b32.xlu0 %v558, 24
      %v895 = vpop.permute.xlu0 %894
      %896 = vrot.lane.b32.xlu0 %v559, 24
      %v897 = vpop.permute.xlu0 %896
      %898 = vrot.lane.b32.xlu0 %v560, 24
      %v899 = vpop.permute.xlu0 %898
      %900 = vrot.lane.b32.xlu0 %v561, 24
      %v901 = vpop.permute.xlu0 %900
      %902 = vrot.lane.b32.xlu0 %v562, 24
      %v903 = vpop.permute.xlu0 %902
      %904 = vrot.lane.b32.xlu0 %v563, 24
      %v905 = vpop.permute.xlu0 %904
      %906 = vrot.lane.b32.xlu0 %v564, 24
      %v907 = vpop.permute.xlu0 %906
      %908 = vrot.lane.b32.xlu0 %v565, 24
      %v909 = vpop.permute.xlu0 %908
      %910 = vrot.lane.b32.xlu0 %v566, 24
      %v911 = vpop.permute.xlu0 %910
      %912 = vrot.lane.b32.xlu0 %v567, 24
      %v913 = vpop.permute.xlu0 %912
      %914 = vrot.lane.b32.xlu0 %v568, 24
      %v915 = vpop.permute.xlu0 %914
      %916 = vrot.lane.b32.xlu0 %v569, 24
      %v917 = vpop.permute.xlu0 %916
      %918 = vrot.lane.b32.xlu0 %v570, 24
      %v919 = vpop.permute.xlu0 %918
      %920 = vrot.lane.b32.xlu0 %v571, 24
      %v921 = vpop.permute.xlu0 %920
      %922 = vrot.lane.b32.xlu0 %v572, 24
      %v923 = vpop.permute.xlu0 %922
      %925 = vrot.lane.b32.xlu0 %v611, 28
      %v926 = vpop.permute.xlu0 %925
      %927 = vrot.lane.b32.xlu0 %v612, 28
      %v928 = vpop.permute.xlu0 %927
      %929 = vrot.lane.b32.xlu0 %v613, 28
      %v930 = vpop.permute.xlu0 %929
      %931 = vrot.lane.b32.xlu0 %v614, 28
      %v932 = vpop.permute.xlu0 %931
      %933 = vrot.lane.b32.xlu0 %v615, 28
      %v934 = vpop.permute.xlu0 %933
      %935 = vrot.lane.b32.xlu0 %v616, 28
      %v936 = vpop.permute.xlu0 %935
      %937 = vrot.lane.b32.xlu0 %v617, 28
      %v938 = vpop.permute.xlu0 %937
      %939 = vrot.lane.b32.xlu0 %v618, 28
      %v940 = vpop.permute.xlu0 %939
      %941 = vrot.lane.b32.xlu0 %v619, 28
      %v942 = vpop.permute.xlu0 %941
      %943 = vrot.lane.b32.xlu0 %v620, 28
      %v944 = vpop.permute.xlu0 %943
      %945 = vrot.lane.b32.xlu0 %v621, 28
      %v946 = vpop.permute.xlu0 %945
      %947 = vrot.lane.b32.xlu0 %v622, 28
      %v948 = vpop.permute.xlu0 %947
      %949 = vrot.lane.b32.xlu0 %v623, 28
      %v950 = vpop.permute.xlu0 %949
      %951 = vrot.lane.b32.xlu0 %v624, 28
      %v952 = vpop.permute.xlu0 %951
      %953 = vrot.lane.b32.xlu0 %v625, 28
      %v954 = vpop.permute.xlu0 %953
      %955 = vrot.lane.b32.xlu0 %v626, 28
      %v956 = vpop.permute.xlu0 %955
      %958 = vrot.lane.b32.xlu0 %v665, 32
      %v959 = vpop.permute.xlu0 %958
      %960 = vrot.lane.b32.xlu0 %v666, 32
      %v961 = vpop.permute.xlu0 %960
      %962 = vrot.lane.b32.xlu0 %v667, 32
      %v963 = vpop.permute.xlu0 %962
      %964 = vrot.lane.b32.xlu0 %v668, 32
      %v965 = vpop.permute.xlu0 %964
      %966 = vrot.lane.b32.xlu0 %v669, 32
      %v967 = vpop.permute.xlu0 %966
      %968 = vrot.lane.b32.xlu0 %v670, 32
      %v969 = vpop.permute.xlu0 %968
      %970 = vrot.lane.b32.xlu0 %v671, 32
      %v971 = vpop.permute.xlu0 %970
      %972 = vrot.lane.b32.xlu0 %v672, 32
      %v973 = vpop.permute.xlu0 %972
      %974 = vrot.lane.b32.xlu0 %v673, 32
      %v975 = vpop.permute.xlu0 %974
      %976 = vrot.lane.b32.xlu0 %v674, 32
      %v977 = vpop.permute.xlu0 %976
      %978 = vrot.lane.b32.xlu0 %v675, 32
      %v979 = vpop.permute.xlu0 %978
      %980 = vrot.lane.b32.xlu0 %v676, 32
      %v981 = vpop.permute.xlu0 %980
      %982 = vrot.lane.b32.xlu0 %v677, 32
      %v983 = vpop.permute.xlu0 %982
      %984 = vrot.lane.b32.xlu0 %v678, 32
      %v985 = vpop.permute.xlu0 %984
      %986 = vrot.lane.b32.xlu0 %v679, 32
      %v987 = vpop.permute.xlu0 %986
      %988 = vrot.lane.b32.xlu0 %v680, 32
      %v989 = vpop.permute.xlu0 %988
      %v992 = vsel %vm270, %v555, %v698
      %v995 = vsel %vm270, %v556, %v700
      %v998 = vsel %vm270, %v557, %v702
      %v1001 = vsel %vm270, %v558, %v704
      %v1004 = vsel %vm270, %v559, %v706
      %v1007 = vsel %vm270, %v560, %v708
      %v1010 = vsel %vm270, %v561, %v710
      %v1013 = vsel %vm270, %v562, %v712
      %v1016 = vsel %vm270, %v563, %v714
      %v1019 = vsel %vm270, %v564, %v716
      %v1022 = vsel %vm270, %v565, %v718
      %v1025 = vsel %vm270, %v566, %v720
      %v1028 = vsel %vm270, %v567, %v722
      %v1031 = vsel %vm270, %v568, %v724
      %v1034 = vsel %vm270, %v569, %v726
      %v1037 = vsel %vm270, %v570, %v728
      %vm1038 = vcmask 64512
      %v1040 = vsel %vm1038, %v992, %v746
      %v1042 = vsel %vm1038, %v995, %v748
      %v1044 = vsel %vm1038, %v998, %v750
      %v1046 = vsel %vm1038, %v1001, %v752
      %v1048 = vsel %vm1038, %v1004, %v754
      %v1050 = vsel %vm1038, %v1007, %v756
      %v1052 = vsel %vm1038, %v1010, %v758
      %v1054 = vsel %vm1038, %v1013, %v760
      %v1056 = vsel %vm1038, %v1016, %v762
      %v1058 = vsel %vm1038, %v1019, %v764
      %v1060 = vsel %vm1038, %v1022, %v766
      %v1062 = vsel %vm1038, %v1025, %v768
      %v1064 = vsel %vm1038, %v1028, %v770
      %v1066 = vsel %vm1038, %v1031, %v772
      %v1068 = vsel %vm1038, %v1034, %v774
      %v1070 = vsel %vm1038, %v1037, %v776
      %vm1071 = vcmask 97280
      %v1073 = vsel %vm1071, %v1040, %v794
      %v1075 = vsel %vm1071, %v1042, %v796
      %v1077 = vsel %vm1071, %v1044, %v798
      %v1079 = vsel %vm1071, %v1046, %v800
      %v1081 = vsel %vm1071, %v1048, %v802
      %v1083 = vsel %vm1071, %v1050, %v804
      %v1085 = vsel %vm1071, %v1052, %v806
      %v1087 = vsel %vm1071, %v1054, %v808
      %v1089 = vsel %vm1071, %v1056, %v810
      %v1091 = vsel %vm1071, %v1058, %v812
      %v1093 = vsel %vm1071, %v1060, %v814
      %v1095 = vsel %vm1071, %v1062, %v816
      %v1097 = vsel %vm1071, %v1064, %v818
      %v1099 = vsel %vm1071, %v1066, %v820
      %v1101 = vsel %vm1071, %v1068, %v822
      %v1103 = vsel %vm1071, %v1070, %v824
      %vm1104 = vcmask 130048
      %v1106 = vsel %vm1104, %v1073, %v827
      %v1108 = vsel %vm1104, %v1075, %v829
      %v1110 = vsel %vm1104, %v1077, %v831
      %v1112 = vsel %vm1104, %v1079, %v833
      %v1114 = vsel %vm1104, %v1081, %v835
      %v1116 = vsel %vm1104, %v1083, %v837
      %v1118 = vsel %vm1104, %v1085, %v839
      %v1120 = vsel %vm1104, %v1087, %v841
      %v1122 = vsel %vm1104, %v1089, %v843
      %v1124 = vsel %vm1104, %v1091, %v845
      %v1126 = vsel %vm1104, %v1093, %v847
      %v1128 = vsel %vm1104, %v1095, %v849
      %v1130 = vsel %vm1104, %v1097, %v851
      %v1132 = vsel %vm1104, %v1099, %v853
      %v1134 = vsel %vm1104, %v1101, %v855
      %v1136 = vsel %vm1104, %v1103, %v857
      %vm1137 = vcmask 162816
      %v1139 = vsel %vm1137, %v1106, %v860
      %v1141 = vsel %vm1137, %v1108, %v862
      %v1143 = vsel %vm1137, %v1110, %v864
      %v1145 = vsel %vm1137, %v1112, %v866
      %v1147 = vsel %vm1137, %v1114, %v868
      %v1149 = vsel %vm1137, %v1116, %v870
      %v1151 = vsel %vm1137, %v1118, %v872
      %v1153 = vsel %vm1137, %v1120, %v874
      %v1155 = vsel %vm1137, %v1122, %v876
      %v1157 = vsel %vm1137, %v1124, %v878
      %v1159 = vsel %vm1137, %v1126, %v880
      %v1161 = vsel %vm1137, %v1128, %v882
      %v1163 = vsel %vm1137, %v1130, %v884
      %v1165 = vsel %vm1137, %v1132, %v886
      %v1167 = vsel %vm1137, %v1134, %v888
      %v1169 = vsel %vm1137, %v1136, %v890
      %vm1170 = vcmask 195584
      %v1172 = vsel %vm1170, %v1139, %v893
      %v1174 = vsel %vm1170, %v1141, %v895
      %v1176 = vsel %vm1170, %v1143, %v897
      %v1178 = vsel %vm1170, %v1145, %v899
      %v1180 = vsel %vm1170, %v1147, %v901
      %v1182 = vsel %vm1170, %v1149, %v903
      %v1184 = vsel %vm1170, %v1151, %v905
      %v1186 = vsel %vm1170, %v1153, %v907
      %v1188 = vsel %vm1170, %v1155, %v909
      %v1190 = vsel %vm1170, %v1157, %v911
      %v1192 = vsel %vm1170, %v1159, %v913
      %v1194 = vsel %vm1170, %v1161, %v915
      %v1196 = vsel %vm1170, %v1163, %v917
      %v1198 = vsel %vm1170, %v1165, %v919
      %v1200 = vsel %vm1170, %v1167, %v921
      %v1202 = vsel %vm1170, %v1169, %v923
      %vm1203 = vcmask 228352
      %v1205 = vsel %vm1203, %v1172, %v926
      %v1207 = vsel %vm1203, %v1174, %v928
      %v1209 = vsel %vm1203, %v1176, %v930
      %v1211 = vsel %vm1203, %v1178, %v932
      %v1213 = vsel %vm1203, %v1180, %v934
      %v1215 = vsel %vm1203, %v1182, %v936
      %v1217 = vsel %vm1203, %v1184, %v938
      %v1219 = vsel %vm1203, %v1186, %v940
      %v1221 = vsel %vm1203, %v1188, %v942
      %v1223 = vsel %vm1203, %v1190, %v944
      %v1225 = vsel %vm1203, %v1192, %v946
      %v1227 = vsel %vm1203, %v1194, %v948
      %v1229 = vsel %vm1203, %v1196, %v950
      %v1231 = vsel %vm1203, %v1198, %v952
      %v1233 = vsel %vm1203, %v1200, %v954
      %v1235 = vsel %vm1203, %v1202, %v956
      %vm1236 = vcmask 261120
      %v1238 = vsel %vm1236, %v1205, %v959
      %v1240 = vsel %vm1236, %v1207, %v961
      %v1242 = vsel %vm1236, %v1209, %v963
      %v1244 = vsel %vm1236, %v1211, %v965
      %v1246 = vsel %vm1236, %v1213, %v967
      %v1248 = vsel %vm1236, %v1215, %v969
      %v1250 = vsel %vm1236, %v1217, %v971
      %v1252 = vsel %vm1236, %v1219, %v973
      %v1254 = vsel %vm1236, %v1221, %v975
      %v1256 = vsel %vm1236, %v1223, %v977
      %v1258 = vsel %vm1236, %v1225, %v979
      %v1260 = vsel %vm1236, %v1227, %v981
      %v1262 = vsel %vm1236, %v1229, %v983
      %v1264 = vsel %vm1236, %v1231, %v985
      %v1266 = vsel %vm1236, %v1233, %v987
      %v1268 = vsel %vm1236, %v1235, %v989
      %v1269 = vld [vmem:[%s3] sm:$0xf]
      %v1270 = vld [vmem:[%s3 + $0x4] sm:$0xf]
      %v1271 = vld [vmem:[%s3 + $0x8] sm:$0xf]
      %v1272 = vld [vmem:[%s3 + $0xc] sm:$0xf]
      %v1273 = vld [vmem:[%s3 + $0x10] sm:$0x3]
      %v1279 = vunpack.c.l.b16 %v1269
      %v1280 = vunpack.c.l.b16 %v1270
      %v1281 = vunpack.c.l.b16 %v1271
      %v1282 = vunpack.c.l.b16 %v1272
      %v1283 = vunpack.c.l.b16 %v1273
      %v1284 = vpack.c.b16 %v1280, %v1279
      %v1285 = vpack.c.b16 %v1282, %v1281
      %v1286 = vpack.c.b16 %v1283, %v1283
      %vm1289 = vcmask 293888
      %v1290 = vsel %vm1289, %v1238, 0
      %v1292 = vsel %vm1289, %v1240, 0
      %v1294 = vsel %vm1289, %v1242, 0
      %v1296 = vsel %vm1289, %v1244, 0
      %v1298 = vsel %vm1289, %v1246, 0
      %v1300 = vsel %vm1289, %v1248, 0
      %v1302 = vsel %vm1289, %v1250, 0
      %v1304 = vsel %vm1289, %v1252, 0
      %v1306 = vsel %vm1289, %v1254, 0
      %v1308 = vsel %vm1289, %v1256, 0
      %v1310 = vsel %vm1289, %v1258, 0
      %v1312 = vsel %vm1289, %v1260, 0
      %v1314 = vsel %vm1289, %v1262, 0
      %v1316 = vsel %vm1289, %v1264, 0
      %v1318 = vsel %vm1289, %v1266, 0
      %v1320 = vsel %vm1289, %v1268, 0
      %vm1322 = vcmask 1041408
      %v1324 = vsel %vm1322, %v1286, 0
      %1326 = vmatprep.subr.bf16.mxu0 0
      %1327 = vmatpush1.bf16.msra.mxu0 %v1284
      %1328 = vmatprep.subr.bf16.mxu0 0
      %1329 = vmatpush1.bf16.msra.mxu0 %v1285
      %1330 = vmatprep.subr.bf16.mxu0 0
      %1331 = vmatpush1.bf16.msra.mxu0 %v1324
      %1332 = vmatprep.subr.bf16.mxu0 0
      %1333 = vmatpush1.bf16.msra.mxu0 0
      %1334 = vmatprep.subr.bf16.mxu0 0
      %1335 = vmatpush1.bf16.msra.mxu0 0
      %1336 = vmatprep.subr.bf16.mxu0 0
      %1337 = vmatpush1.bf16.msra.mxu0 0
      %1338 = vmatprep.subr.bf16.mxu0 0
      %1339 = vmatpush1.bf16.msra.mxu0 0
      %1340 = vmatprep.subr.bf16.mxu0 0
      %1341 = vmatpush1.bf16.msra.mxu0 0
      %1342 = vmatprep.subr.bf16.mxu0 0
      %1343 = vmatpush1.bf16.msra.mxu0 0
      %1344 = vmatprep.subr.bf16.mxu0 0
      %1345 = vmatpush1.bf16.msra.mxu0 0
      %1346 = vmatprep.subr.bf16.mxu0 0
      %1347 = vmatpush1.bf16.msra.mxu0 0
      %1348 = vmatprep.subr.bf16.mxu0 0
      %1349 = vmatpush1.bf16.msra.mxu0 0
      %1350 = vmatprep.subr.bf16.mxu0 0
      %1351 = vmatpush1.bf16.msra.mxu0 0
      %1352 = vmatprep.subr.bf16.mxu0 0
      %1353 = vmatpush1.bf16.msra.mxu0 0
      %1354 = vmatprep.subr.bf16.mxu0 0
      %1355 = vmatpush1.bf16.msra.mxu0 0
      %1356 = vmatprep.subr.bf16.mxu0 0
      %1357 = vmatpush1.bf16.msra.mxu0 0
      %1358 = vmatprep.mubr.bf16.mxu0 0
      %1359 = vmatmul.mubr.bf16.gmra.mrb[0].mxu0 %v1290
      %v1360 = vpop.f32.mrb[0].mxu0
      %v1361 = vadd.f32 0.0, %v1360
      %v1362 = vpop.f32.mrb[0].mxu0
      %v1363 = vpop.f32.mrb[0].mxu0
      %v1364 = vadd.f32 0.0, %v1363
      %v1365 = vpop.f32.mrb[0].mxu0
      %1366 = vmatprep.mubr.bf16.mxu0 0
      %1367 = vmatmul.mubr.bf16.gmra.mrb[0].mxu0 %v1292
      %v1368 = vpop.f32.mrb[0].mxu0
      %v1369 = vadd.f32 0.0, %v1368
      %v1370 = vpop.f32.mrb[0].mxu0
      %v1371 = vpop.f32.mrb[0].mxu0
      %v1372 = vadd.f32 0.0, %v1371
      %v1373 = vpop.f32.mrb[0].mxu0
      %1374 = vmatprep.mubr.bf16.mxu0 0
      %1375 = vmatmul.mubr.bf16.gmra.mrb[0].mxu0 %v1294
      %v1376 = vpop.f32.mrb[0].mxu0
      %v1377 = vadd.f32 0.0, %v1376
      %v1378 = vpop.f32.mrb[0].mxu0
      %v1379 = vpop.f32.mrb[0].mxu0
      %v1380 = vadd.f32 0.0, %v1379
      %v1381 = vpop.f32.mrb[0].mxu0
      %1382 = vmatprep.mubr.bf16.mxu0 0
      %1383 = vmatmul.mubr.bf16.gmra.mrb[0].mxu0 %v1296
      %v1384 = vpop.f32.mrb[0].mxu0
      %v1385 = vadd.f32 0.0, %v1384
      %v1386 = vpop.f32.mrb[0].mxu0
      %v1387 = vpop.f32.mrb[0].mxu0
      %v1388 = vadd.f32 0.0, %v1387
      %v1389 = vpop.f32.mrb[0].mxu0
      %1390 = vmatprep.mubr.bf16.mxu0 0
      %1391 = vmatmul.mubr.bf16.gmra.mrb[0].mxu0 %v1298
      %v1392 = vpop.f32.mrb[0].mxu0
      %v1393 = vadd.f32 0.0, %v1392
      %v1394 = vpop.f32.mrb[0].mxu0
      %v1395 = vpop.f32.mrb[0].mxu0
      %v1396 = vadd.f32 0.0, %v1395
      %v1397 = vpop.f32.mrb[0].mxu0
      %1398 = vmatprep.mubr.bf16.mxu0 0
      %1399 = vmatmul.mubr.bf16.gmra.mrb[0].mxu0 %v1300
      %v1400 = vpop.f32.mrb[0].mxu0
      %v1401 = vadd.f32 0.0, %v1400
      %v1402 = vpop.f32.mrb[0].mxu0
      %v1403 = vpop.f32.mrb[0].mxu0
      %v1404 = vadd.f32 0.0, %v1403
      %v1405 = vpop.f32.mrb[0].mxu0
      %1406 = vmatprep.mubr.bf16.mxu0 0
      %1407 = vmatmul.mubr.bf16.gmra.mrb[0].mxu0 %v1302
      %v1408 = vpop.f32.mrb[0].mxu0
      %v1409 = vadd.f32 0.0, %v1408
      %v1410 = vpop.f32.mrb[0].mxu0
      %v1411 = vpop.f32.mrb[0].mxu0
      %v1412 = vadd.f32 0.0, %v1411
      %v1413 = vpop.f32.mrb[0].mxu0
      %1414 = vmatprep.mubr.bf16.mxu0 0
      %1415 = vmatmul.mubr.bf16.gmra.mrb[0].mxu0 %v1304
      %v1416 = vpop.f32.mrb[0].mxu0
      %v1417 = vadd.f32 0.0, %v1416
      %v1418 = vpop.f32.mrb[0].mxu0
      %v1419 = vpop.f32.mrb[0].mxu0
      %v1420 = vadd.f32 0.0, %v1419
      %v1421 = vpop.f32.mrb[0].mxu0
      %1422 = vmatprep.mubr.bf16.mxu0 0
      %1423 = vmatmul.mubr.bf16.gmra.mrb[0].mxu0 %v1306
      %v1424 = vpop.f32.mrb[0].mxu0
      %v1425 = vadd.f32 0.0, %v1424
      %v1426 = vpop.f32.mrb[0].mxu0
      %v1427 = vpop.f32.mrb[0].mxu0
      %v1428 = vadd.f32 0.0, %v1427
      %v1429 = vpop.f32.mrb[0].mxu0
      %1430 = vmatprep.mubr.bf16.mxu0 0
      %1431 = vmatmul.mubr.bf16.gmra.mrb[0].mxu0 %v1308
      %v1432 = vpop.f32.mrb[0].mxu0
      %v1433 = vadd.f32 0.0, %v1432
      %v1434 = vpop.f32.mrb[0].mxu0
      %v1435 = vpop.f32.mrb[0].mxu0
      %v1436 = vadd.f32 0.0, %v1435
      %v1437 = vpop.f32.mrb[0].mxu0
      %1438 = vmatprep.mubr.bf16.mxu0 0
      %1439 = vmatmul.mubr.bf16.gmra.mrb[0].mxu0 %v1310
      %v1440 = vpop.f32.mrb[0].mxu0
      %v1441 = vadd.f32 0.0, %v1440
      %v1442 = vpop.f32.mrb[0].mxu0
      %v1443 = vpop.f32.mrb[0].mxu0
      %v1444 = vadd.f32 0.0, %v1443
      %v1445 = vpop.f32.mrb[0].mxu0
      %1446 = vmatprep.mubr.bf16.mxu0 0
      %1447 = vmatmul.mubr.bf16.gmra.mrb[0].mxu0 %v1312
      %v1448 = vpop.f32.mrb[0].mxu0
      %v1449 = vadd.f32 0.0, %v1448
      %v1450 = vpop.f32.mrb[0].mxu0
      %v1451 = vpop.f32.mrb[0].mxu0
      %v1452 = vadd.f32 0.0, %v1451
      %v1453 = vpop.f32.mrb[0].mxu0
      %1454 = vmatprep.mubr.bf16.mxu0 0
      %1455 = vmatmul.mubr.bf16.gmra.mrb[0].mxu0 %v1314
      %v1456 = vpop.f32.mrb[0].mxu0
      %v1457 = vadd.f32 0.0, %v1456
      %v1458 = vpop.f32.mrb[0].mxu0
      %v1459 = vpop.f32.mrb[0].mxu0
      %v1460 = vadd.f32 0.0, %v1459
      %v1461 = vpop.f32.mrb[0].mxu0
      %1462 = vmatprep.mubr.bf16.mxu0 0
      %1463 = vmatmul.mubr.bf16.gmra.mrb[0].mxu0 %v1316
      %v1464 = vpop.f32.mrb[0].mxu0
      %v1465 = vadd.f32 0.0, %v1464
      %v1466 = vpop.f32.mrb[0].mxu0
      %v1467 = vpop.f32.mrb[0].mxu0
      %v1468 = vadd.f32 0.0, %v1467
      %v1469 = vpop.f32.mrb[0].mxu0
      %1470 = vmatprep.mubr.bf16.mxu0 0
      %1471 = vmatmul.mubr.bf16.gmra.mrb[0].mxu0 %v1318
      %v1472 = vpop.f32.mrb[0].mxu0
      %v1473 = vadd.f32 0.0, %v1472
      %v1474 = vpop.f32.mrb[0].mxu0
      %v1475 = vpop.f32.mrb[0].mxu0
      %v1476 = vadd.f32 0.0, %v1475
      %v1477 = vpop.f32.mrb[0].mxu0
      %1478 = vmatprep.mubr.bf16.mxu0 0
      %1479 = vmatmul.mubr.bf16.gmra.mrb[0].mxu0 %v1320
      %v1480 = vpop.f32.mrb[0].mxu0
      %v1481 = vadd.f32 0.0, %v1480
      %v1482 = vpop.f32.mrb[0].mxu0
      %v1483 = vpop.f32.mrb[0].mxu0
      %v1484 = vadd.f32 0.0, %v1483
      %v1485 = vpop.f32.mrb[0].mxu0
      %1486 = vdwg.mxu0
      %v1487 = vpack.c.bf16 %v1364, %v1361
      %v1488 = vpack.c.bf16 %v1372, %v1369
      %v1489 = vpack.c.bf16 %v1380, %v1377
      %v1490 = vpack.c.bf16 %v1388, %v1385
      %v1491 = vpack.c.bf16 %v1396, %v1393
      %v1492 = vpack.c.bf16 %v1404, %v1401
      %v1493 = vpack.c.bf16 %v1412, %v1409
      %v1494 = vpack.c.bf16 %v1420, %v1417
      %v1495 = vpack.c.bf16 %v1428, %v1425
      %v1496 = vpack.c.bf16 %v1436, %v1433
      %v1497 = vpack.c.bf16 %v1444, %v1441
      %v1498 = vpack.c.bf16 %v1452, %v1449
      %v1499 = vpack.c.bf16 %v1460, %v1457
      %v1500 = vpack.c.bf16 %v1468, %v1465
      %v1501 = vpack.c.bf16 %v1476, %v1473
      %v1502 = vpack.c.bf16 %v1484, %v1481
      %v1519 = vunpack.c.l.b16 %v1487
      %v1520 = vunpack.c.h.b16 %v1487
      %v1521 = vunpack.c.l.b16 %v1488
      %v1522 = vunpack.c.h.b16 %v1488
      %v1523 = vunpack.c.l.b16 %v1489
      %v1524 = vunpack.c.h.b16 %v1489
      %v1525 = vunpack.c.l.b16 %v1490
      %v1526 = vunpack.c.h.b16 %v1490
      %v1527 = vunpack.c.l.b16 %v1491
      %v1528 = vunpack.c.h.b16 %v1491
      %v1529 = vunpack.c.l.b16 %v1492
      %v1530 = vunpack.c.h.b16 %v1492
      %v1531 = vunpack.c.l.b16 %v1493
      %v1532 = vunpack.c.h.b16 %v1493
      %v1533 = vunpack.c.l.b16 %v1494
      %v1534 = vunpack.c.h.b16 %v1494
      %v1535 = vunpack.c.l.b16 %v1495
      %v1536 = vunpack.c.h.b16 %v1495
      %v1537 = vunpack.c.l.b16 %v1496
      %v1538 = vunpack.c.h.b16 %v1496
      %v1539 = vunpack.c.l.b16 %v1497
      %v1540 = vunpack.c.h.b16 %v1497
      %v1541 = vunpack.c.l.b16 %v1498
      %v1542 = vunpack.c.h.b16 %v1498
      %v1543 = vunpack.c.l.b16 %v1499
      %v1544 = vunpack.c.h.b16 %v1499
      %v1545 = vunpack.c.l.b16 %v1500
      %v1546 = vunpack.c.h.b16 %v1500
      %v1547 = vunpack.c.l.b16 %v1501
      %v1548 = vunpack.c.h.b16 %v1501
      %v1549 = vunpack.c.l.b16 %v1502
      %v1550 = vunpack.c.h.b16 %v1502
      %v1551 = vpack.c.b16 %v1519, %v1519
      %v1552 = vpack.c.b16 %v1520, %v1520
      %v1553 = vpack.c.b16 %v1521, %v1521
      %v1554 = vpack.c.b16 %v1522, %v1522
      %v1555 = vpack.c.b16 %v1523, %v1523
      %v1556 = vpack.c.b16 %v1524, %v1524
      %v1557 = vpack.c.b16 %v1525, %v1525
      %v1558 = vpack.c.b16 %v1526, %v1526
      %v1559 = vpack.c.b16 %v1527, %v1527
      %v1560 = vpack.c.b16 %v1528, %v1528
      %v1561 = vpack.c.b16 %v1529, %v1529
      %v1562 = vpack.c.b16 %v1530, %v1530
      %v1563 = vpack.c.b16 %v1531, %v1531
      %v1564 = vpack.c.b16 %v1532, %v1532
      %v1565 = vpack.c.b16 %v1533, %v1533
      %v1566 = vpack.c.b16 %v1534, %v1534
      %v1567 = vpack.c.b16 %v1535, %v1535
      %v1568 = vpack.c.b16 %v1536, %v1536
      %v1569 = vpack.c.b16 %v1537, %v1537
      %v1570 = vpack.c.b16 %v1538, %v1538
      %v1571 = vpack.c.b16 %v1539, %v1539
      %v1572 = vpack.c.b16 %v1540, %v1540
      %v1573 = vpack.c.b16 %v1541, %v1541
      %v1574 = vpack.c.b16 %v1542, %v1542
      %v1575 = vpack.c.b16 %v1543, %v1543
      %v1576 = vpack.c.b16 %v1544, %v1544
      %v1577 = vpack.c.b16 %v1545, %v1545
      %v1578 = vpack.c.b16 %v1546, %v1546
      %v1579 = vpack.c.b16 %v1547, %v1547
      %v1580 = vpack.c.b16 %v1548, %v1548
      %v1581 = vpack.c.b16 %v1549, %v1549
      %v1582 = vpack.c.b16 %v1550, %v1550
      %vm1615 = vcmask 27648
      %1616 = vst.msk [vmem:[%s262] sm:$0xf] %vm1615, %v1551
      %1617 = vst.msk [vmem:[%s262 + $0x4] sm:$0xf] %vm1615, %v1552
      %1618 = vst.msk [vmem:[%s262 + $0x8] sm:$0xf] %vm1615, %v1553
      %1619 = vst.msk [vmem:[%s262 + $0xc] sm:$0xf] %vm1615, %v1554
      %1620 = vst.msk [vmem:[%s262 + $0x10] sm:$0xf] %vm1615, %v1555
      %1621 = vst.msk [vmem:[%s262 + $0x14] sm:$0xf] %vm1615, %v1556
      %1622 = vst.msk [vmem:[%s262 + $0x18] sm:$0xf] %vm1615, %v1557
      %1623 = vst.msk [vmem:[%s262 + $0x1c] sm:$0xf] %vm1615, %v1558
      %1624 = vst.msk [vmem:[%s262 + $0x20] sm:$0xf] %vm1615, %v1559
      %1625 = vst.msk [vmem:[%s262 + $0x24] sm:$0xf] %vm1615, %v1560
      %1626 = vst.msk [vmem:[%s262 + $0x28] sm:$0xf] %vm1615, %v1561
      %1627 = vst.msk [vmem:[%s262 + $0x2c] sm:$0xf] %vm1615, %v1562
      %1628 = vst.msk [vmem:[%s262 + $0x30] sm:$0xf] %vm1615, %v1563
      %1629 = vst.msk [vmem:[%s262 + $0x34] sm:$0xf] %vm1615, %v1564
      %1630 = vst.msk [vmem:[%s262 + $0x38] sm:$0xf] %vm1615, %v1565
      %1631 = vst.msk [vmem:[%s262 + $0x3c] sm:$0xf] %vm1615, %v1566
      %1632 = vst.msk [vmem:[%s262 + $0x40] sm:$0xf] %vm1615, %v1567
      %1633 = vst.msk [vmem:[%s262 + $0x44] sm:$0xf] %vm1615, %v1568
      %1634 = vst.msk [vmem:[%s262 + $0x48] sm:$0xf] %vm1615, %v1569
      %1635 = vst.msk [vmem:[%s262 + $0x4c] sm:$0xf] %vm1615, %v1570
      %1636 = vst.msk [vmem:[%s262 + $0x50] sm:$0xf] %vm1615, %v1571
      %1637 = vst.msk [vmem:[%s262 + $0x54] sm:$0xf] %vm1615, %v1572
      %1638 = vst.msk [vmem:[%s262 + $0x58] sm:$0xf] %vm1615, %v1573
      %1639 = vst.msk [vmem:[%s262 + $0x5c] sm:$0xf] %vm1615, %v1574
      %1640 = vst.msk [vmem:[%s262 + $0x60] sm:$0xf] %vm1615, %v1575
      %1641 = vst.msk [vmem:[%s262 + $0x64] sm:$0xf] %vm1615, %v1576
      %1642 = vst.msk [vmem:[%s262 + $0x68] sm:$0xf] %vm1615, %v1577
      %1643 = vst.msk [vmem:[%s262 + $0x6c] sm:$0xf] %vm1615, %v1578
      %1644 = vst.msk [vmem:[%s262 + $0x70] sm:$0xf] %vm1615, %v1579
      %1645 = vst.msk [vmem:[%s262 + $0x74] sm:$0xf] %vm1615, %v1580
      %1646 = vst.msk [vmem:[%s262 + $0x78] sm:$0xf] %vm1615, %v1581
      %1647 = vst.msk [vmem:[%s262 + $0x7c] sm:$0xf] %vm1615, %v1582
      %v1648 = vunpack.c.l.bf16 %v1487
      %v1649 = vunpack.c.h.bf16 %v1487
      %v1650 = vunpack.c.l.bf16 %v1488
      %v1651 = vunpack.c.h.bf16 %v1488
      %v1652 = vunpack.c.l.bf16 %v1489
      %v1653 = vunpack.c.h.bf16 %v1489
      %v1654 = vunpack.c.l.bf16 %v1490
      %v1655 = vunpack.c.h.bf16 %v1490
      %v1656 = vunpack.c.l.bf16 %v1491
      %v1657 = vunpack.c.h.bf16 %v1491
      %v1658 = vunpack.c.l.bf16 %v1492
      %v1659 = vunpack.c.h.bf16 %v1492
      %v1660 = vunpack.c.l.bf16 %v1493
      %v1661 = vunpack.c.h.bf16 %v1493
      %v1662 = vunpack.c.l.bf16 %v1494
      %v1663 = vunpack.c.h.bf16 %v1494
      %v1664 = vunpack.c.l.bf16 %v1495
      %v1665 = vunpack.c.h.bf16 %v1495
      %v1666 = vunpack.c.l.bf16 %v1496
      %v1667 = vunpack.c.h.bf16 %v1496
      %v1668 = vunpack.c.l.bf16 %v1497
      %v1669 = vunpack.c.h.bf16 %v1497
      %v1670 = vunpack.c.l.bf16 %v1498
      %v1671 = vunpack.c.h.bf16 %v1498
      %v1672 = vunpack.c.l.bf16 %v1499
      %v1673 = vunpack.c.h.bf16 %v1499
      %v1674 = vunpack.c.l.bf16 %v1500
      %v1675 = vunpack.c.h.bf16 %v1500
      %v1676 = vunpack.c.l.bf16 %v1501
      %v1677 = vunpack.c.h.bf16 %v1501
      %v1678 = vunpack.c.l.bf16 %v1502
      %v1679 = vunpack.c.h.bf16 %v1502
      %v1680 = vsel %vm270, %v1648, 0.0
      %v1681 = vsel %vm270, %v1649, 0.0
      %v1682 = vadd.f32 %v1680, %v1681
      %v1683 = vsel %vm270, %v1650, 0.0
      %v1684 = vadd.f32 %v1682, %v1683
      %v1685 = vsel %vm270, %v1651, 0.0
      %v1686 = vadd.f32 %v1684, %v1685
      %v1687 = vsel %vm270, %v1652, 0.0
      %v1688 = vadd.f32 %v1686, %v1687
      %v1689 = vsel %vm270, %v1653, 0.0
      %v1690 = vadd.f32 %v1688, %v1689
      %v1691 = vsel %vm270, %v1654, 0.0
      %v1692 = vadd.f32 %v1690, %v1691
      %v1693 = vsel %vm270, %v1655, 0.0
      %v1694 = vadd.f32 %v1692, %v1693
      %v1695 = vsel %vm270, %v1656, 0.0
      %v1696 = vadd.f32 %v1694, %v1695
      %v1697 = vsel %vm270, %v1657, 0.0
      %v1698 = vadd.f32 %v1696, %v1697
      %v1699 = vsel %vm270, %v1658, 0.0
      %v1700 = vadd.f32 %v1698, %v1699
      %v1701 = vsel %vm270, %v1659, 0.0
      %v1702 = vadd.f32 %v1700, %v1701
      %v1703 = vsel %vm270, %v1660, 0.0
      %v1704 = vadd.f32 %v1702, %v1703
      %v1705 = vsel %vm270, %v1661, 0.0
      %v1706 = vadd.f32 %v1704, %v1705
      %v1707 = vsel %vm270, %v1662, 0.0
      %v1708 = vadd.f32 %v1706, %v1707
      %v1709 = vsel %vm270, %v1663, 0.0
      %v1710 = vadd.f32 %v1708, %v1709
      %v1711 = vsel %vm270, %v1664, 0.0
      %v1712 = vadd.f32 %v1710, %v1711
      %v1713 = vsel %vm270, %v1665, 0.0
      %v1714 = vadd.f32 %v1712, %v1713
      %v1715 = vsel %vm270, %v1666, 0.0
      %v1716 = vadd.f32 %v1714, %v1715
      %v1717 = vsel %vm270, %v1667, 0.0
      %v1718 = vadd.f32 %v1716, %v1717
      %v1719 = vsel %vm270, %v1668, 0.0
      %v1720 = vadd.f32 %v1718, %v1719
      %v1721 = vsel %vm270, %v1669, 0.0
      %v1722 = vadd.f32 %v1720, %v1721
      %v1723 = vsel %vm270, %v1670, 0.0
      %v1724 = vadd.f32 %v1722, %v1723
      %v1725 = vsel %vm270, %v1671, 0.0
      %v1726 = vadd.f32 %v1724, %v1725
      %v1727 = vsel %vm270, %v1672, 0.0
      %v1728 = vadd.f32 %v1726, %v1727
      %v1729 = vsel %vm270, %v1673, 0.0
      %v1730 = vadd.f32 %v1728, %v1729
      %v1731 = vsel %vm270, %v1674, 0.0
      %v1732 = vadd.f32 %v1730, %v1731
      %v1733 = vsel %vm270, %v1675, 0.0
      %v1734 = vadd.f32 %v1732, %v1733
      %v1735 = vsel %vm270, %v1676, 0.0
      %v1736 = vadd.f32 %v1734, %v1735
      %v1737 = vsel %vm270, %v1677, 0.0
      %v1738 = vadd.f32 %v1736, %v1737
      %v1739 = vsel %vm270, %v1678, 0.0
      %v1740 = vadd.f32 %v1738, %v1739
      %v1741 = vsel %vm270, %v1679, 0.0
      %v1742 = vadd.f32 %v1740, %v1741
      %v1743 = vrot.slane %v1742, 4
      %v1744 = vadd.f32 %v1742, %v1743
      %v1745 = vrot.slane %v1744, 2
      %v1746 = vadd.f32 %v1744, %v1745
      %v1747 = vrot.slane %v1746, 1
      %v1748 = vadd.f32 %v1746, %v1747
      %1749 = vst.msk [vmem:[%s265] sm:$0x1] %vm280, %v1748
      %v1750 = vmul.f32 %v1648, %v1648
      %v1751 = vmul.f32 %v1649, %v1649
      %v1752 = vmul.f32 %v1650, %v1650
      %v1753 = vmul.f32 %v1651, %v1651
      %v1754 = vmul.f32 %v1652, %v1652
      %v1755 = vmul.f32 %v1653, %v1653
      %v1756 = vmul.f32 %v1654, %v1654
      %v1757 = vmul.f32 %v1655, %v1655
      %v1758 = vmul.f32 %v1656, %v1656
      %v1759 = vmul.f32 %v1657, %v1657
      %v1760 = vmul.f32 %v1658, %v1658
      %v1761 = vmul.f32 %v1659, %v1659
      %v1762 = vmul.f32 %v1660, %v1660
      %v1763 = vmul.f32 %v1661, %v1661
      %v1764 = vmul.f32 %v1662, %v1662
      %v1765 = vmul.f32 %v1663, %v1663
      %v1766 = vmul.f32 %v1664, %v1664
      %v1767 = vmul.f32 %v1665, %v1665
      %v1768 = vmul.f32 %v1666, %v1666
      %v1769 = vmul.f32 %v1667, %v1667
      %v1770 = vmul.f32 %v1668, %v1668
      %v1771 = vmul.f32 %v1669, %v1669
      %v1772 = vmul.f32 %v1670, %v1670
      %v1773 = vmul.f32 %v1671, %v1671
      %v1774 = vmul.f32 %v1672, %v1672
      %v1775 = vmul.f32 %v1673, %v1673
      %v1776 = vmul.f32 %v1674, %v1674
      %v1777 = vmul.f32 %v1675, %v1675
      %v1778 = vmul.f32 %v1676, %v1676
      %v1779 = vmul.f32 %v1677, %v1677
      %v1780 = vmul.f32 %v1678, %v1678
      %v1781 = vmul.f32 %v1679, %v1679
      %v1782 = vsel %vm270, %v1750, 0.0
      %v1783 = vsel %vm270, %v1751, 0.0
      %v1784 = vadd.f32 %v1782, %v1783
      %v1785 = vsel %vm270, %v1752, 0.0
      %v1786 = vadd.f32 %v1784, %v1785
      %v1787 = vsel %vm270, %v1753, 0.0
      %v1788 = vadd.f32 %v1786, %v1787
      %v1789 = vsel %vm270, %v1754, 0.0
      %v1790 = vadd.f32 %v1788, %v1789
      %v1791 = vsel %vm270, %v1755, 0.0
      %v1792 = vadd.f32 %v1790, %v1791
      %v1793 = vsel %vm270, %v1756, 0.0
      %v1794 = vadd.f32 %v1792, %v1793
      %v1795 = vsel %vm270, %v1757, 0.0
      %v1796 = vadd.f32 %v1794, %v1795
      %v1797 = vsel %vm270, %v1758, 0.0
      %v1798 = vadd.f32 %v1796, %v1797
      %v1799 = vsel %vm270, %v1759, 0.0
      %v1800 = vadd.f32 %v1798, %v1799
      %v1801 = vsel %vm270, %v1760, 0.0
      %v1802 = vadd.f32 %v1800, %v1801
      %v1803 = vsel %vm270, %v1761, 0.0
      %v1804 = vadd.f32 %v1802, %v1803
      %v1805 = vsel %vm270, %v1762, 0.0
      %v1806 = vadd.f32 %v1804, %v1805
      %v1807 = vsel %vm270, %v1763, 0.0
      %v1808 = vadd.f32 %v1806, %v1807
      %v1809 = vsel %vm270, %v1764, 0.0
      %v1810 = vadd.f32 %v1808, %v1809
      %v1811 = vsel %vm270, %v1765, 0.0
      %v1812 = vadd.f32 %v1810, %v1811
      %v1813 = vsel %vm270, %v1766, 0.0
      %v1814 = vadd.f32 %v1812, %v1813
      %v1815 = vsel %vm270, %v1767, 0.0
      %v1816 = vadd.f32 %v1814, %v1815
      %v1817 = vsel %vm270, %v1768, 0.0
      %v1818 = vadd.f32 %v1816, %v1817
      %v1819 = vsel %vm270, %v1769, 0.0
      %v1820 = vadd.f32 %v1818, %v1819
      %v1821 = vsel %vm270, %v1770, 0.0
      %v1822 = vadd.f32 %v1820, %v1821
      %v1823 = vsel %vm270, %v1771, 0.0
      %v1824 = vadd.f32 %v1822, %v1823
      %v1825 = vsel %vm270, %v1772, 0.0
      %v1826 = vadd.f32 %v1824, %v1825
      %v1827 = vsel %vm270, %v1773, 0.0
      %v1828 = vadd.f32 %v1826, %v1827
      %v1829 = vsel %vm270, %v1774, 0.0
      %v1830 = vadd.f32 %v1828, %v1829
      %v1831 = vsel %vm270, %v1775, 0.0
      %v1832 = vadd.f32 %v1830, %v1831
      %v1833 = vsel %vm270, %v1776, 0.0
      %v1834 = vadd.f32 %v1832, %v1833
      %v1835 = vsel %vm270, %v1777, 0.0
      %v1836 = vadd.f32 %v1834, %v1835
      %v1837 = vsel %vm270, %v1778, 0.0
      %v1838 = vadd.f32 %v1836, %v1837
      %v1839 = vsel %vm270, %v1779, 0.0
      %v1840 = vadd.f32 %v1838, %v1839
      %v1841 = vsel %vm270, %v1780, 0.0
      %v1842 = vadd.f32 %v1840, %v1841
      %v1843 = vsel %vm270, %v1781, 0.0
      %v1844 = vadd.f32 %v1842, %v1843
      %v1845 = vrot.slane %v1844, 4
      %v1846 = vadd.f32 %v1844, %v1845
      %v1847 = vrot.slane %v1846, 2
      %v1848 = vadd.f32 %v1846, %v1847
      %v1849 = vrot.slane %v1848, 1
      %v1850 = vadd.f32 %v1848, %v1849
      %1851 = vst.msk [vmem:[%s268] sm:$0x1] %vm280, %v1850
      %p1852 = scmp.lt.s32.totalorder %s18, 1
      %s1853 = scalar_select %p1852, %s18, 1
      %s1854 = smul.addr %s1853, 32
      %s1855 = smul.addr %s1854, 4
      %s1856 = scalar_lea.vmem %s4, %s1855
      %p1857 = scmp.lt.s32.totalorder %s18, 1
      %s1858 = scalar_select %p1857, %s18, 1
      %s1859 = scalar_lea.vmem %s5, %s1858
      %p1860 = scmp.lt.s32.totalorder %s18, 1
      %s1861 = scalar_select %p1860, %s18, 1
      %s1862 = scalar_lea.vmem %s6, %s1861
      // Predicated region
      $region37: #{bottleneck_forward.5} parent=35 // pred_check
        %p1863 = pneg %p125
      $region38: #{bottleneck_forward.5} parent=35 // pred_check_branch
        %1865 = sbr.rel (%p1863) target = $region40
      $region39: #{bottleneck_forward.5} parent=35 // pred_region
        _
      $region40: #{bottleneck_forward.5} parent=35 // pred_fallthru
        _
      // Predicated region
      $region41: #{bottleneck_forward.5} parent=35 // pred_check
        %p1866 = pneg %p151
      $region42: #{bottleneck_forward.5} parent=35 // pred_check_branch
        %1868 = sbr.rel (%p1866) target = $region44
      $region43: #{bottleneck_forward.5} parent=35 // pred_region
        _
      $region44: #{bottleneck_forward.5} parent=35 // pred_fallthru
        _
      // Predicated region
      $region45: #{bottleneck_forward.5} parent=35 // pred_check
        %p1869 = pneg %p177
      $region46: #{bottleneck_forward.5} parent=35 // pred_check_branch
        %1871 = sbr.rel (%p1869) target = $region48
      $region47: #{bottleneck_forward.5} parent=35 // pred_region
        _
      $region48: #{bottleneck_forward.5} parent=35 // pred_fallthru
        _
    $region36: #{bottleneck_forward.5} parent=5 // pred_fallthru
      _
    %p1872 = scmp.le.s32.totalorder 2, %s13
    // Predicated region
    $region49: #{bottleneck_forward.5} parent=5 // pred_check
      %p1873 = pneg %p1872
    $region50: #{bottleneck_forward.5} parent=5 // pred_check_branch
      %1875 = sbr.rel (%p1873) target = $region52
    $region51: #{bottleneck_forward.5} parent=5 // pred_region
      %s1876 = ssub.s32 %s13, 2
      // Predicated region
      $region53: #{bottleneck_forward.5} parent=51 // pred_check
        %p1877 = pneg %p131
      $region54: #{bottleneck_forward.5} parent=51 // pred_check_branch
        %1879 = sbr.rel (%p1877) target = $region56
      $region55: #{bottleneck_forward.5} parent=51 // pred_region
        %p1880 = scmp.lt.s32.totalorder %s19, 1
        %s1881 = scalar_select %p1880, %s19, 1
        %s1882 = smul.addr %s1881, 32
        %s1883 = smul.addr %s1882, 4
        %s1884 = scalar_lea.vmem %s4, %s1883
      $region56: #{bottleneck_forward.5} parent=51 // pred_fallthru
        _
      // Predicated region
      $region57: #{bottleneck_forward.5} parent=51 // pred_check
        %p1885 = pneg %p157
      $region58: #{bottleneck_forward.5} parent=51 // pred_check_branch
        %1887 = sbr.rel (%p1885) target = $region60
      $region59: #{bottleneck_forward.5} parent=51 // pred_region
        %p1888 = scmp.lt.s32.totalorder %s19, 1
        %s1889 = scalar_select %p1888, %s19, 1
        %s1890 = scalar_lea.vmem %s5, %s1889
      $region60: #{bottleneck_forward.5} parent=51 // pred_fallthru
        _
      // Predicated region
      $region61: #{bottleneck_forward.5} parent=51 // pred_check
        %p1891 = pneg %p183
      $region62: #{bottleneck_forward.5} parent=51 // pred_check_branch
        %1893 = sbr.rel (%p1891) target = $region64
      $region63: #{bottleneck_forward.5} parent=51 // pred_region
        %p1894 = scmp.lt.s32.totalorder %s19, 1
        %s1895 = scalar_select %p1894, %s19, 1
        %s1896 = scalar_lea.vmem %s6, %s1895
      $region64: #{bottleneck_forward.5} parent=51 // pred_fallthru
        _
    $region52: #{bottleneck_forward.5} parent=5 // pred_fallthru
      _
  $region6: #{bottleneck_forward.5} parent=0 // loop_footer
    %s17 = sadd.s32 1, %s13
  $region7: #{bottleneck_forward.5} parent=0 // loop_footer_branch
    %12 = sbr.rel target = $region3
  $region8: #{bottleneck_forward.5} parent=0 // loop_exit
    _

</llo_original>
